<compile_context>
chip_gen: v6e
topology: v6e:2x2x1
jax: 0.10.0
libtpu: 0.0.40
codegen_flags: <defaults>
</compile_context>

<pallas_src>
import functools

import jax
import jax.numpy as jnp
from jax.experimental import pallas as pl
from jax.experimental.pallas import tpu as pltpu

EPS = 1e-5
LANE = 128
_VMEM_LIMIT = 48 * 1024 * 1024      # fits v7x (64 MiB physical) with headroom; > v5e/v6e defaults


def _round_up(n, m):
    return (n + m - 1) // m * m


def _pick_tile(dim, cap=128):
    """Largest divisor of `dim` that is <= cap (so grid blocks tile exactly)."""
    t = min(dim, cap)
    while dim % t:
        t -= 1
    return t


def _fold_bn(h, g, b, padded_c):
    """Training-mode BatchNorm2d stats over (N,H,W), folded to per-channel scale/shift.

    Returns (a, c) of shape (1, padded_c) f32 such that bn(x) == a*x + c; padded channels
    get a == c == 0 so they stay exactly zero through ReLU and the zero-padded weights.
    """
    mean = jnp.mean(h, axis=(0, 1, 2))
    var = jnp.mean(jnp.square(h - mean), axis=(0, 1, 2))      # biased variance
    a = g * jax.lax.rsqrt(var + EPS)
    c = b - mean * a
    pad = padded_c - a.shape[0]
    return (jnp.pad(a, (0, pad)).reshape(1, -1),
            jnp.pad(c, (0, pad)).reshape(1, -1))


# ----------------------------------------------------------------------------- kernels

def _stage1_kernel(x_ref, a_ref, c_ref, w_ref, o_ref):
    """relu(a*x + c) @ W1  (1x1 conv as a channel matmul)."""
    x = x_ref[...]                                         # (1, TH, W, Cin_p) f32
    a = a_ref[...].reshape(1, 1, 1, -1)
    c = c_ref[...].reshape(1, 1, 1, -1)
    h = jnp.maximum(x * a + c, 0.0).astype(jnp.bfloat16)   # BN/ReLU in f32, cast for MXU
    tn, th, w, cin = x.shape
    y = jnp.dot(h.reshape(tn * th * w, cin), w_ref[...],
                preferred_element_type=jnp.float32)
    o_ref[...] = y.reshape(tn, th, w, w_ref.shape[1])


def _stage2_kernel(stride, y_ref, a_ref, c_ref, w_ref, o_ref, pad_ref):
    """relu(a*y + c) -> 3x3 conv (pad=1, stride=s) as ONE im2col matmul with K = 9*Pp."""
    y = y_ref[...]                                         # (1, H, W, Pp) f32
    a = a_ref[...].reshape(1, 1, 1, -1)
    c = c_ref[...].reshape(1, 1, 1, -1)
    h = jnp.maximum(y * a + c, 0.0).astype(jnp.bfloat16)
    _, H, W, Pp = y.shape
    Ho = (H - 1) // stride + 1
    Wo = (W - 1) // stride + 1

    # Pre-zeroed VMEM halo scratch (no concat-based padding copies).
    # TODO(synk): zero only the 1-element halo ring instead of the whole scratch.
    pad_ref[...] = jnp.zeros((1, H + 2, W + 2, Pp), jnp.bfloat16)
    pad_ref[:, 1:H + 1, 1:W + 1, :] = h

    # im2col: 9 taps concatenated on the lane axis -> single MXU contraction of depth 9*Pp.
    # For stride > 1 only the needed output positions are read (strided pl.ds), so no
    # wasted conv work + subsample.  (stride > 1 path not exercised by the test below.)
    taps = []
    for kh in range(3):
        for kw in range(3):
            if stride == 1:
                taps.append(pad_ref[:, kh:kh + H, kw:kw + W, :])
            else:
                taps.append(pad_ref[:, pl.ds(kh, Ho, stride), pl.ds(kw, Wo, stride), :])
    col = jnp.concatenate(taps, axis=-1)                   # (1, Ho, Wo, 9*Pp) bf16
    y2 = jnp.dot(col.reshape(Ho * Wo, 9 * Pp), w_ref[...],
                 preferred_element_type=jnp.float32)
    o_ref[...] = y2.reshape(1, Ho, Wo, Pp)


def _stage3_kernel(downsampling, y_ref, a_ref, c_ref, w_ref, r_ref, *rest):
    """relu(a*y + c) @ W3  + residual (identity or 1x1 projection)."""
    if downsampling:
        wd_ref, o_ref = rest
    else:
        (o_ref,) = rest
    y = y_ref[...]                                         # (1, TH, Wo, Pp) f32
    a = a_ref[...].reshape(1, 1, 1, -1)
    c = c_ref[...].reshape(1, 1, 1, -1)
    h = jnp.maximum(y * a + c, 0.0).astype(jnp.bfloat16)
    tn, th, wo, pp = y.shape
    out = jnp.dot(h.reshape(tn * th * wo, pp), w_ref[...],
                  preferred_element_type=jnp.float32)
    out = out.reshape(tn, th, wo, w_ref.shape[1])
    if downsampling:
        xr = r_ref[...].astype(jnp.bfloat16)               # (1, TH, Wo, Cin_p)
        res = jnp.dot(xr.reshape(tn * th * wo, xr.shape[-1]), wd_ref[...],
                      preferred_element_type=jnp.float32)
        res = res.reshape(tn, th, wo, wd_ref.shape[1])
    else:
        res = r_ref[...]                                   # identity residual, exact f32 add
    o_ref[...] = out + res


# -------------------------------------------------------------------- pallas_call stages

def _stage1(x_p, a1, c1, w1p):
    N, H, W, Cp = x_p.shape
    Pp = w1p.shape[1]
    TH = _pick_tile(H)
    ce = pl.CostEstimate(flops=2 * N * H * W * Cp * Pp, transcendentals=0,
                         bytes_accessed=x_p.size * 4 + w1p.size * 2 + N * H * W * Pp * 4)
    return pl.pallas_call(
        _stage1_kernel,
        out_shape=jax.ShapeDtypeStruct((N, H, W, Pp), jnp.float32),
        grid=(N, H // TH),
        in_specs=[
            pl.BlockSpec((1, TH, W, Cp), lambda n, h: (n, h, 0, 0)),
            pl.BlockSpec((1, Cp), lambda n, h: (0, 0)),
            pl.BlockSpec((1, Cp), lambda n, h: (0, 0)),
            pl.BlockSpec((Cp, Pp), lambda n, h: (0, 0)),
        ],
        out_specs=pl.BlockSpec((1, TH, W, Pp), lambda n, h: (n, h, 0, 0)),
        compiler_params=pltpu.CompilerParams(
            dimension_semantics=("parallel", "parallel"),
            vmem_limit_bytes=_VMEM_LIMIT),
        cost_estimate=ce,
    )(x_p, a1, c1, w1p)


def _stage2(y1, a2, c2, w2p, stride):
    N, H, W, Pp = y1.shape
    Ho = (H - 1) // stride + 1
    Wo = (W - 1) // stride + 1
    ce = pl.CostEstimate(flops=2 * N * Ho * Wo * 9 * Pp * Pp, transcendentals=0,
                         bytes_accessed=y1.size * 4 + w2p.size * 2 + N * Ho * Wo * Pp * 4)
    return pl.pallas_call(
        functools.partial(_stage2_kernel, stride),
        out_shape=jax.ShapeDtypeStruct((N, Ho, Wo, Pp), jnp.float32),
        grid=(N,),
        in_specs=[
            pl.BlockSpec((1, H, W, Pp), lambda n: (n, 0, 0, 0)),
            pl.BlockSpec((1, Pp), lambda n: (0, 0)),
            pl.BlockSpec((1, Pp), lambda n: (0, 0)),
            pl.BlockSpec((9 * Pp, Pp), lambda n: (0, 0)),
        ],
        out_specs=pl.BlockSpec((1, Ho, Wo, Pp), lambda n: (n, 0, 0, 0)),
        scratch_shapes=[pltpu.VMEM((1, H + 2, W + 2, Pp), jnp.bfloat16)],
        compiler_params=pltpu.CompilerParams(
            dimension_semantics=("parallel",),
            vmem_limit_bytes=_VMEM_LIMIT),
        cost_estimate=ce,
    )(y1, a2, c2, w2p)


def _stage3(y2, a3, c3, w3p, x_res, wdp, downsampling):
    N, Ho, Wo, Pp = y2.shape
    Coutp = w3p.shape[1]
    Cr = x_res.shape[-1]
    TH = _pick_tile(Ho)
    flops = 2 * N * Ho * Wo * Pp * Coutp
    nbytes = y2.size * 4 + x_res.size * 4 + w3p.size * 2 + N * Ho * Wo * Coutp * 4
    in_specs = [
        pl.BlockSpec((1, TH, Wo, Pp), lambda n, h: (n, h, 0, 0)),
        pl.BlockSpec((1, Pp), lambda n, h: (0, 0)),
        pl.BlockSpec((1, Pp), lambda n, h: (0, 0)),
        pl.BlockSpec((Pp, Coutp), lambda n, h: (0, 0)),
        pl.BlockSpec((1, TH, Wo, Cr), lambda n, h: (n, h, 0, 0)),
    ]
    args = [y2, a3, c3, w3p, x_res]
    if downsampling:
        flops += 2 * N * Ho * Wo * Cr * Coutp
        nbytes += wdp.size * 2
        in_specs.append(pl.BlockSpec((Cr, Coutp), lambda n, h: (0, 0)))
        args.append(wdp)
    return pl.pallas_call(
        functools.partial(_stage3_kernel, downsampling),
        out_shape=jax.ShapeDtypeStruct((N, Ho, Wo, Coutp), jnp.float32),
        grid=(N, Ho // TH),
        in_specs=in_specs,
        out_specs=pl.BlockSpec((1, TH, Wo, Coutp), lambda n, h: (n, h, 0, 0)),
        compiler_params=pltpu.CompilerParams(
            dimension_semantics=("parallel", "parallel"),
            vmem_limit_bytes=_VMEM_LIMIT),
        cost_estimate=pl.CostEstimate(flops=flops, transcendentals=0,
                                      bytes_accessed=nbytes),
    )(*args)


# ----------------------------------------------------------------------------- wrappers

@functools.partial(jax.jit, static_argnames=("stride", "downsampling"))
def bottleneck_forward_nhwc(x_nhwc, params, *, stride=1, downsampling=False):
    """Channels-last forward pass (preferred: keeps the model NHWC end-to-end)."""
    x = x_nhwc.astype(jnp.float32)
    N, H, W, Cin = x.shape
    P = params["w1"].shape[1]
    Cout = params["w3"].shape[1]
    if not downsampling and (stride != 1 or Cin != Cout):
        raise ValueError("identity residual requires stride == 1 and "
                         "in_planes == planes * expansion")

    Cin_p = _round_up(Cin, LANE)
    Pp = _round_up(P, LANE)
    Coutp = _round_up(Cout, LANE)

    # Zero-pad channel dims to 128 lanes and cast weights to bf16 (no-op for real widths).
    w1p = jnp.zeros((Cin_p, Pp), jnp.bfloat16).at[:Cin, :P].set(
        params["w1"].astype(jnp.bfloat16))
    w2p = jnp.zeros((3, 3, Pp, Pp), jnp.bfloat16).at[:, :, :P, :P].set(
        params["w2"].astype(jnp.bfloat16)).reshape(9 * Pp, Pp)        # (kh,kw,cin) rows
    w3p = jnp.zeros((Pp, Coutp), jnp.bfloat16).at[:P, :Cout].set(
        params["w3"].astype(jnp.bfloat16))
    wdp = None
    if downsampling:
        wdp = jnp.zeros((Cin_p, Coutp), jnp.bfloat16).at[:Cin, :Cout].set(
            params["wd"].astype(jnp.bfloat16))

    x_p = jnp.pad(x, ((0, 0), (0, 0), (0, 0), (0, Cin_p - Cin)))

    # Stage 1: bn1 + relu + 1x1 conv.
    a1, c1 = _fold_bn(x, params["g1"], params["b1"], Cin_p)
    y1 = _stage1(x_p, a1, c1, w1p)                          # (N, H, W, Pp) f32

    # Stage 2: bn2 + relu + 3x3 conv (pad=1, stride=s) via im2col.
    a2, c2 = _fold_bn(y1[..., :P], params["g2"], params["b2"], Pp)
    y2 = _stage2(y1, a2, c2, w2p, stride)                   # (N, Ho, Wo, Pp) f32

    # Stage 3: bn3 + relu + 1x1 conv + residual add.
    a3, c3 = _fold_bn(y2[..., :P], params["g3"], params["b3"], Pp)
    if downsampling:
        x_res = x_p if stride == 1 else x_p[:, ::stride, ::stride, :]
    else:
        x_res = x_p                                          # Cin_p == Coutp here
    out = _stage3(y2, a3, c3, w3p, x_res, wdp, downsampling)  # (N, Ho, Wo, Coutp) f32
    return out[..., :Cout]


def bottleneck_forward(x_nchw, params, *, stride=1, downsampling=False):
    """PyTorch-convention wrapper: NCHW in, NCHW out (edge transposes only)."""
    x = jnp.transpose(x_nchw, (0, 2, 3, 1))
    y = bottleneck_forward_nhwc(x, params, stride=stride, downsampling=downsampling)
    return jnp.transpose(y, (0, 3, 1, 2))


# ------------------------------------------------------------------- params & reference

def init_params(key, in_planes, planes, expansion=4, downsampling=False):
    cout = planes * expansion
    ks = jax.random.split(key, 10)

    def nrm(k, shape, fan_in):
        return ((2.0 / fan_in) ** 0.5) * jax.random.normal(k, shape, jnp.float32)

    p = {
        "g1": 1.0 + 0.1 * jax.random.normal(ks[0], (in_planes,), jnp.float32),
        "b1": 0.1 * jax.random.normal(ks[1], (in_planes,), jnp.float32),
        "w1": nrm(ks[2], (in_planes, planes), in_planes),          # 1x1 conv (Cin, Cout)
        "g2": 1.0 + 0.1 * jax.random.normal(ks[3], (planes,), jnp.float32),
        "b2": 0.1 * jax.random.normal(ks[4], (planes,), jnp.float32),
        "w2": nrm(ks[5], (3, 3, planes, planes), 9 * planes),      # 3x3 conv HWIO
        "g3": 1.0 + 0.1 * jax.random.normal(ks[6], (planes,), jnp.float32),
        "b3": 0.1 * jax.random.normal(ks[7], (planes,), jnp.float32),
        "w3": nrm(ks[8], (planes, cout), planes),                  # 1x1 conv (Cin, Cout)
    }
    if downsampling:
        p["wd"] = nrm(ks[9], (in_planes, cout), in_planes)         # 1x1 downsample conv
    return p


def reference_forward(x_nchw, params, *, stride=1, downsampling=False):
    """Pure-JAX reference (lax.conv) with the same bf16-matmul / f32-accumulate recipe."""
    x = jnp.transpose(x_nchw, (0, 2, 3, 1)).astype(jnp.float32)
    dn = ("NHWC", "HWIO", "NHWC")

    def bn_relu(h, g, b):
        mean = jnp.mean(h, axis=(0, 1, 2))
        var = jnp.mean(jnp.square(h - mean), axis=(0, 1, 2))
        return jnp.maximum((h - mean) * jax.lax.rsqrt(var + EPS) * g + b, 0.0)

    def conv(h, w, s, pad):
        return jax.lax.conv_general_dilated(
            h.astype(jnp.bfloat16), w.astype(jnp.bfloat16), (s, s), pad,
            dimension_numbers=dn, preferred_element_type=jnp.float32)

    h = bn_relu(x, params["g1"], params["b1"])
    h = conv(h, params["w1"].reshape(1, 1, *params["w1"].shape), 1, "VALID")
    h = bn_relu(h, params["g2"], params["b2"])
    h = conv(h, params["w2"], stride, ((1, 1), (1, 1)))
    h = bn_relu(h, params["g3"], params["b3"])
    out = conv(h, params["w3"].reshape(1, 1, *params["w3"].shape), 1, "VALID")
    if downsampling:
        res = conv(x, params["wd"].reshape(1, 1, *params["wd"].shape), stride, "VALID")
    else:
        res = x
    return jnp.transpose(out + res, (0, 3, 1, 2))


if __name__ == "__main__":
    key = jax.random.PRNGKey(0)
    k_x1, k_p1, k_x2, k_p2 = jax.random.split(key, 4)

    # Case 1: projection residual (in_planes != planes*expansion -> downsampling).
    N, in_planes, H, W = 2, 16, 8, 8
    planes, expansion = 8, 4
    x1 = jax.random.normal(k_x1, (N, in_planes, H, W), jnp.float32)        # NCHW
    p1 = init_params(k_p1, in_planes, planes, expansion, downsampling=True)
    y1 = jax.block_until_ready(bottleneck_forward(x1, p1, stride=1, downsampling=True))
    r1 = reference_forward(x1, p1, stride=1, downsampling=True)
    assert y1.shape == (N, planes * expansion, H, W)
    err1 = float(jnp.max(jnp.abs(y1 - r1)))
    assert jnp.allclose(y1, r1, atol=1e-2, rtol=1e-2), f"case1 max|diff|={err1}"

    # Case 2: identity residual (in_planes == planes*expansion, stride 1).
    in_planes2 = planes * expansion
    x2 = jax.random.normal(k_x2, (N, in_planes2, H, W), jnp.float32)
    p2 = init_params(k_p2, in_planes2, planes, expansion, downsampling=False)
    y2 = jax.block_until_ready(bottleneck_forward(x2, p2, stride=1, downsampling=False))
    r2 = reference_forward(x2, p2, stride=1, downsampling=False)
    assert y2.shape == (N, planes * expansion, H, W)
    err2 = float(jnp.max(jnp.abs(y2 - r2)))
    assert jnp.allclose(y2, r2, atol=1e-2, rtol=1e-2), f"case2 max|diff|={err2}"

    print("KERNEL_OK")
</pallas_src>

<mosaic_0001>
module attributes {stable_mosaic.version = 11 : i64} {
  func.func @_stage1_kernel(%arg0: i32, %arg1: i32, %arg2: memref<1x8x8x128xf32, #tpu.memory_space<vmem>>, %arg3: memref<1x128xf32, #tpu.memory_space<vmem>>, %arg4: memref<1x128xf32, #tpu.memory_space<vmem>>, %arg5: memref<128x128xbf16, #tpu.memory_space<vmem>>, %arg6: memref<1x8x8x128xf32, #tpu.memory_space<vmem>>) attributes {dimension_semantics = [#tpu.dimension_semantics<parallel>, #tpu.dimension_semantics<parallel>], iteration_bounds = array<i64: 2, 1>, scalar_prefetch = 0 : i64, scratch_operands = 0 : i64, tpu.core_type = #tpu.core_type<tc>, window_params = [{transform_indices = @transform_0, window_bounds = array<i64: 1, 8, 8, 128>}, {pipeline_mode = #tpu.pipeline_mode<synchronous>, transform_indices = @transform_1, window_bounds = array<i64: 1, 128>}, {pipeline_mode = #tpu.pipeline_mode<synchronous>, transform_indices = @transform_2, window_bounds = array<i64: 1, 128>}, {pipeline_mode = #tpu.pipeline_mode<synchronous>, transform_indices = @transform_3, window_bounds = array<i64: 128, 128>}, {transform_indices = @transform_4, window_bounds = array<i64: 1, 8, 8, 128>}]} {
    %c0 = arith.constant 0 : index
    %c0_0 = arith.constant 0 : index
    %c0_1 = arith.constant 0 : index
    %c0_2 = arith.constant 0 : index
    %0 = vector.load %arg2[%c0, %c0_0, %c0_1, %c0_2] : memref<1x8x8x128xf32, #tpu.memory_space<vmem>>, vector<1x8x8x128xf32>
    %c0_3 = arith.constant 0 : index
    %c0_4 = arith.constant 0 : index
    %1 = vector.load %arg3[%c0_3, %c0_4] : memref<1x128xf32, #tpu.memory_space<vmem>>, vector<1x128xf32>
    %2 = vector.shape_cast %1 : vector<1x128xf32> to vector<1x1x1x128xf32>
    %c0_5 = arith.constant 0 : index
    %c0_6 = arith.constant 0 : index
    %3 = vector.load %arg4[%c0_5, %c0_6] : memref<1x128xf32, #tpu.memory_space<vmem>>, vector<1x128xf32>
    %4 = vector.shape_cast %3 : vector<1x128xf32> to vector<1x1x1x128xf32>
    %5 = vector.broadcast %2 : vector<1x1x1x128xf32> to vector<1x8x8x128xf32>
    %6 = arith.mulf %0, %5 : vector<1x8x8x128xf32>
    %7 = vector.broadcast %4 : vector<1x1x1x128xf32> to vector<1x8x8x128xf32>
    %8 = arith.addf %6, %7 : vector<1x8x8x128xf32>
    %cst = arith.constant 0.000000e+00 : f32
    %9 = vector.broadcast %cst : f32 to vector<1x8x8x128xf32>
    %10 = arith.maximumf %8, %9 : vector<1x8x8x128xf32>
    %11 = arith.truncf %10 : vector<1x8x8x128xf32> to vector<1x8x8x128xbf16>
    %12 = vector.shape_cast %11 : vector<1x8x8x128xbf16> to vector<64x128xbf16>
    %c0_7 = arith.constant 0 : index
    %c0_8 = arith.constant 0 : index
    %13 = vector.load %arg5[%c0_7, %c0_8] : memref<128x128xbf16, #tpu.memory_space<vmem>>, vector<128x128xbf16>
    %cst_9 = arith.constant dense<0.000000e+00> : vector<64x128xf32>
    %14 = tpu.matmul %12, %13, %cst_9 {dimension_numbers = #tpu.dot_dimension_numbers<[1], [0], [0], [1], [0, 0, 1, 1], [], []>} : vector<64x128xbf16>, vector<128x128xbf16>, vector<64x128xf32> -> vector<64x128xf32>
    %15 = vector.shape_cast %14 : vector<64x128xf32> to vector<1x8x8x128xf32>
    %c0_10 = arith.constant 0 : index
    %c0_11 = arith.constant 0 : index
    %c0_12 = arith.constant 0 : index
    %c0_13 = arith.constant 0 : index
    %16 = vector.load %arg6[%c0_10, %c0_11, %c0_12, %c0_13] : memref<1x8x8x128xf32, #tpu.memory_space<vmem>>, vector<1x8x8x128xf32>
    tpu.vector_store %arg6[%c0_10, %c0_11, %c0_12, %c0_13], %15 {strides = array<i32>} : memref<1x8x8x128xf32, #tpu.memory_space<vmem>>, vector<1x8x8x128xf32>,
    return
  }
  func.func @transform_0(%arg0: i32, %arg1: i32) -> (i32, i32, i32, i32) {
    %c0_i32 = arith.constant 0 : i32
    %c0_i32_0 = arith.constant 0 : i32
    %c0_i32_1 = arith.constant 0 : i32
    return %arg0, %arg1, %c0_i32, %c0_i32_0 : i32, i32, i32, i32
  }
  func.func @transform_1(%arg0: i32, %arg1: i32) -> (i32, i32) {
    %c0_i32 = arith.constant 0 : i32
    %c0_i32_0 = arith.constant 0 : i32
    %c0_i32_1 = arith.constant 0 : i32
    return %c0_i32, %c0_i32_0 : i32, i32
  }
  func.func @transform_2(%arg0: i32, %arg1: i32) -> (i32, i32) {
    %c0_i32 = arith.constant 0 : i32
    %c0_i32_0 = arith.constant 0 : i32
    %c0_i32_1 = arith.constant 0 : i32
    return %c0_i32, %c0_i32_0 : i32, i32
  }
  func.func @transform_3(%arg0: i32, %arg1: i32) -> (i32, i32) {
    %c0_i32 = arith.constant 0 : i32
    %c0_i32_0 = arith.constant 0 : i32
    %c0_i32_1 = arith.constant 0 : i32
    return %c0_i32, %c0_i32_0 : i32, i32
  }
  func.func @transform_4(%arg0: i32, %arg1: i32) -> (i32, i32, i32, i32) {
    %c0_i32 = arith.constant 0 : i32
    %c0_i32_0 = arith.constant 0 : i32
    %c0_i32_1 = arith.constant 0 : i32
    return %arg0, %arg1, %c0_i32, %c0_i32_0 : i32, i32, i32, i32
  }
}

module attributes {stable_mosaic.version = 11 : i64} {
  func.func @_stage2_kernel(%arg0: i32, %arg1: memref<1x8x8x128xf32, #tpu.memory_space<vmem>>, %arg2: memref<1x128xf32, #tpu.memory_space<vmem>>, %arg3: memref<1x128xf32, #tpu.memory_space<vmem>>, %arg4: memref<1152x128xbf16, #tpu.memory_space<vmem>>, %arg5: memref<1x8x8x128xf32, #tpu.memory_space<vmem>>, %arg6: memref<1x10x10x128xbf16, #tpu.memory_space<vmem>>) attributes {dimension_semantics = [#tpu.dimension_semantics<parallel>], iteration_bounds = array<i64: 2>, scalar_prefetch = 0 : i64, scratch_operands = 1 : i64, tpu.core_type = #tpu.core_type<tc>, window_params = [{transform_indices = @transform_0, window_bounds = array<i64: 1, 8, 8, 128>}, {pipeline_mode = #tpu.pipeline_mode<synchronous>, transform_indices = @transform_1, window_bounds = array<i64: 1, 128>}, {pipeline_mode = #tpu.pipeline_mode<synchronous>, transform_indices = @transform_2, window_bounds = array<i64: 1, 128>}, {pipeline_mode = #tpu.pipeline_mode<synchronous>, transform_indices = @transform_3, window_bounds = array<i64: 1152, 128>}, {transform_indices = @transform_4, window_bounds = array<i64: 1, 8, 8, 128>}]} {
    %c0 = arith.constant 0 : index
    %c0_0 = arith.constant 0 : index
    %c0_1 = arith.constant 0 : index
    %c0_2 = arith.constant 0 : index
    %0 = vector.load %arg1[%c0, %c0_0, %c0_1, %c0_2] : memref<1x8x8x128xf32, #tpu.memory_space<vmem>>, vector<1x8x8x128xf32>
    %c0_3 = arith.constant 0 : index
    %c0_4 = arith.constant 0 : index
    %1 = vector.load %arg2[%c0_3, %c0_4] : memref<1x128xf32, #tpu.memory_space<vmem>>, vector<1x128xf32>
    %2 = vector.shape_cast %1 : vector<1x128xf32> to vector<1x1x1x128xf32>
    %c0_5 = arith.constant 0 : index
    %c0_6 = arith.constant 0 : index
    %3 = vector.load %arg3[%c0_5, %c0_6] : memref<1x128xf32, #tpu.memory_space<vmem>>, vector<1x128xf32>
    %4 = vector.shape_cast %3 : vector<1x128xf32> to vector<1x1x1x128xf32>
    %5 = vector.broadcast %2 : vector<1x1x1x128xf32> to vector<1x8x8x128xf32>
    %6 = arith.mulf %0, %5 : vector<1x8x8x128xf32>
    %7 = vector.broadcast %4 : vector<1x1x1x128xf32> to vector<1x8x8x128xf32>
    %8 = arith.addf %6, %7 : vector<1x8x8x128xf32>
    %cst = arith.constant 0.000000e+00 : f32
    %9 = vector.broadcast %cst : f32 to vector<1x8x8x128xf32>
    %10 = arith.maximumf %8, %9 : vector<1x8x8x128xf32>
    %11 = arith.truncf %10 : vector<1x8x8x128xf32> to vector<1x8x8x128xbf16>
    %cst_7 = arith.constant 0.000000e+00 : bf16
    %12 = vector.broadcast %cst_7 : bf16 to vector<1x10x10x128xbf16>
    %c0_8 = arith.constant 0 : index
    %c0_9 = arith.constant 0 : index
    %c0_10 = arith.constant 0 : index
    %c0_11 = arith.constant 0 : index
    %13 = vector.load %arg6[%c0_8, %c0_9, %c0_10, %c0_11] : memref<1x10x10x128xbf16, #tpu.memory_space<vmem>>, vector<1x10x10x128xbf16>
    tpu.vector_store %arg6[%c0_8, %c0_9, %c0_10, %c0_11], %12 {strides = array<i32>} : memref<1x10x10x128xbf16, #tpu.memory_space<vmem>>, vector<1x10x10x128xbf16>,
    %c0_12 = arith.constant 0 : index
    %c1 = arith.constant 1 : index
    %c1_13 = arith.constant 1 : index
    %c0_14 = arith.constant 0 : index
    %14 = vector.load %arg6[%c0_12, %c1, %c1_13, %c0_14] : memref<1x10x10x128xbf16, #tpu.memory_space<vmem>>, vector<1x8x8x128xbf16>
    tpu.vector_store %arg6[%c0_12, %c1, %c1_13, %c0_14], %11 {strides = array<i32>} : memref<1x10x10x128xbf16, #tpu.memory_space<vmem>>, vector<1x8x8x128xbf16>,
    %c0_15 = arith.constant 0 : index
    %c0_16 = arith.constant 0 : index
    %c0_17 = arith.constant 0 : index
    %c0_18 = arith.constant 0 : index
    %15 = vector.load %arg6[%c0_15, %c0_16, %c0_17, %c0_18] : memref<1x10x10x128xbf16, #tpu.memory_space<vmem>>, vector<1x8x8x128xbf16>
    %c0_19 = arith.constant 0 : index
    %c0_20 = arith.constant 0 : index
    %c1_21 = arith.constant 1 : index
    %c0_22 = arith.constant 0 : index
    %16 = vector.load %arg6[%c0_19, %c0_20, %c1_21, %c0_22] : memref<1x10x10x128xbf16, #tpu.memory_space<vmem>>, vector<1x8x8x128xbf16>
    %c0_23 = arith.constant 0 : index
    %c0_24 = arith.constant 0 : index
    %c2 = arith.constant 2 : index
    %c0_25 = arith.constant 0 : index
    %17 = vector.load %arg6[%c0_23, %c0_24, %c2, %c0_25] : memref<1x10x10x128xbf16, #tpu.memory_space<vmem>>, vector<1x8x8x128xbf16>
    %c0_26 = arith.constant 0 : index
    %c1_27 = arith.constant 1 : index
    %c0_28 = arith.constant 0 : index
    %c0_29 = arith.constant 0 : index
    %18 = vector.load %arg6[%c0_26, %c1_27, %c0_28, %c0_29] : memref<1x10x10x128xbf16, #tpu.memory_space<vmem>>, vector<1x8x8x128xbf16>
    %c0_30 = arith.constant 0 : index
    %c1_31 = arith.constant 1 : index
    %c1_32 = arith.constant 1 : index
    %c0_33 = arith.constant 0 : index
    %19 = vector.load %arg6[%c0_30, %c1_31, %c1_32, %c0_33] : memref<1x10x10x128xbf16, #tpu.memory_space<vmem>>, vector<1x8x8x128xbf16>
    %c0_34 = arith.constant 0 : index
    %c1_35 = arith.constant 1 : index
    %c2_36 = arith.constant 2 : index
    %c0_37 = arith.constant 0 : index
    %20 = vector.load %arg6[%c0_34, %c1_35, %c2_36, %c0_37] : memref<1x10x10x128xbf16, #tpu.memory_space<vmem>>, vector<1x8x8x128xbf16>
    %c0_38 = arith.constant 0 : index
    %c2_39 = arith.constant 2 : index
    %c0_40 = arith.constant 0 : index
    %c0_41 = arith.constant 0 : index
    %21 = vector.load %arg6[%c0_38, %c2_39, %c0_40, %c0_41] : memref<1x10x10x128xbf16, #tpu.memory_space<vmem>>, vector<1x8x8x128xbf16>
    %c0_42 = arith.constant 0 : index
    %c2_43 = arith.constant 2 : index
    %c1_44 = arith.constant 1 : index
    %c0_45 = arith.constant 0 : index
    %22 = vector.load %arg6[%c0_42, %c2_43, %c1_44, %c0_45] : memref<1x10x10x128xbf16, #tpu.memory_space<vmem>>, vector<1x8x8x128xbf16>
    %c0_46 = arith.constant 0 : index
    %c2_47 = arith.constant 2 : index
    %c2_48 = arith.constant 2 : index
    %c0_49 = arith.constant 0 : index
    %23 = vector.load %arg6[%c0_46, %c2_47, %c2_48, %c0_49] : memref<1x10x10x128xbf16, #tpu.memory_space<vmem>>, vector<1x8x8x128xbf16>
    %24 = tpu.concatenate %15, %16, %17, %18, %19, %20, %21, %22, %23 in 3 : vector<1x8x8x128xbf16>, vector<1x8x8x128xbf16>, vector<1x8x8x128xbf16>, vector<1x8x8x128xbf16>, vector<1x8x8x128xbf16>, vector<1x8x8x128xbf16>, vector<1x8x8x128xbf16>, vector<1x8x8x128xbf16>, vector<1x8x8x128xbf16> -> vector<1x8x8x1152xbf16>
    %25 = vector.shape_cast %24 : vector<1x8x8x1152xbf16> to vector<64x1152xbf16>
    %c0_50 = arith.constant 0 : index
    %c0_51 = arith.constant 0 : index
    %26 = vector.load %arg4[%c0_50, %c0_51] : memref<1152x128xbf16, #tpu.memory_space<vmem>>, vector<1152x128xbf16>
    %cst_52 = arith.constant dense<0.000000e+00> : vector<64x128xf32>
    %27 = tpu.matmul %25, %26, %cst_52 {dimension_numbers = #tpu.dot_dimension_numbers<[1], [0], [0], [1], [0, 0, 1, 1], [], []>} : vector<64x1152xbf16>, vector<1152x128xbf16>, vector<64x128xf32> -> vector<64x128xf32>
    %28 = vector.shape_cast %27 : vector<64x128xf32> to vector<1x8x8x128xf32>
    %c0_53 = arith.constant 0 : index
    %c0_54 = arith.constant 0 : index
    %c0_55 = arith.constant 0 : index
    %c0_56 = arith.constant 0 : index
    %29 = vector.load %arg5[%c0_53, %c0_54, %c0_55, %c0_56] : memref<1x8x8x128xf32, #tpu.memory_space<vmem>>, vector<1x8x8x128xf32>
    tpu.vector_store %arg5[%c0_53, %c0_54, %c0_55, %c0_56], %28 {strides = array<i32>} : memref<1x8x8x128xf32, #tpu.memory_space<vmem>>, vector<1x8x8x128xf32>,
    return
  }
  func.func @transform_0(%arg0: i32) -> (i32, i32, i32, i32) {
    %c0_i32 = arith.constant 0 : i32
    %c0_i32_0 = arith.constant 0 : i32
    %c0_i32_1 = arith.constant 0 : i32
    %c0_i32_2 = arith.constant 0 : i32
    return %arg0, %c0_i32, %c0_i32_0, %c0_i32_1 : i32, i32, i32, i32
  }
  func.func @transform_1(%arg0: i32) -> (i32, i32) {
    %c0_i32 = arith.constant 0 : i32
    %c0_i32_0 = arith.constant 0 : i32
    %c0_i32_1 = arith.constant 0 : i32
    return %c0_i32, %c0_i32_0 : i32, i32
  }
  func.func @transform_2(%arg0: i32) -> (i32, i32) {
    %c0_i32 = arith.constant 0 : i32
    %c0_i32_0 = arith.constant 0 : i32
    %c0_i32_1 = arith.constant 0 : i32
    return %c0_i32, %c0_i32_0 : i32, i32
  }
  func.func @transform_3(%arg0: i32) -> (i32, i32) {
    %c0_i32 = arith.constant 0 : i32
    %c0_i32_0 = arith.constant 0 : i32
    %c0_i32_1 = arith.constant 0 : i32
    return %c0_i32, %c0_i32_0 : i32, i32
  }
  func.func @transform_4(%arg0: i32) -> (i32, i32, i32, i32) {
    %c0_i32 = arith.constant 0 : i32
    %c0_i32_0 = arith.constant 0 : i32
    %c0_i32_1 = arith.constant 0 : i32
    %c0_i32_2 = arith.constant 0 : i32
    return %arg0, %c0_i32, %c0_i32_0, %c0_i32_1 : i32, i32, i32, i32
  }
}

module attributes {stable_mosaic.version = 11 : i64} {
  func.func @_stage3_kernel(%arg0: i32, %arg1: i32, %arg2: memref<1x8x8x128xf32, #tpu.memory_space<vmem>>, %arg3: memref<1x128xf32, #tpu.memory_space<vmem>>, %arg4: memref<1x128xf32, #tpu.memory_space<vmem>>, %arg5: memref<128x128xbf16, #tpu.memory_space<vmem>>, %arg6: memref<1x8x8x128xf32, #tpu.memory_space<vmem>>, %arg7: memref<128x128xbf16, #tpu.memory_space<vmem>>, %arg8: memref<1x8x8x128xf32, #tpu.memory_space<vmem>>) attributes {dimension_semantics = [#tpu.dimension_semantics<parallel>, #tpu.dimension_semantics<parallel>], iteration_bounds = array<i64: 2, 1>, scalar_prefetch = 0 : i64, scratch_operands = 0 : i64, tpu.core_type = #tpu.core_type<tc>, window_params = [{transform_indices = @transform_0, window_bounds = array<i64: 1, 8, 8, 128>}, {pipeline_mode = #tpu.pipeline_mode<synchronous>, transform_indices = @transform_1, window_bounds = array<i64: 1, 128>}, {pipeline_mode = #tpu.pipeline_mode<synchronous>, transform_indices = @transform_2, window_bounds = array<i64: 1, 128>}, {pipeline_mode = #tpu.pipeline_mode<synchronous>, transform_indices = @transform_3, window_bounds = array<i64: 128, 128>}, {transform_indices = @transform_4, window_bounds = array<i64: 1, 8, 8, 128>}, {pipeline_mode = #tpu.pipeline_mode<synchronous>, transform_indices = @transform_5, window_bounds = array<i64: 128, 128>}, {transform_indices = @transform_6, window_bounds = array<i64: 1, 8, 8, 128>}]} {
    %c0 = arith.constant 0 : index
    %c0_0 = arith.constant 0 : index
    %c0_1 = arith.constant 0 : index
    %c0_2 = arith.constant 0 : index
    %0 = vector.load %arg2[%c0, %c0_0, %c0_1, %c0_2] : memref<1x8x8x128xf32, #tpu.memory_space<vmem>>, vector<1x8x8x128xf32>
    %c0_3 = arith.constant 0 : index
    %c0_4 = arith.constant 0 : index
    %1 = vector.load %arg3[%c0_3, %c0_4] : memref<1x128xf32, #tpu.memory_space<vmem>>, vector<1x128xf32>
    %2 = vector.shape_cast %1 : vector<1x128xf32> to vector<1x1x1x128xf32>
    %c0_5 = arith.constant 0 : index
    %c0_6 = arith.constant 0 : index
    %3 = vector.load %arg4[%c0_5, %c0_6] : memref<1x128xf32, #tpu.memory_space<vmem>>, vector<1x128xf32>
    %4 = vector.shape_cast %3 : vector<1x128xf32> to vector<1x1x1x128xf32>
    %5 = vector.broadcast %2 : vector<1x1x1x128xf32> to vector<1x8x8x128xf32>
    %6 = arith.mulf %0, %5 : vector<1x8x8x128xf32>
    %7 = vector.broadcast %4 : vector<1x1x1x128xf32> to vector<1x8x8x128xf32>
    %8 = arith.addf %6, %7 : vector<1x8x8x128xf32>
    %cst = arith.constant 0.000000e+00 : f32
    %9 = vector.broadcast %cst : f32 to vector<1x8x8x128xf32>
    %10 = arith.maximumf %8, %9 : vector<1x8x8x128xf32>
    %11 = arith.truncf %10 : vector<1x8x8x128xf32> to vector<1x8x8x128xbf16>
    %12 = vector.shape_cast %11 : vector<1x8x8x128xbf16> to vector<64x128xbf16>
    %c0_7 = arith.constant 0 : index
    %c0_8 = arith.constant 0 : index
    %13 = vector.load %arg5[%c0_7, %c0_8] : memref<128x128xbf16, #tpu.memory_space<vmem>>, vector<128x128xbf16>
    %cst_9 = arith.constant dense<0.000000e+00> : vector<64x128xf32>
    %14 = tpu.matmul %12, %13, %cst_9 {dimension_numbers = #tpu.dot_dimension_numbers<[1], [0], [0], [1], [0, 0, 1, 1], [], []>} : vector<64x128xbf16>, vector<128x128xbf16>, vector<64x128xf32> -> vector<64x128xf32>
    %15 = vector.shape_cast %14 : vector<64x128xf32> to vector<1x8x8x128xf32>
    %c0_10 = arith.constant 0 : index
    %c0_11 = arith.constant 0 : index
    %c0_12 = arith.constant 0 : index
    %c0_13 = arith.constant 0 : index
    %16 = vector.load %arg6[%c0_10, %c0_11, %c0_12, %c0_13] : memref<1x8x8x128xf32, #tpu.memory_space<vmem>>, vector<1x8x8x128xf32>
    %17 = arith.truncf %16 : vector<1x8x8x128xf32> to vector<1x8x8x128xbf16>
    %18 = vector.shape_cast %17 : vector<1x8x8x128xbf16> to vector<64x128xbf16>
    %c0_14 = arith.constant 0 : index
    %c0_15 = arith.constant 0 : index
    %19 = vector.load %arg7[%c0_14, %c0_15] : memref<128x128xbf16, #tpu.memory_space<vmem>>, vector<128x128xbf16>
    %cst_16 = arith.constant dense<0.000000e+00> : vector<64x128xf32>
    %20 = tpu.matmul %18, %19, %cst_16 {dimension_numbers = #tpu.dot_dimension_numbers<[1], [0], [0], [1], [0, 0, 1, 1], [], []>} : vector<64x128xbf16>, vector<128x128xbf16>, vector<64x128xf32> -> vector<64x128xf32>
    %21 = vector.shape_cast %20 : vector<64x128xf32> to vector<1x8x8x128xf32>
    %22 = arith.addf %15, %21 : vector<1x8x8x128xf32>
    %c0_17 = arith.constant 0 : index
    %c0_18 = arith.constant 0 : index
    %c0_19 = arith.constant 0 : index
    %c0_20 = arith.constant 0 : index
    %23 = vector.load %arg8[%c0_17, %c0_18, %c0_19, %c0_20] : memref<1x8x8x128xf32, #tpu.memory_space<vmem>>, vector<1x8x8x128xf32>
    tpu.vector_store %arg8[%c0_17, %c0_18, %c0_19, %c0_20], %22 {strides = array<i32>} : memref<1x8x8x128xf32, #tpu.memory_space<vmem>>, vector<1x8x8x128xf32>,
    return
  }
  func.func @transform_0(%arg0: i32, %arg1: i32) -> (i32, i32, i32, i32) {
    %c0_i32 = arith.constant 0 : i32
    %c0_i32_0 = arith.constant 0 : i32
    %c0_i32_1 = arith.constant 0 : i32
    return %arg0, %arg1, %c0_i32, %c0_i32_0 : i32, i32, i32, i32
  }
  func.func @transform_1(%arg0: i32, %arg1: i32) -> (i32, i32) {
    %c0_i32 = arith.constant 0 : i32
    %c0_i32_0 = arith.constant 0 : i32
    %c0_i32_1 = arith.constant 0 : i32
    return %c0_i32, %c0_i32_0 : i32, i32
  }
  func.func @transform_2(%arg0: i32, %arg1: i32) -> (i32, i32) {
    %c0_i32 = arith.constant 0 : i32
    %c0_i32_0 = arith.constant 0 : i32
    %c0_i32_1 = arith.constant 0 : i32
    return %c0_i32, %c0_i32_0 : i32, i32
  }
  func.func @transform_3(%arg0: i32, %arg1: i32) -> (i32, i32) {
    %c0_i32 = arith.constant 0 : i32
    %c0_i32_0 = arith.constant 0 : i32
    %c0_i32_1 = arith.constant 0 : i32
    return %c0_i32, %c0_i32_0 : i32, i32
  }
  func.func @transform_4(%arg0: i32, %arg1: i32) -> (i32, i32, i32, i32) {
    %c0_i32 = arith.constant 0 : i32
    %c0_i32_0 = arith.constant 0 : i32
    %c0_i32_1 = arith.constant 0 : i32
    return %arg0, %arg1, %c0_i32, %c0_i32_0 : i32, i32, i32, i32
  }
  func.func @transform_5(%arg0: i32, %arg1: i32) -> (i32, i32) {
    %c0_i32 = arith.constant 0 : i32
    %c0_i32_0 = arith.constant 0 : i32
    %c0_i32_1 = arith.constant 0 : i32
    return %c0_i32, %c0_i32_0 : i32, i32
  }
  func.func @transform_6(%arg0: i32, %arg1: i32) -> (i32, i32, i32, i32) {
    %c0_i32 = arith.constant 0 : i32
    %c0_i32_0 = arith.constant 0 : i32
    %c0_i32_1 = arith.constant 0 : i32
    return %arg0, %arg1, %c0_i32, %c0_i32_0 : i32, i32, i32, i32
  }
}

</mosaic_0001>

<llo_original>
// kernel: bottleneck_forward_nhwc.3
$region0: #{bottleneck_forward_nhwc.3}
  #allocation0 [shape = 'u32[]', space=smem, size = 0x4, offset = 0x4, fixed_abs, tag = 'smem constant byte address 0x4 - core index']
  #allocation1 [shape = 'u32[144,128]{1,0:T(1,128)}', space=vmem, size = 0x12000, scoped, tag = 'internal scratch']
  %s0 = inlined_call_operand.vmem [shape: f32[2,8,8,128], index: 0, kind: input, shape index: {}]
  %s1 = inlined_call_operand.vmem [shape: f32[1,128], index: 1, kind: input, shape index: {}]
  %s2 = inlined_call_operand.vmem [shape: f32[1,128], index: 2, kind: input, shape index: {}]
  %s3 = inlined_call_operand.vmem [shape: bf16[128,128], index: 3, kind: input, shape index: {}]
  %s4 = inlined_call_operand.vmem [shape: f32[2,8,8,128], index: 4, kind: output, shape index: {}]
  %s5 = sld [smem:[#allocation0]]
  $region49: #{bottleneck_forward_nhwc.3} parent=0
    _
  %s7 = ssub.s32 1, %s5
  %s8 = scalar_select 0, %s7, %s5
  loop: start=0, step=1, limit=4
  $region2: #{bottleneck_forward_nhwc.3} parent=0 // loop_pre_header
    _
  $region3: #{bottleneck_forward_nhwc.3} parent=0 // loop_header
    %s10 = sphi 0, %s14
    %p11 = scmp.ge.s32.totalorder %s10, 4
    %s17 = sphi 0, %s29
    %s18 = sphi 0, %s25
    %s19 = sphi 0, %s17
    %s20 = sphi 0, %s18
    %s21 = sphi 0, %s19
    %s22 = sphi 0, %s20
    %s34 = sphi 0, %s36
    %s37 = sphi 0, %s34
    %s38 = sphi 0, %s37
    %s54 = sphi 0, %s38
    %s58 = sphi 0, %s58
    %s60 = sphi 0, %s58
    %s61 = sphi 0, %s60
    %s75 = sphi 0, %s61
    %s79 = sphi 0, %s79
    %s81 = sphi 0, %s79
    %s82 = sphi 0, %s81
    %s96 = sphi 0, %s82
    %s100 = sphi 0, %s100
    %s102 = sphi 0, %s100
    %s103 = sphi 0, %s102
    %s117 = sphi 0, %s103
    %s125 = sphi 0, %s127
    %s128 = sphi 0, %s125
    %s129 = sphi 0, %s128
    %s145 = sphi 0, %s129
  $region4: #{bottleneck_forward_nhwc.3} parent=0 // loop_header_branch
    %13 = sbr.rel (%p11) target = $region8
  $region5: #{bottleneck_forward_nhwc.3} parent=0 // loop_body
    %s15 = ssub.s32 %s10, 1
    %s16 = ssub.s32 %s10, 2
    %s23 = sadd.s32 1, %s18
    %p24 = scmp.ge.s32.totalorder %s23, 1
    %s25 = scalar_select %p24, 0, %s23
    %s26 = sadd.s32 1, %s17
    %s27 = scalar_select %p24, %s26, %s17
    %p28 = scmp.ge.s32.totalorder %s27, 2
    %s29 = scalar_select %p28, 0, %s27
    %s30 = ssub.s32 %s17, %s29
    %s31 = ssub.s32 %s18, %s25
    %s32 = sor.u32 %s30, %s31
    %p33 = scmp.eq.s32.totalorder %s32, 0
    %s35 = sadd.s32 %s34, 1
    %s36 = scalar_select %p33, %s34, %s35
    %p39 = pneg %p33
    %p40 = scmp.eq.s32.totalorder %s10, 1
    %p41 = por %p39, %p40
    %p42 = scmp.ne.s32.totalorder %s34, %s37
    %p43 = scmp.eq.s32.totalorder %s10, 0
    %p44 = por %p42, %p43
    %p45 = scmp.ne.s32.totalorder %s34, %s37
    %p46 = scmp.eq.s32.totalorder %s15, 1
    %p47 = por %p45, %p46
    %p48 = scmp.ne.s32.totalorder %s37, %s38
    %p49 = scmp.eq.s32.totalorder %s15, 0
    %p50 = por %p48, %p49
    %p51 = scmp.ne.s32.totalorder %s37, %s38
    %p52 = scmp.eq.s32.totalorder %s16, 1
    %p53 = por %p51, %p52
    %p55 = scmp.ne.s32.totalorder %s38, %s54
    %p56 = scmp.eq.s32.totalorder %s16, 0
    %p57 = por %p55, %p56
    %s59 = sadd.s32 %s58, 1
    %p62 = scmp.eq.s32.totalorder %s10, 1
    %p63 = scmp.ne.s32.totalorder %s58, %s60
    %p64 = scmp.eq.s32.totalorder %s10, 0
    %p65 = por %p63, %p64
    %p66 = scmp.ne.s32.totalorder %s58, %s60
    %p67 = scmp.eq.s32.totalorder %s15, 1
    %p68 = por %p66, %p67
    %p69 = scmp.ne.s32.totalorder %s60, %s61
    %p70 = scmp.eq.s32.totalorder %s15, 0
    %p71 = por %p69, %p70
    %p72 = scmp.ne.s32.totalorder %s60, %s61
    %p73 = scmp.eq.s32.totalorder %s16, 1
    %p74 = por %p72, %p73
    %p76 = scmp.ne.s32.totalorder %s61, %s75
    %p77 = scmp.eq.s32.totalorder %s16, 0
    %p78 = por %p76, %p77
    %s80 = sadd.s32 %s79, 1
    %p83 = scmp.eq.s32.totalorder %s10, 1
    %p84 = scmp.ne.s32.totalorder %s79, %s81
    %p85 = scmp.eq.s32.totalorder %s10, 0
    %p86 = por %p84, %p85
    %p87 = scmp.ne.s32.totalorder %s79, %s81
    %p88 = scmp.eq.s32.totalorder %s15, 1
    %p89 = por %p87, %p88
    %p90 = scmp.ne.s32.totalorder %s81, %s82
    %p91 = scmp.eq.s32.totalorder %s15, 0
    %p92 = por %p90, %p91
    %p93 = scmp.ne.s32.totalorder %s81, %s82
    %p94 = scmp.eq.s32.totalorder %s16, 1
    %p95 = por %p93, %p94
    %p97 = scmp.ne.s32.totalorder %s82, %s96
    %p98 = scmp.eq.s32.totalorder %s16, 0
    %p99 = por %p97, %p98
    %s101 = sadd.s32 %s100, 1
    %p104 = scmp.eq.s32.totalorder %s10, 1
    %p105 = scmp.ne.s32.totalorder %s100, %s102
    %p106 = scmp.eq.s32.totalorder %s10, 0
    %p107 = por %p105, %p106
    %p108 = scmp.ne.s32.totalorder %s100, %s102
    %p109 = scmp.eq.s32.totalorder %s15, 1
    %p110 = por %p108, %p109
    %p111 = scmp.ne.s32.totalorder %s102, %s103
    %p112 = scmp.eq.s32.totalorder %s15, 0
    %p113 = por %p111, %p112
    %p114 = scmp.ne.s32.totalorder %s102, %s103
    %p115 = scmp.eq.s32.totalorder %s16, 1
    %p116 = por %p114, %p115
    %p118 = scmp.ne.s32.totalorder %s103, %s117
    %p119 = scmp.eq.s32.totalorder %s16, 0
    %p120 = por %p118, %p119
    %s121 = ssub.s32 %s17, %s29
    %s122 = ssub.s32 %s18, %s25
    %s123 = sor.u32 %s121, %s122
    %p124 = scmp.eq.s32.totalorder %s123, 0
    %s126 = sadd.s32 %s125, 1
    %s127 = scalar_select %p124, %s125, %s126
    %p130 = pneg %p124
    %p131 = scmp.eq.s32.totalorder %s10, 1
    %p132 = por %p130, %p131
    %p133 = scmp.ne.s32.totalorder %s125, %s128
    %p134 = scmp.eq.s32.totalorder %s10, 0
    %p135 = por %p133, %p134
    %p136 = scmp.ne.s32.totalorder %s125, %s128
    %p137 = scmp.eq.s32.totalorder %s15, 1
    %p138 = por %p136, %p137
    %p139 = scmp.ne.s32.totalorder %s128, %s129
    %p140 = scmp.eq.s32.totalorder %s15, 0
    %p141 = por %p139, %p140
    %p142 = scmp.ne.s32.totalorder %s128, %s129
    %p143 = scmp.eq.s32.totalorder %s16, 1
    %p144 = por %p142, %p143
    %p146 = scmp.ne.s32.totalorder %s129, %s145
    %p147 = scmp.eq.s32.totalorder %s16, 0
    %p148 = por %p146, %p147
    %p149 = scmp.le.s32.totalorder 1, %s10
    %p150 = scmp.lt.s32.totalorder %s10, 3
    %p151 = pnand %p149, %p150
    %p152 = pneg %p151
    // Predicated region
    $region9: #{bottleneck_forward_nhwc.3} parent=5 // pred_check
      _
    $region10: #{bottleneck_forward_nhwc.3} parent=5 // pred_check_branch
      %154 = sbr.rel (%p151) target = $region12
    $region11: #{bottleneck_forward_nhwc.3} parent=5 // pred_region
      %s155 = ssub.s32 %s10, 1
      // Predicated region
      $region13: #{bottleneck_forward_nhwc.3} parent=11 // pred_check
        %p156 = pneg %p71
      $region14: #{bottleneck_forward_nhwc.3} parent=11 // pred_check_branch
        %158 = sbr.rel (%p156) target = $region16
      $region15: #{bottleneck_forward_nhwc.3} parent=11 // pred_region
        _
      $region16: #{bottleneck_forward_nhwc.3} parent=11 // pred_fallthru
        _
      // Predicated region
      $region17: #{bottleneck_forward_nhwc.3} parent=11 // pred_check
        %p159 = pneg %p92
      $region18: #{bottleneck_forward_nhwc.3} parent=11 // pred_check_branch
        %161 = sbr.rel (%p159) target = $region20
      $region19: #{bottleneck_forward_nhwc.3} parent=11 // pred_region
        _
      $region20: #{bottleneck_forward_nhwc.3} parent=11 // pred_fallthru
        _
      // Predicated region
      $region21: #{bottleneck_forward_nhwc.3} parent=11 // pred_check
        %p162 = pneg %p113
      $region22: #{bottleneck_forward_nhwc.3} parent=11 // pred_check_branch
        %164 = sbr.rel (%p162) target = $region24
      $region23: #{bottleneck_forward_nhwc.3} parent=11 // pred_region
        _
      $region24: #{bottleneck_forward_nhwc.3} parent=11 // pred_fallthru
        _
    $region12: #{bottleneck_forward_nhwc.3} parent=5 // pred_fallthru
      _
    %p165 = scmp.lt.s32.totalorder %s10, 2
    // Predicated region
    $region25: #{bottleneck_forward_nhwc.3} parent=5 // pred_check
      %p166 = pneg %p165
    $region26: #{bottleneck_forward_nhwc.3} parent=5 // pred_check_branch
      %168 = sbr.rel (%p166) target = $region28
    $region27: #{bottleneck_forward_nhwc.3} parent=5 // pred_region
      // Predicated region
      $region29: #{bottleneck_forward_nhwc.3} parent=27 // pred_check
        %p169 = pneg %p44
      $region30: #{bottleneck_forward_nhwc.3} parent=27 // pred_check_branch
        %171 = sbr.rel (%p169) target = $region32
      $region31: #{bottleneck_forward_nhwc.3} parent=27 // pred_region
        %s172 = smul.u32 8, %s18
        %p173 = scmp.lt.s32.totalorder %s17, 1
        %s174 = scalar_select %p173, %s17, 1
        %p175 = scmp.lt.s32.totalorder %s172, 7
        %s176 = scalar_select %p175, %s172, 7
        %s177 = smul.addr %s174, 8
        %s178 = sadd.s32 %s176, %s177
        %s179 = smul.addr %s178, 8
        %s180 = scalar_lea.vmem %s0, %s179
        %s181 = smul.u32 8, %s18
      $region32: #{bottleneck_forward_nhwc.3} parent=27 // pred_fallthru
        _
    $region28: #{bottleneck_forward_nhwc.3} parent=5 // pred_fallthru
      _
    %p182 = scmp.le.s32.totalorder 1, %s10
    %p183 = scmp.lt.s32.totalorder %s10, 3
    %p184 = pnand %p182, %p183
    %p185 = pneg %p184
    // Predicated region
    $region33: #{bottleneck_forward_nhwc.3} parent=5 // pred_check
      _
    $region34: #{bottleneck_forward_nhwc.3} parent=5 // pred_check_branch
      %187 = sbr.rel (%p184) target = $region36
    $region35: #{bottleneck_forward_nhwc.3} parent=5 // pred_region
      %s188 = ssub.s32 %s10, 1
      %s189 = smul.u32 8, %s20
      %p190 = scmp.lt.s32.totalorder %s19, 1
      %s191 = scalar_select %p190, %s19, 1
      %p192 = scmp.lt.s32.totalorder %s189, 7
      %s193 = scalar_select %p192, %s189, 7
      %s194 = smul.addr %s191, 8
      %s195 = sadd.s32 %s193, %s194
      %s196 = smul.addr %s195, 8
      %s197 = scalar_lea.vmem %s0, %s196
      %p198 = pneg %p50
      %p199 = pneg %p47
      %p200 = pneg %p71
      %p201 = pneg %p68
      %p202 = pneg %p92
      %p203 = pneg %p89
      %p204 = pneg %p113
      %p205 = pneg %p110
      %p206 = pneg %p141
      %p207 = pneg %p138
      %s208 = smul.u32 8, %s20
      %p209 = scmp.lt.s32.totalorder %s19, 1
      %s210 = scalar_select %p209, %s19, 1
      %p211 = scmp.lt.s32.totalorder %s208, 7
      %s212 = scalar_select %p211, %s208, 7
      %s213 = smul.addr %s210, 8
      %s214 = sadd.s32 %s212, %s213
      %s215 = smul.addr %s214, 8
      %s216 = scalar_lea.vmem %s4, %s215
      %s217 = smul.u32 8, %s20
      %p218 = scmp.lt.s32.totalorder %s19, 1
      %s219 = scalar_select %p218, %s19, 1
      %p220 = scmp.lt.s32.totalorder %s217, 7
      %s221 = scalar_select %p220, %s217, 7
      %s222 = smul.addr %s219, 8
      %s223 = sadd.s32 %s221, %s222
      %s224 = smul.addr %s223, 8
      %s225 = scalar_lea.vmem %s0, %s224
      %s226 = smul.u32 8, %s20
      %s227 = smul.u32 8, %s20
      %p228 = scmp.lt.s32.totalorder %s19, 1
      %s229 = scalar_select %p228, %s19, 1
      %p230 = scmp.lt.s32.totalorder %s227, 7
      %s231 = scalar_select %p230, %s227, 7
      %s232 = smul.addr %s229, 8
      %s233 = sadd.s32 %s231, %s232
      %s234 = smul.addr %s233, 8
      %s235 = scalar_lea.vmem %s4, %s234
      %s236 = smul.u32 8, %s20
      %v238 = vld [vmem:[%s225] sm:$0xff]
      %v239 = vld [vmem:[%s225 + $0x8] sm:$0xff]
      %v240 = vld [vmem:[%s225 + $0x10] sm:$0xff]
      %v241 = vld [vmem:[%s225 + $0x18] sm:$0xff]
      %v242 = vld [vmem:[%s225 + $0x20] sm:$0xff]
      %v243 = vld [vmem:[%s225 + $0x28] sm:$0xff]
      %v244 = vld [vmem:[%s225 + $0x30] sm:$0xff]
      %v245 = vld [vmem:[%s225 + $0x38] sm:$0xff]
      %v246 = vld [vmem:[%s1] sm:$0x1]
      %v247 = vld [vmem:[%s2] sm:$0x1]
      %v249 = vlaneseq
      %v250 = vshrl.u32 %v249, 7
      %v251 = vsub.s32 0, %v250
      %v252 = vrot.slane %v246, %v251
      %v254 = vmul.f32 %v238, %v252
      %v255 = vmul.f32 %v239, %v252
      %v256 = vmul.f32 %v240, %v252
      %v257 = vmul.f32 %v241, %v252
      %v258 = vmul.f32 %v242, %v252
      %v259 = vmul.f32 %v243, %v252
      %v260 = vmul.f32 %v244, %v252
      %v261 = vmul.f32 %v245, %v252
      %v263 = vlaneseq
      %v264 = vshrl.u32 %v263, 7
      %v265 = vsub.s32 0, %v264
      %v266 = vrot.slane %v247, %v265
      %v268 = vadd.f32 %v254, %v266
      %v269 = vadd.f32 %v255, %v266
      %v270 = vadd.f32 %v256, %v266
      %v271 = vadd.f32 %v257, %v266
      %v272 = vadd.f32 %v258, %v266
      %v273 = vadd.f32 %v259, %v266
      %v274 = vadd.f32 %v260, %v266
      %v275 = vadd.f32 %v261, %v266
      %v276 = vmax.f32 %v268, 0.0
      %v277 = vmax.f32 %v269, 0.0
      %v278 = vmax.f32 %v270, 0.0
      %v279 = vmax.f32 %v271, 0.0
      %v280 = vmax.f32 %v272, 0.0
      %v281 = vmax.f32 %v273, 0.0
      %v282 = vmax.f32 %v274, 0.0
      %v283 = vmax.f32 %v275, 0.0
      %v284 = vpack.c.bf16 %v276, %v276
      %v285 = vpack.c.bf16 %v277, %v277
      %v286 = vpack.c.bf16 %v278, %v278
      %v287 = vpack.c.bf16 %v279, %v279
      %v288 = vpack.c.bf16 %v280, %v280
      %v289 = vpack.c.bf16 %v281, %v281
      %v290 = vpack.c.bf16 %v282, %v282
      %v291 = vpack.c.bf16 %v283, %v283
      %v292 = vld [vmem:[%s3] sm:$0xf]
      %v293 = vld [vmem:[%s3 + $0x4] sm:$0xf]
      %v294 = vld [vmem:[%s3 + $0x8] sm:$0xf]
      %v295 = vld [vmem:[%s3 + $0xc] sm:$0xf]
      %v296 = vld [vmem:[%s3 + $0x10] sm:$0xf]
      %v297 = vld [vmem:[%s3 + $0x14] sm:$0xf]
      %v298 = vld [vmem:[%s3 + $0x18] sm:$0xf]
      %v299 = vld [vmem:[%s3 + $0x1c] sm:$0xf]
      %v300 = vld [vmem:[%s3 + $0x20] sm:$0xf]
      %v301 = vld [vmem:[%s3 + $0x24] sm:$0xf]
      %v302 = vld [vmem:[%s3 + $0x28] sm:$0xf]
      %v303 = vld [vmem:[%s3 + $0x2c] sm:$0xf]
      %v304 = vld [vmem:[%s3 + $0x30] sm:$0xf]
      %v305 = vld [vmem:[%s3 + $0x34] sm:$0xf]
      %v306 = vld [vmem:[%s3 + $0x38] sm:$0xf]
      %v307 = vld [vmem:[%s3 + $0x3c] sm:$0xf]
      %v316 = vunpack.c.l.b16 %v284
      %v317 = vunpack.c.l.b16 %v285
      %v318 = vunpack.c.l.b16 %v286
      %v319 = vunpack.c.l.b16 %v287
      %v320 = vunpack.c.l.b16 %v288
      %v321 = vunpack.c.l.b16 %v289
      %v322 = vunpack.c.l.b16 %v290
      %v323 = vunpack.c.l.b16 %v291
      %v324 = vpack.c.b16 %v317, %v316
      %v325 = vpack.c.b16 %v319, %v318
      %v326 = vpack.c.b16 %v321, %v320
      %v327 = vpack.c.b16 %v323, %v322
      %v348 = vunpack.c.l.b16 %v292
      %v349 = vunpack.c.l.b16 %v293
      %v350 = vunpack.c.l.b16 %v294
      %v351 = vunpack.c.l.b16 %v295
      %v352 = vunpack.c.l.b16 %v296
      %v353 = vunpack.c.l.b16 %v297
      %v354 = vunpack.c.l.b16 %v298
      %v355 = vunpack.c.l.b16 %v299
      %v356 = vunpack.c.l.b16 %v300
      %v357 = vunpack.c.l.b16 %v301
      %v358 = vunpack.c.l.b16 %v302
      %v359 = vunpack.c.l.b16 %v303
      %v360 = vunpack.c.l.b16 %v304
      %v361 = vunpack.c.l.b16 %v305
      %v362 = vunpack.c.l.b16 %v306
      %v363 = vunpack.c.l.b16 %v307
      %v364 = vpack.c.b16 %v349, %v348
      %v365 = vpack.c.b16 %v351, %v350
      %v366 = vpack.c.b16 %v353, %v352
      %v367 = vpack.c.b16 %v355, %v354
      %v368 = vpack.c.b16 %v357, %v356
      %v369 = vpack.c.b16 %v359, %v358
      %v370 = vpack.c.b16 %v361, %v360
      %v371 = vpack.c.b16 %v363, %v362
      %380 = vmatprep.subr.bf16.mxu0 0
      %381 = vmatpush1.bf16.msra.mxu0 %v371
      %382 = vmatprep.subr.bf16.mxu0 0
      %383 = vmatpush1.bf16.msra.mxu0 %v370
      %384 = vmatprep.subr.bf16.mxu0 0
      %385 = vmatpush1.bf16.msra.mxu0 %v369
      %386 = vmatprep.subr.bf16.mxu0 0
      %387 = vmatpush1.bf16.msra.mxu0 %v368
      %388 = vmatprep.subr.bf16.mxu0 0
      %389 = vmatpush1.bf16.msra.mxu0 %v367
      %390 = vmatprep.subr.bf16.mxu0 0
      %391 = vmatpush1.bf16.msra.mxu0 %v366
      %392 = vmatprep.subr.bf16.mxu0 0
      %393 = vmatpush1.bf16.msra.mxu0 %v365
      %394 = vmatprep.subr.bf16.mxu0 0
      %395 = vmatpush1.bf16.msra.mxu0 %v364
      %396 = vmatprep.subr.bf16.mxu0 0
      %397 = vmatpush2.bf16.msra.mxu0 0
      %398 = vmatprep.subr.bf16.mxu0 0
      %399 = vmatpush2.bf16.msra.mxu0 0
      %400 = vmatprep.subr.bf16.mxu0 0
      %401 = vmatpush2.bf16.msra.mxu0 0
      %402 = vmatprep.subr.bf16.mxu0 0
      %403 = vmatpush2.bf16.msra.mxu0 0
      %404 = vmatprep.subr.bf16.mxu0 0
      %405 = vmatpush2.bf16.msra.mxu0 0
      %406 = vmatprep.subr.bf16.mxu0 0
      %407 = vmatpush2.bf16.msra.mxu0 0
      %408 = vmatprep.subr.bf16.mxu0 0
      %409 = vmatpush2.bf16.msra.mxu0 0
      %410 = vmatprep.subr.bf16.mxu0 0
      %411 = vmatpush2.bf16.msra.mxu0 0
      %412 = vmatprep.mubr.bf16.mxu0 0
      %413 = vmatmul.mubr.bf16.gmra.mxu0 %v324
      %v414 = vpop.f32.mrf.mxu0
      %v415 = vadd.f32 0.0, %v414
      %v416 = vpop.f32.mrf.mxu0
      %v417 = vpop.f32.mrf.mxu0
      %v418 = vadd.f32 0.0, %v417
      %v419 = vpop.f32.mrf.mxu0
      %420 = vmatprep.mubr.bf16.mxu0 0
      %421 = vmatmul.mubr.bf16.gmra.mxu0 %v325
      %v422 = vpop.f32.mrf.mxu0
      %v423 = vadd.f32 0.0, %v422
      %v424 = vpop.f32.mrf.mxu0
      %v425 = vpop.f32.mrf.mxu0
      %v426 = vadd.f32 0.0, %v425
      %v427 = vpop.f32.mrf.mxu0
      %428 = vmatprep.mubr.bf16.mxu0 0
      %429 = vmatmul.mubr.bf16.gmra.mxu0 %v326
      %v430 = vpop.f32.mrf.mxu0
      %v431 = vadd.f32 0.0, %v430
      %v432 = vpop.f32.mrf.mxu0
      %v433 = vpop.f32.mrf.mxu0
      %v434 = vadd.f32 0.0, %v433
      %v435 = vpop.f32.mrf.mxu0
      %436 = vmatprep.mubr.bf16.mxu0 0
      %437 = vmatmul.mubr.bf16.gmra.mxu0 %v327
      %v438 = vpop.f32.mrf.mxu0
      %v439 = vadd.f32 0.0, %v438
      %v440 = vpop.f32.mrf.mxu0
      %v441 = vpop.f32.mrf.mxu0
      %v442 = vadd.f32 0.0, %v441
      %v443 = vpop.f32.mrf.mxu0
      %444 = vdwg.mxu0
      %445 = vst [vmem:[%s235] sm:$0xff] %v415
      %446 = vst [vmem:[%s235 + $0x8] sm:$0xff] %v418
      %447 = vst [vmem:[%s235 + $0x10] sm:$0xff] %v423
      %448 = vst [vmem:[%s235 + $0x18] sm:$0xff] %v426
      %449 = vst [vmem:[%s235 + $0x20] sm:$0xff] %v431
      %450 = vst [vmem:[%s235 + $0x28] sm:$0xff] %v434
      %451 = vst [vmem:[%s235 + $0x30] sm:$0xff] %v439
      %452 = vst [vmem:[%s235 + $0x38] sm:$0xff] %v442
      %s453 = smul.u32 8, %s20
      %p454 = scmp.lt.s32.totalorder %s19, 1
      %s455 = scalar_select %p454, %s19, 1
      %p456 = scmp.lt.s32.totalorder %s453, 7
      %s457 = scalar_select %p456, %s453, 7
      %s458 = smul.addr %s455, 8
      %s459 = sadd.s32 %s457, %s458
      %s460 = smul.addr %s459, 8
      %s461 = scalar_lea.vmem %s4, %s460
      // Predicated region
      $region37: #{bottleneck_forward_nhwc.3} parent=35 // pred_check
        %p462 = pneg %p138
      $region38: #{bottleneck_forward_nhwc.3} parent=35 // pred_check_branch
        %464 = sbr.rel (%p462) target = $region40
      $region39: #{bottleneck_forward_nhwc.3} parent=35 // pred_region
        %s465 = smul.u32 8, %s20
      $region40: #{bottleneck_forward_nhwc.3} parent=35 // pred_fallthru
        _
    $region36: #{bottleneck_forward_nhwc.3} parent=5 // pred_fallthru
      _
    %p466 = scmp.le.s32.totalorder 2, %s10
    // Predicated region
    $region41: #{bottleneck_forward_nhwc.3} parent=5 // pred_check
      %p467 = pneg %p466
    $region42: #{bottleneck_forward_nhwc.3} parent=5 // pred_check_branch
      %469 = sbr.rel (%p467) target = $region44
    $region43: #{bottleneck_forward_nhwc.3} parent=5 // pred_region
      %s470 = ssub.s32 %s10, 2
      // Predicated region
      $region45: #{bottleneck_forward_nhwc.3} parent=43 // pred_check
        %p471 = pneg %p144
      $region46: #{bottleneck_forward_nhwc.3} parent=43 // pred_check_branch
        %473 = sbr.rel (%p471) target = $region48
      $region47: #{bottleneck_forward_nhwc.3} parent=43 // pred_region
        %s474 = smul.u32 8, %s22
        %p475 = scmp.lt.s32.totalorder %s21, 1
        %s476 = scalar_select %p475, %s21, 1
        %p477 = scmp.lt.s32.totalorder %s474, 7
        %s478 = scalar_select %p477, %s474, 7
        %s479 = smul.addr %s476, 8
        %s480 = sadd.s32 %s478, %s479
        %s481 = smul.addr %s480, 8
        %s482 = scalar_lea.vmem %s4, %s481
      $region48: #{bottleneck_forward_nhwc.3} parent=43 // pred_fallthru
        _
    $region44: #{bottleneck_forward_nhwc.3} parent=5 // pred_fallthru
      _
  $region6: #{bottleneck_forward_nhwc.3} parent=0 // loop_footer
    %s14 = sadd.s32 1, %s10
  $region7: #{bottleneck_forward_nhwc.3} parent=0 // loop_footer_branch
    %9 = sbr.rel target = $region3
  $region8: #{bottleneck_forward_nhwc.3} parent=0 // loop_exit
    _

// kernel: bottleneck_forward_nhwc.5
$region0: #{bottleneck_forward_nhwc.5}
  #allocation0 [shape = 'u32[]', space=smem, size = 0x4, offset = 0x4, fixed_abs, tag = 'smem constant byte address 0x4 - core index']
  #allocation1 [shape = 'u32[144,128]{1,0:T(1,128)}', space=vmem, size = 0x12000, scoped, tag = 'internal scratch']
  %s0 = inlined_call_operand.vmem [shape: f32[2,8,8,128], index: 0, kind: input, shape index: {}]
  %s1 = inlined_call_operand.vmem [shape: f32[1,128], index: 1, kind: input, shape index: {}]
  %s2 = inlined_call_operand.vmem [shape: f32[1,128], index: 2, kind: input, shape index: {}]
  %s3 = inlined_call_operand.vmem [shape: bf16[128,128], index: 3, kind: input, shape index: {}]
  %s4 = inlined_call_operand.vmem [shape: f32[2,8,8,128], index: 4, kind: input, shape index: {}]
  %s5 = inlined_call_operand.vmem [shape: bf16[128,128], index: 5, kind: input, shape index: {}]
  %s6 = inlined_call_operand.hbm [shape: f32[2,8,8,128], index: 6, kind: output, shape index: {}]
  %s7 = sld [smem:[#allocation0]]
  $region57: #{bottleneck_forward_nhwc.5} parent=0
    _
  %s9 = ssub.s32 1, %s7
  %s10 = scalar_select 0, %s9, %s7
  $region1: #{bottleneck_forward_nhwc.5} parent=0
    #allocation2 [shape = 'u8[65536]{0}', space=vmem, size = 0x10000, scoped, tag = 'output window, operand 0']
    #allocation3 [shape = 's32[2]{0}', space=sflag, size = 0x8, scoped, tag = 'scoped memory for bottleneck_forward_nhwc.5']
    %11 = vsyncpa [#allocation3], 0
    %s12 = scalar_lea.sflag [#allocation3], 1
    %13 = vsyncpa %s12, 0
    loop: start=0, step=1, limit=4
    $region2: #{bottleneck_forward_nhwc.5} parent=1 // loop_pre_header
      _
    $region3: #{bottleneck_forward_nhwc.5} parent=1 // loop_header
      %s15 = sphi 0, %s19
      %p16 = scmp.ge.s32.totalorder %s15, 4
      %s22 = sphi 0, %s34
      %s23 = sphi 0, %s30
      %s24 = sphi 0, %s22
      %s25 = sphi 0, %s23
      %s26 = sphi 0, %s24
      %s27 = sphi 0, %s25
      %s39 = sphi 0, %s41
      %s42 = sphi 0, %s39
      %s43 = sphi 0, %s42
      %s59 = sphi 0, %s43
      %s63 = sphi 0, %s63
      %s65 = sphi 0, %s63
      %s66 = sphi 0, %s65
      %s80 = sphi 0, %s66
      %s84 = sphi 0, %s84
      %s86 = sphi 0, %s84
      %s87 = sphi 0, %s86
      %s101 = sphi 0, %s87
      %s105 = sphi 0, %s105
      %s107 = sphi 0, %s105
      %s108 = sphi 0, %s107
      %s122 = sphi 0, %s108
      %s130 = sphi 0, %s132
      %s133 = sphi 0, %s130
      %s134 = sphi 0, %s133
      %s150 = sphi 0, %s134
      %s154 = sphi 0, %s154
      %s156 = sphi 0, %s154
      %s157 = sphi 0, %s156
      %s171 = sphi 0, %s157
      %s179 = sphi 0, %s181
      %s182 = sphi 0, %s179
      %s183 = sphi 0, %s182
      %s199 = sphi 0, %s183
    $region4: #{bottleneck_forward_nhwc.5} parent=1 // loop_header_branch
      %18 = sbr.rel (%p16) target = $region8
    $region5: #{bottleneck_forward_nhwc.5} parent=1 // loop_body
      %s20 = ssub.s32 %s15, 1
      %s21 = ssub.s32 %s15, 2
      %s28 = sadd.s32 1, %s23
      %p29 = scmp.ge.s32.totalorder %s28, 1
      %s30 = scalar_select %p29, 0, %s28
      %s31 = sadd.s32 1, %s22
      %s32 = scalar_select %p29, %s31, %s22
      %p33 = scmp.ge.s32.totalorder %s32, 2
      %s34 = scalar_select %p33, 0, %s32
      %s35 = ssub.s32 %s22, %s34
      %s36 = ssub.s32 %s23, %s30
      %s37 = sor.u32 %s35, %s36
      %p38 = scmp.eq.s32.totalorder %s37, 0
      %s40 = sadd.s32 %s39, 1
      %s41 = scalar_select %p38, %s39, %s40
      %p44 = pneg %p38
      %p45 = scmp.eq.s32.totalorder %s15, 1
      %p46 = por %p44, %p45
      %p47 = scmp.ne.s32.totalorder %s39, %s42
      %p48 = scmp.eq.s32.totalorder %s15, 0
      %p49 = por %p47, %p48
      %p50 = scmp.ne.s32.totalorder %s39, %s42
      %p51 = scmp.eq.s32.totalorder %s20, 1
      %p52 = por %p50, %p51
      %p53 = scmp.ne.s32.totalorder %s42, %s43
      %p54 = scmp.eq.s32.totalorder %s20, 0
      %p55 = por %p53, %p54
      %p56 = scmp.ne.s32.totalorder %s42, %s43
      %p57 = scmp.eq.s32.totalorder %s21, 1
      %p58 = por %p56, %p57
      %p60 = scmp.ne.s32.totalorder %s43, %s59
      %p61 = scmp.eq.s32.totalorder %s21, 0
      %p62 = por %p60, %p61
      %s64 = sadd.s32 %s63, 1
      %p67 = scmp.eq.s32.totalorder %s15, 1
      %p68 = scmp.ne.s32.totalorder %s63, %s65
      %p69 = scmp.eq.s32.totalorder %s15, 0
      %p70 = por %p68, %p69
      %p71 = scmp.ne.s32.totalorder %s63, %s65
      %p72 = scmp.eq.s32.totalorder %s20, 1
      %p73 = por %p71, %p72
      %p74 = scmp.ne.s32.totalorder %s65, %s66
      %p75 = scmp.eq.s32.totalorder %s20, 0
      %p76 = por %p74, %p75
      %p77 = scmp.ne.s32.totalorder %s65, %s66
      %p78 = scmp.eq.s32.totalorder %s21, 1
      %p79 = por %p77, %p78
      %p81 = scmp.ne.s32.totalorder %s66, %s80
      %p82 = scmp.eq.s32.totalorder %s21, 0
      %p83 = por %p81, %p82
      %s85 = sadd.s32 %s84, 1
      %p88 = scmp.eq.s32.totalorder %s15, 1
      %p89 = scmp.ne.s32.totalorder %s84, %s86
      %p90 = scmp.eq.s32.totalorder %s15, 0
      %p91 = por %p89, %p90
      %p92 = scmp.ne.s32.totalorder %s84, %s86
      %p93 = scmp.eq.s32.totalorder %s20, 1
      %p94 = por %p92, %p93
      %p95 = scmp.ne.s32.totalorder %s86, %s87
      %p96 = scmp.eq.s32.totalorder %s20, 0
      %p97 = por %p95, %p96
      %p98 = scmp.ne.s32.totalorder %s86, %s87
      %p99 = scmp.eq.s32.totalorder %s21, 1
      %p100 = por %p98, %p99
      %p102 = scmp.ne.s32.totalorder %s87, %s101
      %p103 = scmp.eq.s32.totalorder %s21, 0
      %p104 = por %p102, %p103
      %s106 = sadd.s32 %s105, 1
      %p109 = scmp.eq.s32.totalorder %s15, 1
      %p110 = scmp.ne.s32.totalorder %s105, %s107
      %p111 = scmp.eq.s32.totalorder %s15, 0
      %p112 = por %p110, %p111
      %p113 = scmp.ne.s32.totalorder %s105, %s107
      %p114 = scmp.eq.s32.totalorder %s20, 1
      %p115 = por %p113, %p114
      %p116 = scmp.ne.s32.totalorder %s107, %s108
      %p117 = scmp.eq.s32.totalorder %s20, 0
      %p118 = por %p116, %p117
      %p119 = scmp.ne.s32.totalorder %s107, %s108
      %p120 = scmp.eq.s32.totalorder %s21, 1
      %p121 = por %p119, %p120
      %p123 = scmp.ne.s32.totalorder %s108, %s122
      %p124 = scmp.eq.s32.totalorder %s21, 0
      %p125 = por %p123, %p124
      %s126 = ssub.s32 %s22, %s34
      %s127 = ssub.s32 %s23, %s30
      %s128 = sor.u32 %s126, %s127
      %p129 = scmp.eq.s32.totalorder %s128, 0
      %s131 = sadd.s32 %s130, 1
      %s132 = scalar_select %p129, %s130, %s131
      %p135 = pneg %p129
      %p136 = scmp.eq.s32.totalorder %s15, 1
      %p137 = por %p135, %p136
      %p138 = scmp.ne.s32.totalorder %s130, %s133
      %p139 = scmp.eq.s32.totalorder %s15, 0
      %p140 = por %p138, %p139
      %p141 = scmp.ne.s32.totalorder %s130, %s133
      %p142 = scmp.eq.s32.totalorder %s20, 1
      %p143 = por %p141, %p142
      %p144 = scmp.ne.s32.totalorder %s133, %s134
      %p145 = scmp.eq.s32.totalorder %s20, 0
      %p146 = por %p144, %p145
      %p147 = scmp.ne.s32.totalorder %s133, %s134
      %p148 = scmp.eq.s32.totalorder %s21, 1
      %p149 = por %p147, %p148
      %p151 = scmp.ne.s32.totalorder %s134, %s150
      %p152 = scmp.eq.s32.totalorder %s21, 0
      %p153 = por %p151, %p152
      %s155 = sadd.s32 %s154, 1
      %p158 = scmp.eq.s32.totalorder %s15, 1
      %p159 = scmp.ne.s32.totalorder %s154, %s156
      %p160 = scmp.eq.s32.totalorder %s15, 0
      %p161 = por %p159, %p160
      %p162 = scmp.ne.s32.totalorder %s154, %s156
      %p163 = scmp.eq.s32.totalorder %s20, 1
      %p164 = por %p162, %p163
      %p165 = scmp.ne.s32.totalorder %s156, %s157
      %p166 = scmp.eq.s32.totalorder %s20, 0
      %p167 = por %p165, %p166
      %p168 = scmp.ne.s32.totalorder %s156, %s157
      %p169 = scmp.eq.s32.totalorder %s21, 1
      %p170 = por %p168, %p169
      %p172 = scmp.ne.s32.totalorder %s157, %s171
      %p173 = scmp.eq.s32.totalorder %s21, 0
      %p174 = por %p172, %p173
      %s175 = ssub.s32 %s22, %s34
      %s176 = ssub.s32 %s23, %s30
      %s177 = sor.u32 %s175, %s176
      %p178 = scmp.eq.s32.totalorder %s177, 0
      %s180 = sadd.s32 %s179, 1
      %s181 = scalar_select %p178, %s179, %s180
      %p184 = pneg %p178
      %p185 = scmp.eq.s32.totalorder %s15, 1
      %p186 = por %p184, %p185
      %p187 = scmp.ne.s32.totalorder %s179, %s182
      %p188 = scmp.eq.s32.totalorder %s15, 0
      %p189 = por %p187, %p188
      %p190 = scmp.ne.s32.totalorder %s179, %s182
      %p191 = scmp.eq.s32.totalorder %s20, 1
      %p192 = por %p190, %p191
      %p193 = scmp.ne.s32.totalorder %s182, %s183
      %p194 = scmp.eq.s32.totalorder %s20, 0
      %p195 = por %p193, %p194
      %p196 = scmp.ne.s32.totalorder %s182, %s183
      %p197 = scmp.eq.s32.totalorder %s21, 1
      %p198 = por %p196, %p197
      %p200 = scmp.ne.s32.totalorder %s183, %s199
      %p201 = scmp.eq.s32.totalorder %s21, 0
      %p202 = por %p200, %p201
      %p203 = scmp.le.s32.totalorder 1, %s15
      %p204 = scmp.lt.s32.totalorder %s15, 3
      %p205 = pnand %p203, %p204
      %p206 = pneg %p205
      // Predicated region
      $region9: #{bottleneck_forward_nhwc.5} parent=5 // pred_check
        _
      $region10: #{bottleneck_forward_nhwc.5} parent=5 // pred_check_branch
        %208 = sbr.rel (%p205) target = $region12
      $region11: #{bottleneck_forward_nhwc.5} parent=5 // pred_region
        %s209 = ssub.s32 %s15, 1
        // Predicated region
        $region13: #{bottleneck_forward_nhwc.5} parent=11 // pred_check
          %p210 = pneg %p76
        $region14: #{bottleneck_forward_nhwc.5} parent=11 // pred_check_branch
          %212 = sbr.rel (%p210) target = $region16
        $region15: #{bottleneck_forward_nhwc.5} parent=11 // pred_region
          _
        $region16: #{bottleneck_forward_nhwc.5} parent=11 // pred_fallthru
          _
        // Predicated region
        $region17: #{bottleneck_forward_nhwc.5} parent=11 // pred_check
          %p213 = pneg %p97
        $region18: #{bottleneck_forward_nhwc.5} parent=11 // pred_check_branch
          %215 = sbr.rel (%p213) target = $region20
        $region19: #{bottleneck_forward_nhwc.5} parent=11 // pred_region
          _
        $region20: #{bottleneck_forward_nhwc.5} parent=11 // pred_fallthru
          _
        // Predicated region
        $region21: #{bottleneck_forward_nhwc.5} parent=11 // pred_check
          %p216 = pneg %p118
        $region22: #{bottleneck_forward_nhwc.5} parent=11 // pred_check_branch
          %218 = sbr.rel (%p216) target = $region24
        $region23: #{bottleneck_forward_nhwc.5} parent=11 // pred_region
          _
        $region24: #{bottleneck_forward_nhwc.5} parent=11 // pred_fallthru
          _
        // Predicated region
        $region25: #{bottleneck_forward_nhwc.5} parent=11 // pred_check
          %p219 = pneg %p167
        $region26: #{bottleneck_forward_nhwc.5} parent=11 // pred_check_branch
          %221 = sbr.rel (%p219) target = $region28
        $region27: #{bottleneck_forward_nhwc.5} parent=11 // pred_region
          _
        $region28: #{bottleneck_forward_nhwc.5} parent=11 // pred_fallthru
          _
      $region12: #{bottleneck_forward_nhwc.5} parent=5 // pred_fallthru
        _
      %p222 = scmp.lt.s32.totalorder %s15, 2
      // Predicated region
      $region29: #{bottleneck_forward_nhwc.5} parent=5 // pred_check
        %p223 = pneg %p222
      $region30: #{bottleneck_forward_nhwc.5} parent=5 // pred_check_branch
        %225 = sbr.rel (%p223) target = $region32
      $region31: #{bottleneck_forward_nhwc.5} parent=5 // pred_region
        // Predicated region
        $region33: #{bottleneck_forward_nhwc.5} parent=31 // pred_check
          %p226 = pneg %p49
        $region34: #{bottleneck_forward_nhwc.5} parent=31 // pred_check_branch
          %228 = sbr.rel (%p226) target = $region36
        $region35: #{bottleneck_forward_nhwc.5} parent=31 // pred_region
          %s229 = smul.u32 8, %s23
          %p230 = scmp.lt.s32.totalorder %s22, 1
          %s231 = scalar_select %p230, %s22, 1
          %p232 = scmp.lt.s32.totalorder %s229, 7
          %s233 = scalar_select %p232, %s229, 7
          %s234 = smul.addr %s231, 8
          %s235 = sadd.s32 %s233, %s234
          %s236 = smul.addr %s235, 8
          %s237 = scalar_lea.vmem %s0, %s236
          %s238 = smul.u32 8, %s23
        $region36: #{bottleneck_forward_nhwc.5} parent=31 // pred_fallthru
          _
        // Predicated region
        $region37: #{bottleneck_forward_nhwc.5} parent=31 // pred_check
          %p239 = pneg %p140
        $region38: #{bottleneck_forward_nhwc.5} parent=31 // pred_check_branch
          %241 = sbr.rel (%p239) target = $region40
        $region39: #{bottleneck_forward_nhwc.5} parent=31 // pred_region
          %s242 = smul.u32 8, %s23
          %p243 = scmp.lt.s32.totalorder %s22, 1
          %s244 = scalar_select %p243, %s22, 1
          %p245 = scmp.lt.s32.totalorder %s242, 7
          %s246 = scalar_select %p245, %s242, 7
          %s247 = smul.addr %s244, 8
          %s248 = sadd.s32 %s246, %s247
          %s249 = smul.addr %s248, 8
          %s250 = scalar_lea.vmem %s4, %s249
          %s251 = smul.u32 8, %s23
        $region40: #{bottleneck_forward_nhwc.5} parent=31 // pred_fallthru
          _
      $region32: #{bottleneck_forward_nhwc.5} parent=5 // pred_fallthru
        _
      %p252 = scmp.le.s32.totalorder 1, %s15
      %p253 = scmp.lt.s32.totalorder %s15, 3
      %p254 = pnand %p252, %p253
      %p255 = pneg %p254
      // Predicated region
      $region41: #{bottleneck_forward_nhwc.5} parent=5 // pred_check
        _
      $region42: #{bottleneck_forward_nhwc.5} parent=5 // pred_check_branch
        %257 = sbr.rel (%p254) target = $region44
      $region43: #{bottleneck_forward_nhwc.5} parent=5 // pred_region
        %s258 = ssub.s32 %s15, 1
        %s259 = smul.u32 8, %s25
        %p260 = scmp.lt.s32.totalorder %s24, 1
        %s261 = scalar_select %p260, %s24, 1
        %p262 = scmp.lt.s32.totalorder %s259, 7
        %s263 = scalar_select %p262, %s259, 7
        %s264 = smul.addr %s261, 8
        %s265 = sadd.s32 %s263, %s264
        %s266 = smul.addr %s265, 8
        %s267 = scalar_lea.vmem %s0, %s266
        %p268 = pneg %p55
        %p269 = pneg %p52
        %p270 = pneg %p76
        %p271 = pneg %p73
        %p272 = pneg %p97
        %p273 = pneg %p94
        %p274 = pneg %p118
        %p275 = pneg %p115
        %s276 = smul.u32 8, %s25
        %p277 = scmp.lt.s32.totalorder %s24, 1
        %s278 = scalar_select %p277, %s24, 1
        %p279 = scmp.lt.s32.totalorder %s276, 7
        %s280 = scalar_select %p279, %s276, 7
        %s281 = smul.addr %s278, 8
        %s282 = sadd.s32 %s280, %s281
        %s283 = smul.addr %s282, 8
        %s284 = scalar_lea.vmem %s4, %s283
        %p285 = pneg %p146
        %p286 = pneg %p143
        %p287 = pneg %p167
        %p288 = pneg %p164
        %p289 = pneg %p195
        %p290 = pneg %p192
        %s291 = sand.u32 %s182, 1
        %s292 = scalar_lea.sflag [#allocation3], %s291
        %s293 = sand.u32 %s182, 1
        %s294 = smul.addr %s293, 64
        %s295 = scalar_lea.vmem [#allocation2], %s294
        %s296 = smul.u32 8, %s25
        %p297 = scmp.lt.s32.totalorder %s24, 1
        %s298 = scalar_select %p297, %s24, 1
        %p299 = scmp.lt.s32.totalorder %s296, 7
        %s300 = scalar_select %p299, %s296, 7
        %s301 = smul.addr %s298, 8
        %s302 = sadd.s32 %s300, %s301
        %s303 = smul.addr %s302, 8
        %s304 = scalar_lea.vmem %s0, %s303
        %s305 = smul.u32 8, %s25
        %s306 = smul.u32 8, %s25
        %p307 = scmp.lt.s32.totalorder %s24, 1
        %s308 = scalar_select %p307, %s24, 1
        %p309 = scmp.lt.s32.totalorder %s306, 7
        %s310 = scalar_select %p309, %s306, 7
        %s311 = smul.addr %s308, 8
        %s312 = sadd.s32 %s310, %s311
        %s313 = smul.addr %s312, 8
        %s314 = scalar_lea.vmem %s4, %s313
        %s315 = smul.u32 8, %s25
        %s316 = smul.u32 8, %s25
        %v318 = vld [vmem:[%s304] sm:$0xff]
        %v319 = vld [vmem:[%s304 + $0x8] sm:$0xff]
        %v320 = vld [vmem:[%s304 + $0x10] sm:$0xff]
        %v321 = vld [vmem:[%s304 + $0x18] sm:$0xff]
        %v322 = vld [vmem:[%s304 + $0x20] sm:$0xff]
        %v323 = vld [vmem:[%s304 + $0x28] sm:$0xff]
        %v324 = vld [vmem:[%s304 + $0x30] sm:$0xff]
        %v325 = vld [vmem:[%s304 + $0x38] sm:$0xff]
        %v326 = vld [vmem:[%s1] sm:$0x1]
        %v327 = vld [vmem:[%s2] sm:$0x1]
        %v329 = vlaneseq
        %v330 = vshrl.u32 %v329, 7
        %v331 = vsub.s32 0, %v330
        %v332 = vrot.slane %v326, %v331
        %v334 = vmul.f32 %v318, %v332
        %v335 = vmul.f32 %v319, %v332
        %v336 = vmul.f32 %v320, %v332
        %v337 = vmul.f32 %v321, %v332
        %v338 = vmul.f32 %v322, %v332
        %v339 = vmul.f32 %v323, %v332
        %v340 = vmul.f32 %v324, %v332
        %v341 = vmul.f32 %v325, %v332
        %v343 = vlaneseq
        %v344 = vshrl.u32 %v343, 7
        %v345 = vsub.s32 0, %v344
        %v346 = vrot.slane %v327, %v345
        %v348 = vadd.f32 %v334, %v346
        %v349 = vadd.f32 %v335, %v346
        %v350 = vadd.f32 %v336, %v346
        %v351 = vadd.f32 %v337, %v346
        %v352 = vadd.f32 %v338, %v346
        %v353 = vadd.f32 %v339, %v346
        %v354 = vadd.f32 %v340, %v346
        %v355 = vadd.f32 %v341, %v346
        %v356 = vmax.f32 %v348, 0.0
        %v357 = vmax.f32 %v349, 0.0
        %v358 = vmax.f32 %v350, 0.0
        %v359 = vmax.f32 %v351, 0.0
        %v360 = vmax.f32 %v352, 0.0
        %v361 = vmax.f32 %v353, 0.0
        %v362 = vmax.f32 %v354, 0.0
        %v363 = vmax.f32 %v355, 0.0
        %v364 = vpack.c.bf16 %v356, %v356
        %v365 = vpack.c.bf16 %v357, %v357
        %v366 = vpack.c.bf16 %v358, %v358
        %v367 = vpack.c.bf16 %v359, %v359
        %v368 = vpack.c.bf16 %v360, %v360
        %v369 = vpack.c.bf16 %v361, %v361
        %v370 = vpack.c.bf16 %v362, %v362
        %v371 = vpack.c.bf16 %v363, %v363
        %v372 = vld [vmem:[%s3] sm:$0xf]
        %v373 = vld [vmem:[%s3 + $0x4] sm:$0xf]
        %v374 = vld [vmem:[%s3 + $0x8] sm:$0xf]
        %v375 = vld [vmem:[%s3 + $0xc] sm:$0xf]
        %v376 = vld [vmem:[%s3 + $0x10] sm:$0xf]
        %v377 = vld [vmem:[%s3 + $0x14] sm:$0xf]
        %v378 = vld [vmem:[%s3 + $0x18] sm:$0xf]
        %v379 = vld [vmem:[%s3 + $0x1c] sm:$0xf]
        %v380 = vld [vmem:[%s3 + $0x20] sm:$0xf]
        %v381 = vld [vmem:[%s3 + $0x24] sm:$0xf]
        %v382 = vld [vmem:[%s3 + $0x28] sm:$0xf]
        %v383 = vld [vmem:[%s3 + $0x2c] sm:$0xf]
        %v384 = vld [vmem:[%s3 + $0x30] sm:$0xf]
        %v385 = vld [vmem:[%s3 + $0x34] sm:$0xf]
        %v386 = vld [vmem:[%s3 + $0x38] sm:$0xf]
        %v387 = vld [vmem:[%s3 + $0x3c] sm:$0xf]
        %v396 = vunpack.c.l.b16 %v364
        %v397 = vunpack.c.l.b16 %v365
        %v398 = vunpack.c.l.b16 %v366
        %v399 = vunpack.c.l.b16 %v367
        %v400 = vunpack.c.l.b16 %v368
        %v401 = vunpack.c.l.b16 %v369
        %v402 = vunpack.c.l.b16 %v370
        %v403 = vunpack.c.l.b16 %v371
        %v404 = vpack.c.b16 %v397, %v396
        %v405 = vpack.c.b16 %v399, %v398
        %v406 = vpack.c.b16 %v401, %v400
        %v407 = vpack.c.b16 %v403, %v402
        %v428 = vunpack.c.l.b16 %v372
        %v429 = vunpack.c.l.b16 %v373
        %v430 = vunpack.c.l.b16 %v374
        %v431 = vunpack.c.l.b16 %v375
        %v432 = vunpack.c.l.b16 %v376
        %v433 = vunpack.c.l.b16 %v377
        %v434 = vunpack.c.l.b16 %v378
        %v435 = vunpack.c.l.b16 %v379
        %v436 = vunpack.c.l.b16 %v380
        %v437 = vunpack.c.l.b16 %v381
        %v438 = vunpack.c.l.b16 %v382
        %v439 = vunpack.c.l.b16 %v383
        %v440 = vunpack.c.l.b16 %v384
        %v441 = vunpack.c.l.b16 %v385
        %v442 = vunpack.c.l.b16 %v386
        %v443 = vunpack.c.l.b16 %v387
        %v444 = vpack.c.b16 %v429, %v428
        %v445 = vpack.c.b16 %v431, %v430
        %v446 = vpack.c.b16 %v433, %v432
        %v447 = vpack.c.b16 %v435, %v434
        %v448 = vpack.c.b16 %v437, %v436
        %v449 = vpack.c.b16 %v439, %v438
        %v450 = vpack.c.b16 %v441, %v440
        %v451 = vpack.c.b16 %v443, %v442
        %460 = vmatprep.subr.bf16.mxu0 0
        %461 = vmatpush1.bf16.msra.mxu0 %v451
        %462 = vmatprep.subr.bf16.mxu0 0
        %463 = vmatpush1.bf16.msra.mxu0 %v450
        %464 = vmatprep.subr.bf16.mxu0 0
        %465 = vmatpush1.bf16.msra.mxu0 %v449
        %466 = vmatprep.subr.bf16.mxu0 0
        %467 = vmatpush1.bf16.msra.mxu0 %v448
        %468 = vmatprep.subr.bf16.mxu0 0
        %469 = vmatpush1.bf16.msra.mxu0 %v447
        %470 = vmatprep.subr.bf16.mxu0 0
        %471 = vmatpush1.bf16.msra.mxu0 %v446
        %472 = vmatprep.subr.bf16.mxu0 0
        %473 = vmatpush1.bf16.msra.mxu0 %v445
        %474 = vmatprep.subr.bf16.mxu0 0
        %475 = vmatpush1.bf16.msra.mxu0 %v444
        %476 = vmatprep.subr.bf16.mxu0 0
        %477 = vmatpush2.bf16.msra.mxu0 0
        %478 = vmatprep.subr.bf16.mxu0 0
        %479 = vmatpush2.bf16.msra.mxu0 0
        %480 = vmatprep.subr.bf16.mxu0 0
        %481 = vmatpush2.bf16.msra.mxu0 0
        %482 = vmatprep.subr.bf16.mxu0 0
        %483 = vmatpush2.bf16.msra.mxu0 0
        %484 = vmatprep.subr.bf16.mxu0 0
        %485 = vmatpush2.bf16.msra.mxu0 0
        %486 = vmatprep.subr.bf16.mxu0 0
        %487 = vmatpush2.bf16.msra.mxu0 0
        %488 = vmatprep.subr.bf16.mxu0 0
        %489 = vmatpush2.bf16.msra.mxu0 0
        %490 = vmatprep.subr.bf16.mxu0 0
        %491 = vmatpush2.bf16.msra.mxu0 0
        %492 = vmatprep.mubr.bf16.mxu0 0
        %493 = vmatmul.mubr.bf16.gmra.mxu0 %v404
        %v494 = vpop.f32.mrf.mxu0
        %v495 = vadd.f32 0.0, %v494
        %v496 = vpop.f32.mrf.mxu0
        %v497 = vpop.f32.mrf.mxu0
        %v498 = vadd.f32 0.0, %v497
        %v499 = vpop.f32.mrf.mxu0
        %500 = vmatprep.mubr.bf16.mxu0 0
        %501 = vmatmul.mubr.bf16.gmra.mxu0 %v405
        %v502 = vpop.f32.mrf.mxu0
        %v503 = vadd.f32 0.0, %v502
        %v504 = vpop.f32.mrf.mxu0
        %v505 = vpop.f32.mrf.mxu0
        %v506 = vadd.f32 0.0, %v505
        %v507 = vpop.f32.mrf.mxu0
        %508 = vmatprep.mubr.bf16.mxu0 0
        %509 = vmatmul.mubr.bf16.gmra.mxu0 %v406
        %v510 = vpop.f32.mrf.mxu0
        %v511 = vadd.f32 0.0, %v510
        %v512 = vpop.f32.mrf.mxu0
        %v513 = vpop.f32.mrf.mxu0
        %v514 = vadd.f32 0.0, %v513
        %v515 = vpop.f32.mrf.mxu0
        %516 = vmatprep.mubr.bf16.mxu0 0
        %517 = vmatmul.mubr.bf16.gmra.mxu0 %v407
        %v518 = vpop.f32.mrf.mxu0
        %v519 = vadd.f32 0.0, %v518
        %v520 = vpop.f32.mrf.mxu0
        %v521 = vpop.f32.mrf.mxu0
        %v522 = vadd.f32 0.0, %v521
        %v523 = vpop.f32.mrf.mxu0
        %524 = vdwg.mxu0
        %v525 = vld [vmem:[%s314] sm:$0xff]
        %v526 = vld [vmem:[%s314 + $0x8] sm:$0xff]
        %v527 = vld [vmem:[%s314 + $0x10] sm:$0xff]
        %v528 = vld [vmem:[%s314 + $0x18] sm:$0xff]
        %v529 = vld [vmem:[%s314 + $0x20] sm:$0xff]
        %v530 = vld [vmem:[%s314 + $0x28] sm:$0xff]
        %v531 = vld [vmem:[%s314 + $0x30] sm:$0xff]
        %v532 = vld [vmem:[%s314 + $0x38] sm:$0xff]
        %v533 = vpack.c.bf16 %v525, %v525
        %v534 = vpack.c.bf16 %v526, %v526
        %v535 = vpack.c.bf16 %v527, %v527
        %v536 = vpack.c.bf16 %v528, %v528
        %v537 = vpack.c.bf16 %v529, %v529
        %v538 = vpack.c.bf16 %v530, %v530
        %v539 = vpack.c.bf16 %v531, %v531
        %v540 = vpack.c.bf16 %v532, %v532
        %v541 = vld [vmem:[%s5] sm:$0xf]
        %v542 = vld [vmem:[%s5 + $0x4] sm:$0xf]
        %v543 = vld [vmem:[%s5 + $0x8] sm:$0xf]
        %v544 = vld [vmem:[%s5 + $0xc] sm:$0xf]
        %v545 = vld [vmem:[%s5 + $0x10] sm:$0xf]
        %v546 = vld [vmem:[%s5 + $0x14] sm:$0xf]
        %v547 = vld [vmem:[%s5 + $0x18] sm:$0xf]
        %v548 = vld [vmem:[%s5 + $0x1c] sm:$0xf]
        %v549 = vld [vmem:[%s5 + $0x20] sm:$0xf]
        %v550 = vld [vmem:[%s5 + $0x24] sm:$0xf]
        %v551 = vld [vmem:[%s5 + $0x28] sm:$0xf]
        %v552 = vld [vmem:[%s5 + $0x2c] sm:$0xf]
        %v553 = vld [vmem:[%s5 + $0x30] sm:$0xf]
        %v554 = vld [vmem:[%s5 + $0x34] sm:$0xf]
        %v555 = vld [vmem:[%s5 + $0x38] sm:$0xf]
        %v556 = vld [vmem:[%s5 + $0x3c] sm:$0xf]
        %v565 = vunpack.c.l.b16 %v533
        %v566 = vunpack.c.l.b16 %v534
        %v567 = vunpack.c.l.b16 %v535
        %v568 = vunpack.c.l.b16 %v536
        %v569 = vunpack.c.l.b16 %v537
        %v570 = vunpack.c.l.b16 %v538
        %v571 = vunpack.c.l.b16 %v539
        %v572 = vunpack.c.l.b16 %v540
        %v573 = vpack.c.b16 %v566, %v565
        %v574 = vpack.c.b16 %v568, %v567
        %v575 = vpack.c.b16 %v570, %v569
        %v576 = vpack.c.b16 %v572, %v571
        %v597 = vunpack.c.l.b16 %v541
        %v598 = vunpack.c.l.b16 %v542
        %v599 = vunpack.c.l.b16 %v543
        %v600 = vunpack.c.l.b16 %v544
        %v601 = vunpack.c.l.b16 %v545
        %v602 = vunpack.c.l.b16 %v546
        %v603 = vunpack.c.l.b16 %v547
        %v604 = vunpack.c.l.b16 %v548
        %v605 = vunpack.c.l.b16 %v549
        %v606 = vunpack.c.l.b16 %v550
        %v607 = vunpack.c.l.b16 %v551
        %v608 = vunpack.c.l.b16 %v552
        %v609 = vunpack.c.l.b16 %v553
        %v610 = vunpack.c.l.b16 %v554
        %v611 = vunpack.c.l.b16 %v555
        %v612 = vunpack.c.l.b16 %v556
        %v613 = vpack.c.b16 %v598, %v597
        %v614 = vpack.c.b16 %v600, %v599
        %v615 = vpack.c.b16 %v602, %v601
        %v616 = vpack.c.b16 %v604, %v603
        %v617 = vpack.c.b16 %v606, %v605
        %v618 = vpack.c.b16 %v608, %v607
        %v619 = vpack.c.b16 %v610, %v609
        %v620 = vpack.c.b16 %v612, %v611
        %629 = vmatprep.subr.bf16.mxu0 0
        %630 = vmatpush1.bf16.msra.mxu0 %v620
        %631 = vmatprep.subr.bf16.mxu0 0
        %632 = vmatpush1.bf16.msra.mxu0 %v619
        %633 = vmatprep.subr.bf16.mxu0 0
        %634 = vmatpush1.bf16.msra.mxu0 %v618
        %635 = vmatprep.subr.bf16.mxu0 0
        %636 = vmatpush1.bf16.msra.mxu0 %v617
        %637 = vmatprep.subr.bf16.mxu0 0
        %638 = vmatpush1.bf16.msra.mxu0 %v616
        %639 = vmatprep.subr.bf16.mxu0 0
        %640 = vmatpush1.bf16.msra.mxu0 %v615
        %641 = vmatprep.subr.bf16.mxu0 0
        %642 = vmatpush1.bf16.msra.mxu0 %v614
        %643 = vmatprep.subr.bf16.mxu0 0
        %644 = vmatpush1.bf16.msra.mxu0 %v613
        %645 = vmatprep.subr.bf16.mxu0 0
        %646 = vmatpush2.bf16.msra.mxu0 0
        %647 = vmatprep.subr.bf16.mxu0 0
        %648 = vmatpush2.bf16.msra.mxu0 0
        %649 = vmatprep.subr.bf16.mxu0 0
        %650 = vmatpush2.bf16.msra.mxu0 0
        %651 = vmatprep.subr.bf16.mxu0 0
        %652 = vmatpush2.bf16.msra.mxu0 0
        %653 = vmatprep.subr.bf16.mxu0 0
        %654 = vmatpush2.bf16.msra.mxu0 0
        %655 = vmatprep.subr.bf16.mxu0 0
        %656 = vmatpush2.bf16.msra.mxu0 0
        %657 = vmatprep.subr.bf16.mxu0 0
        %658 = vmatpush2.bf16.msra.mxu0 0
        %659 = vmatprep.subr.bf16.mxu0 0
        %660 = vmatpush2.bf16.msra.mxu0 0
        %661 = vmatprep.mubr.bf16.mxu0 0
        %662 = vmatmul.mubr.bf16.gmra.mxu0 %v573
        %v663 = vpop.f32.mrf.mxu0
        %v664 = vadd.f32 0.0, %v663
        %v665 = vpop.f32.mrf.mxu0
        %v666 = vpop.f32.mrf.mxu0
        %v667 = vadd.f32 0.0, %v666
        %v668 = vpop.f32.mrf.mxu0
        %669 = vmatprep.mubr.bf16.mxu0 0
        %670 = vmatmul.mubr.bf16.gmra.mxu0 %v574
        %v671 = vpop.f32.mrf.mxu0
        %v672 = vadd.f32 0.0, %v671
        %v673 = vpop.f32.mrf.mxu0
        %v674 = vpop.f32.mrf.mxu0
        %v675 = vadd.f32 0.0, %v674
        %v676 = vpop.f32.mrf.mxu0
        %677 = vmatprep.mubr.bf16.mxu0 0
        %678 = vmatmul.mubr.bf16.gmra.mxu0 %v575
        %v679 = vpop.f32.mrf.mxu0
        %v680 = vadd.f32 0.0, %v679
        %v681 = vpop.f32.mrf.mxu0
        %v682 = vpop.f32.mrf.mxu0
        %v683 = vadd.f32 0.0, %v682
        %v684 = vpop.f32.mrf.mxu0
        %685 = vmatprep.mubr.bf16.mxu0 0
        %686 = vmatmul.mubr.bf16.gmra.mxu0 %v576
        %v687 = vpop.f32.mrf.mxu0
        %v688 = vadd.f32 0.0, %v687
        %v689 = vpop.f32.mrf.mxu0
        %v690 = vpop.f32.mrf.mxu0
        %v691 = vadd.f32 0.0, %v690
        %v692 = vpop.f32.mrf.mxu0
        %693 = vdwg.mxu0
        %v694 = vadd.f32 %v495, %v664
        %v695 = vadd.f32 %v498, %v667
        %v696 = vadd.f32 %v503, %v672
        %v697 = vadd.f32 %v506, %v675
        %v698 = vadd.f32 %v511, %v680
        %v699 = vadd.f32 %v514, %v683
        %v700 = vadd.f32 %v519, %v688
        %v701 = vadd.f32 %v522, %v691
        %702 = vst [vmem:[%s295] sm:$0xff] %v694
        %703 = vst [vmem:[%s295 + $0x8] sm:$0xff] %v695
        %704 = vst [vmem:[%s295 + $0x10] sm:$0xff] %v696
        %705 = vst [vmem:[%s295 + $0x18] sm:$0xff] %v697
        %706 = vst [vmem:[%s295 + $0x20] sm:$0xff] %v698
        %707 = vst [vmem:[%s295 + $0x28] sm:$0xff] %v699
        %708 = vst [vmem:[%s295 + $0x30] sm:$0xff] %v700
        %709 = vst [vmem:[%s295 + $0x38] sm:$0xff] %v701
        %s710 = sand.u32 %s182, 1
        %s711 = scalar_lea.sflag [#allocation3], %s710
        %s712 = sand.u32 %s182, 1
        %s713 = smul.addr %s712, 64
        %s714 = scalar_lea.vmem [#allocation2], %s713
        // Predicated region
        $region45: #{bottleneck_forward_nhwc.5} parent=43 // pred_check
          %p715 = pneg %p192
        $region46: #{bottleneck_forward_nhwc.5} parent=43 // pred_check_branch
          %717 = sbr.rel (%p715) target = $region48
        $region47: #{bottleneck_forward_nhwc.5} parent=43 // pred_region
          %s718 = smul.u32 8, %s25
          %s720 = ssub.s32 1024, 1024
          %721 = vsyncadd %s711, %s720
          %s722 = smul.addr %s24, 8
          %s723 = sadd.s32 %s718, %s722
          %s724 = smul.addr %s723, 128
          %s725 = scalar_lea.hbm %s6, %s724
          %s726 = sshll.u32 %s714, 4
          %s727 = int_to_ptr.vmem [resolvable:$true] %s726
          %732 = dma.vmem_to_hbm [thread:$0]  %s727, 1024, %s725, %s711, 128, 128, 8
        $region48: #{bottleneck_forward_nhwc.5} parent=43 // pred_fallthru
          _
      $region44: #{bottleneck_forward_nhwc.5} parent=5 // pred_fallthru
        _
      %p733 = scmp.le.s32.totalorder 2, %s15
      // Predicated region
      $region49: #{bottleneck_forward_nhwc.5} parent=5 // pred_check
        %p734 = pneg %p733
      $region50: #{bottleneck_forward_nhwc.5} parent=5 // pred_check_branch
        %736 = sbr.rel (%p734) target = $region52
      $region51: #{bottleneck_forward_nhwc.5} parent=5 // pred_region
        %s737 = ssub.s32 %s15, 2
        // Predicated region
        $region53: #{bottleneck_forward_nhwc.5} parent=51 // pred_check
          %p738 = pneg %p198
        $region54: #{bottleneck_forward_nhwc.5} parent=51 // pred_check_branch
          %740 = sbr.rel (%p738) target = $region56
        $region55: #{bottleneck_forward_nhwc.5} parent=51 // pred_region
          %s741 = sand.u32 %s183, 1
          %s742 = scalar_lea.sflag [#allocation3], %s741
          %s743 = sand.u32 %s183, 1
          %s744 = smul.addr %s743, 64
          %s745 = scalar_lea.vmem [#allocation2], %s744
          %746 = dma.done %s742, 1024
        $region56: #{bottleneck_forward_nhwc.5} parent=51 // pred_fallthru
          _
      $region52: #{bottleneck_forward_nhwc.5} parent=5 // pred_fallthru
        _
    $region6: #{bottleneck_forward_nhwc.5} parent=1 // loop_footer
      %s19 = sadd.s32 1, %s15
    $region7: #{bottleneck_forward_nhwc.5} parent=1 // loop_footer_branch
      %14 = sbr.rel target = $region3
    $region8: #{bottleneck_forward_nhwc.5} parent=1 // loop_exit
      _
    %747 = vsyncpa [#allocation3], 1
    %s748 = scalar_lea.sflag [#allocation3], 1
    %749 = vsyncpa %s748, 1

// kernel: bottleneck_forward_nhwc.4
$region0: #{bottleneck_forward_nhwc.4}
  #allocation0 [shape = 'u32[]', space=smem, size = 0x4, offset = 0x4, fixed_abs, tag = 'smem constant byte address 0x4 - core index']
  #allocation1 [shape = 'u32[144,128]{1,0:T(1,128)}', space=vmem, size = 0x12000, scoped, tag = 'internal scratch']
  #allocation2 [shape = 'bf16[1,10,10,128]{3,2,1,0:T(8,128)(2,1)}', space=vmem, size = 0xa000, scoped, tag = 'scratch operand']
  %s0 = inlined_call_operand.vmem [shape: f32[2,8,8,128], index: 0, kind: input, shape index: {}]
  %s1 = inlined_call_operand.vmem [shape: f32[1,128], index: 1, kind: input, shape index: {}]
  %s2 = inlined_call_operand.vmem [shape: f32[1,128], index: 2, kind: input, shape index: {}]
  %s3 = inlined_call_operand.vmem [shape: bf16[1152,128], index: 3, kind: input, shape index: {}]
  %s4 = inlined_call_operand.vmem [shape: f32[2,8,8,128], index: 4, kind: output, shape index: {}]
  %s5 = sld [smem:[#allocation0]]
  $region49: #{bottleneck_forward_nhwc.4} parent=0
    _
  %s7 = ssub.s32 1, %s5
  %s8 = scalar_select 0, %s7, %s5
  loop: start=0, step=1, limit=4
  $region2: #{bottleneck_forward_nhwc.4} parent=0 // loop_pre_header
    _
  $region3: #{bottleneck_forward_nhwc.4} parent=0 // loop_header
    %s10 = sphi 0, %s14
    %p11 = scmp.ge.s32.totalorder %s10, 4
    %s20 = sphi 0, %s22
    %s23 = sphi 0, %s20
    %s24 = sphi 0, %s23
    %s40 = sphi 0, %s24
    %s44 = sphi 0, %s44
    %s46 = sphi 0, %s44
    %s47 = sphi 0, %s46
    %s61 = sphi 0, %s47
    %s65 = sphi 0, %s65
    %s67 = sphi 0, %s65
    %s68 = sphi 0, %s67
    %s82 = sphi 0, %s68
    %s86 = sphi 0, %s86
    %s88 = sphi 0, %s86
    %s89 = sphi 0, %s88
    %s103 = sphi 0, %s89
    %s109 = sphi 0, %s111
    %s112 = sphi 0, %s109
    %s113 = sphi 0, %s112
    %s129 = sphi 0, %s113
  $region4: #{bottleneck_forward_nhwc.4} parent=0 // loop_header_branch
    %13 = sbr.rel (%p11) target = $region8
  $region5: #{bottleneck_forward_nhwc.4} parent=0 // loop_body
    %s15 = ssub.s32 %s10, 1
    %s16 = ssub.s32 %s10, 2
    %s17 = sadd.s32 %s10, 1
    %s18 = ssub.s32 %s10, %s17
    %p19 = scmp.eq.s32.totalorder %s18, 0
    %s21 = sadd.s32 %s20, 1
    %s22 = scalar_select %p19, %s20, %s21
    %p25 = pneg %p19
    %p26 = scmp.eq.s32.totalorder %s10, 1
    %p27 = por %p25, %p26
    %p28 = scmp.ne.s32.totalorder %s20, %s23
    %p29 = scmp.eq.s32.totalorder %s10, 0
    %p30 = por %p28, %p29
    %p31 = scmp.ne.s32.totalorder %s20, %s23
    %p32 = scmp.eq.s32.totalorder %s15, 1
    %p33 = por %p31, %p32
    %p34 = scmp.ne.s32.totalorder %s23, %s24
    %p35 = scmp.eq.s32.totalorder %s15, 0
    %p36 = por %p34, %p35
    %p37 = scmp.ne.s32.totalorder %s23, %s24
    %p38 = scmp.eq.s32.totalorder %s16, 1
    %p39 = por %p37, %p38
    %p41 = scmp.ne.s32.totalorder %s24, %s40
    %p42 = scmp.eq.s32.totalorder %s16, 0
    %p43 = por %p41, %p42
    %s45 = sadd.s32 %s44, 1
    %p48 = scmp.eq.s32.totalorder %s10, 1
    %p49 = scmp.ne.s32.totalorder %s44, %s46
    %p50 = scmp.eq.s32.totalorder %s10, 0
    %p51 = por %p49, %p50
    %p52 = scmp.ne.s32.totalorder %s44, %s46
    %p53 = scmp.eq.s32.totalorder %s15, 1
    %p54 = por %p52, %p53
    %p55 = scmp.ne.s32.totalorder %s46, %s47
    %p56 = scmp.eq.s32.totalorder %s15, 0
    %p57 = por %p55, %p56
    %p58 = scmp.ne.s32.totalorder %s46, %s47
    %p59 = scmp.eq.s32.totalorder %s16, 1
    %p60 = por %p58, %p59
    %p62 = scmp.ne.s32.totalorder %s47, %s61
    %p63 = scmp.eq.s32.totalorder %s16, 0
    %p64 = por %p62, %p63
    %s66 = sadd.s32 %s65, 1
    %p69 = scmp.eq.s32.totalorder %s10, 1
    %p70 = scmp.ne.s32.totalorder %s65, %s67
    %p71 = scmp.eq.s32.totalorder %s10, 0
    %p72 = por %p70, %p71
    %p73 = scmp.ne.s32.totalorder %s65, %s67
    %p74 = scmp.eq.s32.totalorder %s15, 1
    %p75 = por %p73, %p74
    %p76 = scmp.ne.s32.totalorder %s67, %s68
    %p77 = scmp.eq.s32.totalorder %s15, 0
    %p78 = por %p76, %p77
    %p79 = scmp.ne.s32.totalorder %s67, %s68
    %p80 = scmp.eq.s32.totalorder %s16, 1
    %p81 = por %p79, %p80
    %p83 = scmp.ne.s32.totalorder %s68, %s82
    %p84 = scmp.eq.s32.totalorder %s16, 0
    %p85 = por %p83, %p84
    %s87 = sadd.s32 %s86, 1
    %p90 = scmp.eq.s32.totalorder %s10, 1
    %p91 = scmp.ne.s32.totalorder %s86, %s88
    %p92 = scmp.eq.s32.totalorder %s10, 0
    %p93 = por %p91, %p92
    %p94 = scmp.ne.s32.totalorder %s86, %s88
    %p95 = scmp.eq.s32.totalorder %s15, 1
    %p96 = por %p94, %p95
    %p97 = scmp.ne.s32.totalorder %s88, %s89
    %p98 = scmp.eq.s32.totalorder %s15, 0
    %p99 = por %p97, %p98
    %p100 = scmp.ne.s32.totalorder %s88, %s89
    %p101 = scmp.eq.s32.totalorder %s16, 1
    %p102 = por %p100, %p101
    %p104 = scmp.ne.s32.totalorder %s89, %s103
    %p105 = scmp.eq.s32.totalorder %s16, 0
    %p106 = por %p104, %p105
    %s107 = ssub.s32 %s10, %s17
    %p108 = scmp.eq.s32.totalorder %s107, 0
    %s110 = sadd.s32 %s109, 1
    %s111 = scalar_select %p108, %s109, %s110
    %p114 = pneg %p108
    %p115 = scmp.eq.s32.totalorder %s10, 1
    %p116 = por %p114, %p115
    %p117 = scmp.ne.s32.totalorder %s109, %s112
    %p118 = scmp.eq.s32.totalorder %s10, 0
    %p119 = por %p117, %p118
    %p120 = scmp.ne.s32.totalorder %s109, %s112
    %p121 = scmp.eq.s32.totalorder %s15, 1
    %p122 = por %p120, %p121
    %p123 = scmp.ne.s32.totalorder %s112, %s113
    %p124 = scmp.eq.s32.totalorder %s15, 0
    %p125 = por %p123, %p124
    %p126 = scmp.ne.s32.totalorder %s112, %s113
    %p127 = scmp.eq.s32.totalorder %s16, 1
    %p128 = por %p126, %p127
    %p130 = scmp.ne.s32.totalorder %s113, %s129
    %p131 = scmp.eq.s32.totalorder %s16, 0
    %p132 = por %p130, %p131
    %p133 = scmp.le.s32.totalorder 1, %s10
    %p134 = scmp.lt.s32.totalorder %s10, 3
    %p135 = pnand %p133, %p134
    %p136 = pneg %p135
    // Predicated region
    $region9: #{bottleneck_forward_nhwc.4} parent=5 // pred_check
      _
    $region10: #{bottleneck_forward_nhwc.4} parent=5 // pred_check_branch
      %138 = sbr.rel (%p135) target = $region12
    $region11: #{bottleneck_forward_nhwc.4} parent=5 // pred_region
      %s139 = ssub.s32 %s10, 1
      // Predicated region
      $region13: #{bottleneck_forward_nhwc.4} parent=11 // pred_check
        %p140 = pneg %p57
      $region14: #{bottleneck_forward_nhwc.4} parent=11 // pred_check_branch
        %142 = sbr.rel (%p140) target = $region16
      $region15: #{bottleneck_forward_nhwc.4} parent=11 // pred_region
        _
      $region16: #{bottleneck_forward_nhwc.4} parent=11 // pred_fallthru
        _
      // Predicated region
      $region17: #{bottleneck_forward_nhwc.4} parent=11 // pred_check
        %p143 = pneg %p78
      $region18: #{bottleneck_forward_nhwc.4} parent=11 // pred_check_branch
        %145 = sbr.rel (%p143) target = $region20
      $region19: #{bottleneck_forward_nhwc.4} parent=11 // pred_region
        _
      $region20: #{bottleneck_forward_nhwc.4} parent=11 // pred_fallthru
        _
      // Predicated region
      $region21: #{bottleneck_forward_nhwc.4} parent=11 // pred_check
        %p146 = pneg %p99
      $region22: #{bottleneck_forward_nhwc.4} parent=11 // pred_check_branch
        %148 = sbr.rel (%p146) target = $region24
      $region23: #{bottleneck_forward_nhwc.4} parent=11 // pred_region
        _
      $region24: #{bottleneck_forward_nhwc.4} parent=11 // pred_fallthru
        _
    $region12: #{bottleneck_forward_nhwc.4} parent=5 // pred_fallthru
      _
    %p149 = scmp.lt.s32.totalorder %s10, 2
    // Predicated region
    $region25: #{bottleneck_forward_nhwc.4} parent=5 // pred_check
      %p150 = pneg %p149
    $region26: #{bottleneck_forward_nhwc.4} parent=5 // pred_check_branch
      %152 = sbr.rel (%p150) target = $region28
    $region27: #{bottleneck_forward_nhwc.4} parent=5 // pred_region
      // Predicated region
      $region29: #{bottleneck_forward_nhwc.4} parent=27 // pred_check
        %p153 = pneg %p30
      $region30: #{bottleneck_forward_nhwc.4} parent=27 // pred_check_branch
        %155 = sbr.rel (%p153) target = $region32
      $region31: #{bottleneck_forward_nhwc.4} parent=27 // pred_region
        %p156 = scmp.lt.s32.totalorder %s10, 1
        %s157 = scalar_select %p156, %s10, 1
        %s158 = smul.addr %s157, 8
        %s159 = smul.addr %s158, 8
        %s160 = scalar_lea.vmem %s0, %s159
      $region32: #{bottleneck_forward_nhwc.4} parent=27 // pred_fallthru
        _
    $region28: #{bottleneck_forward_nhwc.4} parent=5 // pred_fallthru
      _
    %p161 = scmp.le.s32.totalorder 1, %s10
    %p162 = scmp.lt.s32.totalorder %s10, 3
    %p163 = pnand %p161, %p162
    %p164 = pneg %p163
    // Predicated region
    $region33: #{bottleneck_forward_nhwc.4} parent=5 // pred_check
      _
    $region34: #{bottleneck_forward_nhwc.4} parent=5 // pred_check_branch
      %166 = sbr.rel (%p163) target = $region36
    $region35: #{bottleneck_forward_nhwc.4} parent=5 // pred_region
      %s167 = ssub.s32 %s10, 1
      %p168 = scmp.lt.s32.totalorder %s15, 1
      %s169 = scalar_select %p168, %s15, 1
      %s170 = smul.addr %s169, 8
      %s171 = smul.addr %s170, 8
      %s172 = scalar_lea.vmem %s0, %s171
      %p173 = pneg %p36
      %p174 = pneg %p33
      %p175 = pneg %p57
      %p176 = pneg %p54
      %p177 = pneg %p78
      %p178 = pneg %p75
      %p179 = pneg %p99
      %p180 = pneg %p96
      %p181 = pneg %p125
      %p182 = pneg %p122
      %p183 = scmp.lt.s32.totalorder %s15, 1
      %s184 = scalar_select %p183, %s15, 1
      %s185 = smul.addr %s184, 8
      %s186 = smul.addr %s185, 8
      %s187 = scalar_lea.vmem %s4, %s186
      %p188 = scmp.lt.s32.totalorder %s15, 1
      %s189 = scalar_select %p188, %s15, 1
      %s190 = smul.addr %s189, 8
      %s191 = smul.addr %s190, 8
      %s192 = scalar_lea.vmem %s0, %s191
      %p193 = scmp.lt.s32.totalorder %s15, 1
      %s194 = scalar_select %p193, %s15, 1
      %s195 = smul.addr %s194, 8
      %s196 = smul.addr %s195, 8
      %s197 = scalar_lea.vmem %s4, %s196
      %v199 = vld [vmem:[%s192] sm:$0xff]
      %v200 = vld [vmem:[%s192 + $0x8] sm:$0xff]
      %v201 = vld [vmem:[%s192 + $0x10] sm:$0xff]
      %v202 = vld [vmem:[%s192 + $0x18] sm:$0xff]
      %v203 = vld [vmem:[%s192 + $0x20] sm:$0xff]
      %v204 = vld [vmem:[%s192 + $0x28] sm:$0xff]
      %v205 = vld [vmem:[%s192 + $0x30] sm:$0xff]
      %v206 = vld [vmem:[%s192 + $0x38] sm:$0xff]
      %v207 = vld [vmem:[%s1] sm:$0x1]
      %v208 = vld [vmem:[%s2] sm:$0x1]
      %v210 = vlaneseq
      %v211 = vshrl.u32 %v210, 7
      %v212 = vsub.s32 0, %v211
      %v213 = vrot.slane %v207, %v212
      %v215 = vmul.f32 %v199, %v213
      %v216 = vmul.f32 %v200, %v213
      %v217 = vmul.f32 %v201, %v213
      %v218 = vmul.f32 %v202, %v213
      %v219 = vmul.f32 %v203, %v213
      %v220 = vmul.f32 %v204, %v213
      %v221 = vmul.f32 %v205, %v213
      %v222 = vmul.f32 %v206, %v213
      %v224 = vlaneseq
      %v225 = vshrl.u32 %v224, 7
      %v226 = vsub.s32 0, %v225
      %v227 = vrot.slane %v208, %v226
      %v229 = vadd.f32 %v215, %v227
      %v230 = vadd.f32 %v216, %v227
      %v231 = vadd.f32 %v217, %v227
      %v232 = vadd.f32 %v218, %v227
      %v233 = vadd.f32 %v219, %v227
      %v234 = vadd.f32 %v220, %v227
      %v235 = vadd.f32 %v221, %v227
      %v236 = vadd.f32 %v222, %v227
      %v237 = vmax.f32 %v229, 0.0
      %v238 = vmax.f32 %v230, 0.0
      %v239 = vmax.f32 %v231, 0.0
      %v240 = vmax.f32 %v232, 0.0
      %v241 = vmax.f32 %v233, 0.0
      %v242 = vmax.f32 %v234, 0.0
      %v243 = vmax.f32 %v235, 0.0
      %v244 = vmax.f32 %v236, 0.0
      %v245 = vpack.c.bf16 %v237, %v237
      %v246 = vpack.c.bf16 %v238, %v238
      %v247 = vpack.c.bf16 %v239, %v239
      %v248 = vpack.c.bf16 %v240, %v240
      %v249 = vpack.c.bf16 %v241, %v241
      %v250 = vpack.c.bf16 %v242, %v242
      %v251 = vpack.c.bf16 %v243, %v243
      %v252 = vpack.c.bf16 %v244, %v244
      %253 = vst [vmem:[#allocation2] sm:$0xf] 0
      %254 = vst [vmem:[#allocation2 + $0x4] sm:$0x1] 0
      %255 = vst [vmem:[#allocation2 + $0x8] sm:$0xf] 0
      %256 = vst [vmem:[#allocation2 + $0xc] sm:$0x1] 0
      %257 = vst [vmem:[#allocation2 + $0x10] sm:$0xf] 0
      %258 = vst [vmem:[#allocation2 + $0x14] sm:$0x1] 0
      %259 = vst [vmem:[#allocation2 + $0x18] sm:$0xf] 0
      %260 = vst [vmem:[#allocation2 + $0x1c] sm:$0x1] 0
      %261 = vst [vmem:[#allocation2 + $0x20] sm:$0xf] 0
      %262 = vst [vmem:[#allocation2 + $0x24] sm:$0x1] 0
      %263 = vst [vmem:[#allocation2 + $0x28] sm:$0xf] 0
      %264 = vst [vmem:[#allocation2 + $0x2c] sm:$0x1] 0
      %265 = vst [vmem:[#allocation2 + $0x30] sm:$0xf] 0
      %266 = vst [vmem:[#allocation2 + $0x34] sm:$0x1] 0
      %267 = vst [vmem:[#allocation2 + $0x38] sm:$0xf] 0
      %268 = vst [vmem:[#allocation2 + $0x3c] sm:$0x1] 0
      %269 = vst [vmem:[#allocation2 + $0x40] sm:$0xf] 0
      %270 = vst [vmem:[#allocation2 + $0x44] sm:$0x1] 0
      %271 = vst [vmem:[#allocation2 + $0x48] sm:$0xf] 0
      %272 = vst [vmem:[#allocation2 + $0x4c] sm:$0x1] 0
      %v281 = vunpack.c.l.b16 %v245
      %v282 = vunpack.c.l.b16 %v246
      %v283 = vunpack.c.l.b16 %v247
      %v284 = vunpack.c.l.b16 %v248
      %v285 = vunpack.c.l.b16 %v249
      %v286 = vunpack.c.l.b16 %v250
      %v287 = vunpack.c.l.b16 %v251
      %v288 = vunpack.c.l.b16 %v252
      %v289 = vpack.c.b16 %v281, %v281
      %v290 = vpack.c.b16 %v282, %v282
      %v291 = vpack.c.b16 %v283, %v283
      %v292 = vpack.c.b16 %v284, %v284
      %v293 = vpack.c.b16 %v285, %v285
      %v294 = vpack.c.b16 %v286, %v286
      %v295 = vpack.c.b16 %v287, %v287
      %v296 = vpack.c.b16 %v288, %v288
      %v298 = vshrl.u32 %v289, 16
      %v300 = vrot.slane %v298, 7
      %v301 = vshll.u32 %v289, 16
      %v303 = vor.u32 %v300, %v301
      %v304 = vrot.slane %v300, 4
      %v306 = vshrl.u32 %v290, 16
      %v308 = vrot.slane %v306, 7
      %v309 = vshll.u32 %v290, 16
      %v311 = vor.u32 %v308, %v309
      %v312 = vrot.slane %v308, 4
      %v314 = vshrl.u32 %v291, 16
      %v316 = vrot.slane %v314, 7
      %v317 = vshll.u32 %v291, 16
      %v319 = vor.u32 %v316, %v317
      %v320 = vrot.slane %v316, 4
      %v322 = vshrl.u32 %v292, 16
      %v324 = vrot.slane %v322, 7
      %v325 = vshll.u32 %v292, 16
      %v327 = vor.u32 %v324, %v325
      %v328 = vrot.slane %v324, 4
      %v330 = vshrl.u32 %v293, 16
      %v332 = vrot.slane %v330, 7
      %v333 = vshll.u32 %v293, 16
      %v335 = vor.u32 %v332, %v333
      %v336 = vrot.slane %v332, 4
      %v338 = vshrl.u32 %v294, 16
      %v340 = vrot.slane %v338, 7
      %v341 = vshll.u32 %v294, 16
      %v343 = vor.u32 %v340, %v341
      %v344 = vrot.slane %v340, 4
      %v346 = vshrl.u32 %v295, 16
      %v348 = vrot.slane %v346, 7
      %v349 = vshll.u32 %v295, 16
      %v351 = vor.u32 %v348, %v349
      %v352 = vrot.slane %v348, 4
      %v354 = vshrl.u32 %v296, 16
      %v356 = vrot.slane %v354, 7
      %v357 = vshll.u32 %v296, 16
      %v359 = vor.u32 %v356, %v357
      %v360 = vrot.slane %v356, 4
      %s377 = scalar_lea.vmem [#allocation2], 8
      %vm378 = vcmask 1043456
      %vm379 = vsmask.f32 7938
      %vm380 = vmand %vm378, %vm379
      %v381 = vld [vmem:[%s377] sm:$0xf]
      %v382 = vsel %vm380, %v303, %v381
      %383 = vst [vmem:[%s377] sm:$0xf] %v382
      %vm384 = vcmask 1040384
      %vm385 = vsmask.f32 256
      %vm386 = vmand %vm384, %vm385
      %v387 = vld [vmem:[%s377 + $0x4] sm:$0x1]
      %v388 = vsel %vm386, %v304, %v387
      %389 = vst [vmem:[%s377 + $0x4] sm:$0x1] %v388
      %v390 = vld [vmem:[%s377 + $0x8] sm:$0xf]
      %v391 = vsel %vm380, %v311, %v390
      %392 = vst [vmem:[%s377 + $0x8] sm:$0xf] %v391
      %v393 = vld [vmem:[%s377 + $0xc] sm:$0x1]
      %v394 = vsel %vm386, %v312, %v393
      %395 = vst [vmem:[%s377 + $0xc] sm:$0x1] %v394
      %v396 = vld [vmem:[%s377 + $0x10] sm:$0xf]
      %v397 = vsel %vm380, %v319, %v396
      %398 = vst [vmem:[%s377 + $0x10] sm:$0xf] %v397
      %v399 = vld [vmem:[%s377 + $0x14] sm:$0x1]
      %v400 = vsel %vm386, %v320, %v399
      %401 = vst [vmem:[%s377 + $0x14] sm:$0x1] %v400
      %v402 = vld [vmem:[%s377 + $0x18] sm:$0xf]
      %v403 = vsel %vm380, %v327, %v402
      %404 = vst [vmem:[%s377 + $0x18] sm:$0xf] %v403
      %v405 = vld [vmem:[%s377 + $0x1c] sm:$0x1]
      %v406 = vsel %vm386, %v328, %v405
      %407 = vst [vmem:[%s377 + $0x1c] sm:$0x1] %v406
      %v408 = vld [vmem:[%s377 + $0x20] sm:$0xf]
      %v409 = vsel %vm380, %v335, %v408
      %410 = vst [vmem:[%s377 + $0x20] sm:$0xf] %v409
      %v411 = vld [vmem:[%s377 + $0x24] sm:$0x1]
      %v412 = vsel %vm386, %v336, %v411
      %413 = vst [vmem:[%s377 + $0x24] sm:$0x1] %v412
      %v414 = vld [vmem:[%s377 + $0x28] sm:$0xf]
      %v415 = vsel %vm380, %v343, %v414
      %416 = vst [vmem:[%s377 + $0x28] sm:$0xf] %v415
      %v417 = vld [vmem:[%s377 + $0x2c] sm:$0x1]
      %v418 = vsel %vm386, %v344, %v417
      %419 = vst [vmem:[%s377 + $0x2c] sm:$0x1] %v418
      %v420 = vld [vmem:[%s377 + $0x30] sm:$0xf]
      %v421 = vsel %vm380, %v351, %v420
      %422 = vst [vmem:[%s377 + $0x30] sm:$0xf] %v421
      %v423 = vld [vmem:[%s377 + $0x34] sm:$0x1]
      %v424 = vsel %vm386, %v352, %v423
      %425 = vst [vmem:[%s377 + $0x34] sm:$0x1] %v424
      %v426 = vld [vmem:[%s377 + $0x38] sm:$0xf]
      %v427 = vsel %vm380, %v359, %v426
      %428 = vst [vmem:[%s377 + $0x38] sm:$0xf] %v427
      %v429 = vld [vmem:[%s377 + $0x3c] sm:$0x1]
      %v430 = vsel %vm386, %v360, %v429
      %431 = vst [vmem:[%s377 + $0x3c] sm:$0x1] %v430
      %v432 = vld [vmem:[#allocation2] sm:$0xf]
      %v433 = vld [vmem:[#allocation2 + $0x8] sm:$0xf]
      %v434 = vld [vmem:[#allocation2 + $0x10] sm:$0xf]
      %v435 = vld [vmem:[#allocation2 + $0x18] sm:$0xf]
      %v436 = vld [vmem:[#allocation2 + $0x20] sm:$0xf]
      %v437 = vld [vmem:[#allocation2 + $0x28] sm:$0xf]
      %v438 = vld [vmem:[#allocation2 + $0x30] sm:$0xf]
      %v439 = vld [vmem:[#allocation2 + $0x38] sm:$0xf]
      %v440 = vld [vmem:[#allocation2 + $0x4] sm:$0x1]
      %v441 = vld [vmem:[#allocation2 + $0xc] sm:$0x1]
      %v442 = vld [vmem:[#allocation2 + $0x14] sm:$0x1]
      %v443 = vld [vmem:[#allocation2 + $0x1c] sm:$0x1]
      %v444 = vld [vmem:[#allocation2 + $0x24] sm:$0x1]
      %v445 = vld [vmem:[#allocation2 + $0x2c] sm:$0x1]
      %v446 = vld [vmem:[#allocation2 + $0x34] sm:$0x1]
      %v447 = vld [vmem:[#allocation2 + $0x3c] sm:$0x1]
      %v448 = vld [vmem:[#allocation2] sm:$0xe]
      %v449 = vld [vmem:[#allocation2 + $0x8] sm:$0xe]
      %v450 = vld [vmem:[#allocation2 + $0x10] sm:$0xe]
      %v451 = vld [vmem:[#allocation2 + $0x18] sm:$0xe]
      %v452 = vld [vmem:[#allocation2 + $0x20] sm:$0xe]
      %v453 = vld [vmem:[#allocation2 + $0x28] sm:$0xe]
      %v454 = vld [vmem:[#allocation2 + $0x30] sm:$0xe]
      %v455 = vld [vmem:[#allocation2 + $0x38] sm:$0xe]
      %v456 = vld [vmem:[%s377] sm:$0xf]
      %v457 = vld [vmem:[%s377 + $0x8] sm:$0xf]
      %v458 = vld [vmem:[%s377 + $0x10] sm:$0xf]
      %v459 = vld [vmem:[%s377 + $0x18] sm:$0xf]
      %v460 = vld [vmem:[%s377 + $0x20] sm:$0xf]
      %v461 = vld [vmem:[%s377 + $0x28] sm:$0xf]
      %v462 = vld [vmem:[%s377 + $0x30] sm:$0xf]
      %v463 = vld [vmem:[%s377 + $0x38] sm:$0xf]
      %v464 = vld [vmem:[%s377 + $0x4] sm:$0x1]
      %v465 = vld [vmem:[%s377 + $0xc] sm:$0x1]
      %v466 = vld [vmem:[%s377 + $0x14] sm:$0x1]
      %v467 = vld [vmem:[%s377 + $0x1c] sm:$0x1]
      %v468 = vld [vmem:[%s377 + $0x24] sm:$0x1]
      %v469 = vld [vmem:[%s377 + $0x2c] sm:$0x1]
      %v470 = vld [vmem:[%s377 + $0x34] sm:$0x1]
      %v471 = vld [vmem:[%s377 + $0x3c] sm:$0x1]
      %v472 = vld [vmem:[%s377] sm:$0xe]
      %v473 = vld [vmem:[%s377 + $0x8] sm:$0xe]
      %v474 = vld [vmem:[%s377 + $0x10] sm:$0xe]
      %v475 = vld [vmem:[%s377 + $0x18] sm:$0xe]
      %v476 = vld [vmem:[%s377 + $0x20] sm:$0xe]
      %v477 = vld [vmem:[%s377 + $0x28] sm:$0xe]
      %v478 = vld [vmem:[%s377 + $0x30] sm:$0xe]
      %v479 = vld [vmem:[%s377 + $0x38] sm:$0xe]
      %s480 = scalar_lea.vmem [#allocation2], 16
      %v481 = vld [vmem:[%s480] sm:$0xf]
      %v482 = vld [vmem:[%s480 + $0x8] sm:$0xf]
      %v483 = vld [vmem:[%s480 + $0x10] sm:$0xf]
      %v484 = vld [vmem:[%s480 + $0x18] sm:$0xf]
      %v485 = vld [vmem:[%s480 + $0x20] sm:$0xf]
      %v486 = vld [vmem:[%s480 + $0x28] sm:$0xf]
      %v487 = vld [vmem:[%s480 + $0x30] sm:$0xf]
      %v488 = vld [vmem:[%s480 + $0x38] sm:$0xf]
      %v489 = vld [vmem:[%s480 + $0x4] sm:$0x1]
      %v490 = vld [vmem:[%s480 + $0xc] sm:$0x1]
      %v491 = vld [vmem:[%s480 + $0x14] sm:$0x1]
      %v492 = vld [vmem:[%s480 + $0x1c] sm:$0x1]
      %v493 = vld [vmem:[%s480 + $0x24] sm:$0x1]
      %v494 = vld [vmem:[%s480 + $0x2c] sm:$0x1]
      %v495 = vld [vmem:[%s480 + $0x34] sm:$0x1]
      %v496 = vld [vmem:[%s480 + $0x3c] sm:$0x1]
      %v497 = vld [vmem:[%s480] sm:$0xe]
      %v498 = vld [vmem:[%s480 + $0x8] sm:$0xe]
      %v499 = vld [vmem:[%s480 + $0x10] sm:$0xe]
      %v500 = vld [vmem:[%s480 + $0x18] sm:$0xe]
      %v501 = vld [vmem:[%s480 + $0x20] sm:$0xe]
      %v502 = vld [vmem:[%s480 + $0x28] sm:$0xe]
      %v503 = vld [vmem:[%s480 + $0x30] sm:$0xe]
      %v504 = vld [vmem:[%s480 + $0x38] sm:$0xe]
      %v521 = vunpack.c.l.b16 %v432
      %v522 = vunpack.c.l.b16 %v440
      %v523 = vunpack.c.l.b16 %v433
      %v524 = vunpack.c.l.b16 %v441
      %v525 = vunpack.c.l.b16 %v434
      %v526 = vunpack.c.l.b16 %v442
      %v527 = vunpack.c.l.b16 %v435
      %v528 = vunpack.c.l.b16 %v443
      %v529 = vunpack.c.l.b16 %v436
      %v530 = vunpack.c.l.b16 %v444
      %v531 = vunpack.c.l.b16 %v437
      %v532 = vunpack.c.l.b16 %v445
      %v533 = vunpack.c.l.b16 %v438
      %v534 = vunpack.c.l.b16 %v446
      %v535 = vunpack.c.l.b16 %v439
      %v536 = vunpack.c.l.b16 %v447
      %v537 = vpack.c.b16 %v522, %v521
      %v538 = vpack.c.b16 %v524, %v523
      %v539 = vpack.c.b16 %v526, %v525
      %v540 = vpack.c.b16 %v528, %v527
      %v541 = vpack.c.b16 %v530, %v529
      %v542 = vpack.c.b16 %v532, %v531
      %v543 = vpack.c.b16 %v534, %v533
      %v544 = vpack.c.b16 %v536, %v535
      %v546 = vshrl.u32 %v537, 16
      %v548 = vshll.u32 %v537, 16
      %v550 = vrot.slane %v548, 1
      %v551 = vor.u32 %v546, %v550
      %v553 = vshrl.u32 %v538, 16
      %v555 = vshll.u32 %v538, 16
      %v557 = vrot.slane %v555, 1
      %v558 = vor.u32 %v553, %v557
      %v560 = vshrl.u32 %v539, 16
      %v562 = vshll.u32 %v539, 16
      %v564 = vrot.slane %v562, 1
      %v565 = vor.u32 %v560, %v564
      %v567 = vshrl.u32 %v540, 16
      %v569 = vshll.u32 %v540, 16
      %v571 = vrot.slane %v569, 1
      %v572 = vor.u32 %v567, %v571
      %v574 = vshrl.u32 %v541, 16
      %v576 = vshll.u32 %v541, 16
      %v578 = vrot.slane %v576, 1
      %v579 = vor.u32 %v574, %v578
      %v581 = vshrl.u32 %v542, 16
      %v583 = vshll.u32 %v542, 16
      %v585 = vrot.slane %v583, 1
      %v586 = vor.u32 %v581, %v585
      %v588 = vshrl.u32 %v543, 16
      %v590 = vshll.u32 %v543, 16
      %v592 = vrot.slane %v590, 1
      %v593 = vor.u32 %v588, %v592
      %v595 = vshrl.u32 %v544, 16
      %v597 = vshll.u32 %v544, 16
      %v599 = vrot.slane %v597, 1
      %v600 = vor.u32 %v595, %v599
      %v609 = vunpack.c.l.b16 %v448
      %v610 = vunpack.c.l.b16 %v449
      %v611 = vunpack.c.l.b16 %v450
      %v612 = vunpack.c.l.b16 %v451
      %v613 = vunpack.c.l.b16 %v452
      %v614 = vunpack.c.l.b16 %v453
      %v615 = vunpack.c.l.b16 %v454
      %v616 = vunpack.c.l.b16 %v455
      %v617 = vpack.c.b16 %v522, %v609
      %v618 = vpack.c.b16 %v524, %v610
      %v619 = vpack.c.b16 %v526, %v611
      %v620 = vpack.c.b16 %v528, %v612
      %v621 = vpack.c.b16 %v530, %v613
      %v622 = vpack.c.b16 %v532, %v614
      %v623 = vpack.c.b16 %v534, %v615
      %v624 = vpack.c.b16 %v536, %v616
      %v625 = vrot.slane %v617, 1
      %v626 = vrot.slane %v618, 1
      %v627 = vrot.slane %v619, 1
      %v628 = vrot.slane %v620, 1
      %v629 = vrot.slane %v621, 1
      %v630 = vrot.slane %v622, 1
      %v631 = vrot.slane %v623, 1
      %v632 = vrot.slane %v624, 1
      %v649 = vunpack.c.l.b16 %v456
      %v650 = vunpack.c.l.b16 %v464
      %v651 = vunpack.c.l.b16 %v457
      %v652 = vunpack.c.l.b16 %v465
      %v653 = vunpack.c.l.b16 %v458
      %v654 = vunpack.c.l.b16 %v466
      %v655 = vunpack.c.l.b16 %v459
      %v656 = vunpack.c.l.b16 %v467
      %v657 = vunpack.c.l.b16 %v460
      %v658 = vunpack.c.l.b16 %v468
      %v659 = vunpack.c.l.b16 %v461
      %v660 = vunpack.c.l.b16 %v469
      %v661 = vunpack.c.l.b16 %v462
      %v662 = vunpack.c.l.b16 %v470
      %v663 = vunpack.c.l.b16 %v463
      %v664 = vunpack.c.l.b16 %v471
      %v665 = vpack.c.b16 %v650, %v649
      %v666 = vpack.c.b16 %v652, %v651
      %v667 = vpack.c.b16 %v654, %v653
      %v668 = vpack.c.b16 %v656, %v655
      %v669 = vpack.c.b16 %v658, %v657
      %v670 = vpack.c.b16 %v660, %v659
      %v671 = vpack.c.b16 %v662, %v661
      %v672 = vpack.c.b16 %v664, %v663
      %v674 = vshrl.u32 %v665, 16
      %v676 = vshll.u32 %v665, 16
      %v678 = vrot.slane %v676, 1
      %v679 = vor.u32 %v674, %v678
      %v681 = vshrl.u32 %v666, 16
      %v683 = vshll.u32 %v666, 16
      %v685 = vrot.slane %v683, 1
      %v686 = vor.u32 %v681, %v685
      %v688 = vshrl.u32 %v667, 16
      %v690 = vshll.u32 %v667, 16
      %v692 = vrot.slane %v690, 1
      %v693 = vor.u32 %v688, %v692
      %v695 = vshrl.u32 %v668, 16
      %v697 = vshll.u32 %v668, 16
      %v699 = vrot.slane %v697, 1
      %v700 = vor.u32 %v695, %v699
      %v702 = vshrl.u32 %v669, 16
      %v704 = vshll.u32 %v669, 16
      %v706 = vrot.slane %v704, 1
      %v707 = vor.u32 %v702, %v706
      %v709 = vshrl.u32 %v670, 16
      %v711 = vshll.u32 %v670, 16
      %v713 = vrot.slane %v711, 1
      %v714 = vor.u32 %v709, %v713
      %v716 = vshrl.u32 %v671, 16
      %v718 = vshll.u32 %v671, 16
      %v720 = vrot.slane %v718, 1
      %v721 = vor.u32 %v716, %v720
      %v723 = vshrl.u32 %v672, 16
      %v725 = vshll.u32 %v672, 16
      %v727 = vrot.slane %v725, 1
      %v728 = vor.u32 %v723, %v727
      %v737 = vunpack.c.l.b16 %v472
      %v738 = vunpack.c.l.b16 %v473
      %v739 = vunpack.c.l.b16 %v474
      %v740 = vunpack.c.l.b16 %v475
      %v741 = vunpack.c.l.b16 %v476
      %v742 = vunpack.c.l.b16 %v477
      %v743 = vunpack.c.l.b16 %v478
      %v744 = vunpack.c.l.b16 %v479
      %v745 = vpack.c.b16 %v650, %v737
      %v746 = vpack.c.b16 %v652, %v738
      %v747 = vpack.c.b16 %v654, %v739
      %v748 = vpack.c.b16 %v656, %v740
      %v749 = vpack.c.b16 %v658, %v741
      %v750 = vpack.c.b16 %v660, %v742
      %v751 = vpack.c.b16 %v662, %v743
      %v752 = vpack.c.b16 %v664, %v744
      %v753 = vrot.slane %v745, 1
      %v754 = vrot.slane %v746, 1
      %v755 = vrot.slane %v747, 1
      %v756 = vrot.slane %v748, 1
      %v757 = vrot.slane %v749, 1
      %v758 = vrot.slane %v750, 1
      %v759 = vrot.slane %v751, 1
      %v760 = vrot.slane %v752, 1
      %v777 = vunpack.c.l.b16 %v481
      %v778 = vunpack.c.l.b16 %v489
      %v779 = vunpack.c.l.b16 %v482
      %v780 = vunpack.c.l.b16 %v490
      %v781 = vunpack.c.l.b16 %v483
      %v782 = vunpack.c.l.b16 %v491
      %v783 = vunpack.c.l.b16 %v484
      %v784 = vunpack.c.l.b16 %v492
      %v785 = vunpack.c.l.b16 %v485
      %v786 = vunpack.c.l.b16 %v493
      %v787 = vunpack.c.l.b16 %v486
      %v788 = vunpack.c.l.b16 %v494
      %v789 = vunpack.c.l.b16 %v487
      %v790 = vunpack.c.l.b16 %v495
      %v791 = vunpack.c.l.b16 %v488
      %v792 = vunpack.c.l.b16 %v496
      %v793 = vpack.c.b16 %v778, %v777
      %v794 = vpack.c.b16 %v780, %v779
      %v795 = vpack.c.b16 %v782, %v781
      %v796 = vpack.c.b16 %v784, %v783
      %v797 = vpack.c.b16 %v786, %v785
      %v798 = vpack.c.b16 %v788, %v787
      %v799 = vpack.c.b16 %v790, %v789
      %v800 = vpack.c.b16 %v792, %v791
      %v802 = vshrl.u32 %v793, 16
      %v804 = vshll.u32 %v793, 16
      %v806 = vrot.slane %v804, 1
      %v807 = vor.u32 %v802, %v806
      %v809 = vshrl.u32 %v794, 16
      %v811 = vshll.u32 %v794, 16
      %v813 = vrot.slane %v811, 1
      %v814 = vor.u32 %v809, %v813
      %v816 = vshrl.u32 %v795, 16
      %v818 = vshll.u32 %v795, 16
      %v820 = vrot.slane %v818, 1
      %v821 = vor.u32 %v816, %v820
      %v823 = vshrl.u32 %v796, 16
      %v825 = vshll.u32 %v796, 16
      %v827 = vrot.slane %v825, 1
      %v828 = vor.u32 %v823, %v827
      %v830 = vshrl.u32 %v797, 16
      %v832 = vshll.u32 %v797, 16
      %v834 = vrot.slane %v832, 1
      %v835 = vor.u32 %v830, %v834
      %v837 = vshrl.u32 %v798, 16
      %v839 = vshll.u32 %v798, 16
      %v841 = vrot.slane %v839, 1
      %v842 = vor.u32 %v837, %v841
      %v844 = vshrl.u32 %v799, 16
      %v846 = vshll.u32 %v799, 16
      %v848 = vrot.slane %v846, 1
      %v849 = vor.u32 %v844, %v848
      %v851 = vshrl.u32 %v800, 16
      %v853 = vshll.u32 %v800, 16
      %v855 = vrot.slane %v853, 1
      %v856 = vor.u32 %v851, %v855
      %v865 = vunpack.c.l.b16 %v497
      %v866 = vunpack.c.l.b16 %v498
      %v867 = vunpack.c.l.b16 %v499
      %v868 = vunpack.c.l.b16 %v500
      %v869 = vunpack.c.l.b16 %v501
      %v870 = vunpack.c.l.b16 %v502
      %v871 = vunpack.c.l.b16 %v503
      %v872 = vunpack.c.l.b16 %v504
      %v873 = vpack.c.b16 %v778, %v865
      %v874 = vpack.c.b16 %v780, %v866
      %v875 = vpack.c.b16 %v782, %v867
      %v876 = vpack.c.b16 %v784, %v868
      %v877 = vpack.c.b16 %v786, %v869
      %v878 = vpack.c.b16 %v788, %v870
      %v879 = vpack.c.b16 %v790, %v871
      %v880 = vpack.c.b16 %v792, %v872
      %v881 = vrot.slane %v873, 1
      %v882 = vrot.slane %v874, 1
      %v883 = vrot.slane %v875, 1
      %v884 = vrot.slane %v876, 1
      %v885 = vrot.slane %v877, 1
      %v886 = vrot.slane %v878, 1
      %v887 = vrot.slane %v879, 1
      %v888 = vrot.slane %v880, 1
      %v889 = vunpack.c.l.b16 %v551
      %v890 = vunpack.c.l.b16 %v625
      %v891 = vunpack.c.l.b16 %v679
      %v892 = vunpack.c.l.b16 %v753
      %v893 = vunpack.c.l.b16 %v807
      %v894 = vunpack.c.l.b16 %v881
      %v895 = vunpack.c.l.b16 %v558
      %v896 = vunpack.c.l.b16 %v626
      %v897 = vunpack.c.l.b16 %v686
      %v898 = vunpack.c.l.b16 %v754
      %v899 = vunpack.c.l.b16 %v814
      %v900 = vunpack.c.l.b16 %v882
      %v901 = vunpack.c.l.b16 %v565
      %v902 = vunpack.c.l.b16 %v627
      %v903 = vunpack.c.l.b16 %v693
      %v904 = vunpack.c.l.b16 %v755
      %v905 = vunpack.c.l.b16 %v821
      %v906 = vunpack.c.l.b16 %v883
      %v907 = vunpack.c.l.b16 %v572
      %v908 = vunpack.c.l.b16 %v628
      %v909 = vunpack.c.l.b16 %v700
      %v910 = vunpack.c.l.b16 %v756
      %v911 = vunpack.c.l.b16 %v828
      %v912 = vunpack.c.l.b16 %v884
      %v913 = vunpack.c.l.b16 %v579
      %v914 = vunpack.c.l.b16 %v629
      %v915 = vunpack.c.l.b16 %v707
      %v916 = vunpack.c.l.b16 %v757
      %v917 = vunpack.c.l.b16 %v835
      %v918 = vunpack.c.l.b16 %v885
      %v919 = vunpack.c.l.b16 %v586
      %v920 = vunpack.c.l.b16 %v630
      %v921 = vunpack.c.l.b16 %v714
      %v922 = vunpack.c.l.b16 %v758
      %v923 = vunpack.c.l.b16 %v842
      %v924 = vunpack.c.l.b16 %v886
      %v925 = vunpack.c.l.b16 %v593
      %v926 = vunpack.c.l.b16 %v631
      %v927 = vunpack.c.l.b16 %v721
      %v928 = vunpack.c.l.b16 %v759
      %v929 = vunpack.c.l.b16 %v849
      %v930 = vunpack.c.l.b16 %v887
      %v931 = vunpack.c.l.b16 %v600
      %v932 = vunpack.c.l.b16 %v632
      %v933 = vunpack.c.l.b16 %v728
      %v934 = vunpack.c.l.b16 %v760
      %v935 = vunpack.c.l.b16 %v856
      %v936 = vunpack.c.l.b16 %v888
      %v937 = vld [vmem:[%s3] sm:$0xf]
      %v938 = vld [vmem:[%s3 + $0x4] sm:$0xf]
      %v939 = vld [vmem:[%s3 + $0x8] sm:$0xf]
      %v940 = vld [vmem:[%s3 + $0xc] sm:$0xf]
      %v941 = vld [vmem:[%s3 + $0x10] sm:$0xf]
      %v942 = vld [vmem:[%s3 + $0x14] sm:$0xf]
      %v943 = vld [vmem:[%s3 + $0x18] sm:$0xf]
      %v944 = vld [vmem:[%s3 + $0x1c] sm:$0xf]
      %v945 = vld [vmem:[%s3 + $0x20] sm:$0xf]
      %v946 = vld [vmem:[%s3 + $0x24] sm:$0xf]
      %v947 = vld [vmem:[%s3 + $0x28] sm:$0xf]
      %v948 = vld [vmem:[%s3 + $0x2c] sm:$0xf]
      %v949 = vld [vmem:[%s3 + $0x30] sm:$0xf]
      %v950 = vld [vmem:[%s3 + $0x34] sm:$0xf]
      %v951 = vld [vmem:[%s3 + $0x38] sm:$0xf]
      %v952 = vld [vmem:[%s3 + $0x3c] sm:$0xf]
      %v953 = vld [vmem:[%s3 + $0x40] sm:$0xf]
      %v954 = vld [vmem:[%s3 + $0x44] sm:$0xf]
      %v955 = vld [vmem:[%s3 + $0x48] sm:$0xf]
      %v956 = vld [vmem:[%s3 + $0x4c] sm:$0xf]
      %v957 = vld [vmem:[%s3 + $0x50] sm:$0xf]
      %v958 = vld [vmem:[%s3 + $0x54] sm:$0xf]
      %v959 = vld [vmem:[%s3 + $0x58] sm:$0xf]
      %v960 = vld [vmem:[%s3 + $0x5c] sm:$0xf]
      %v961 = vld [vmem:[%s3 + $0x60] sm:$0xf]
      %v962 = vld [vmem:[%s3 + $0x64] sm:$0xf]
      %v963 = vld [vmem:[%s3 + $0x68] sm:$0xf]
      %v964 = vld [vmem:[%s3 + $0x6c] sm:$0xf]
      %v965 = vld [vmem:[%s3 + $0x70] sm:$0xf]
      %v966 = vld [vmem:[%s3 + $0x74] sm:$0xf]
      %v967 = vld [vmem:[%s3 + $0x78] sm:$0xf]
      %v968 = vld [vmem:[%s3 + $0x7c] sm:$0xf]
      %v969 = vld [vmem:[%s3 + $0x80] sm:$0xf]
      %v970 = vld [vmem:[%s3 + $0x84] sm:$0xf]
      %v971 = vld [vmem:[%s3 + $0x88] sm:$0xf]
      %v972 = vld [vmem:[%s3 + $0x8c] sm:$0xf]
      %v973 = vld [vmem:[%s3 + $0x90] sm:$0xf]
      %v974 = vld [vmem:[%s3 + $0x94] sm:$0xf]
      %v975 = vld [vmem:[%s3 + $0x98] sm:$0xf]
      %v976 = vld [vmem:[%s3 + $0x9c] sm:$0xf]
      %v977 = vld [vmem:[%s3 + $0xa0] sm:$0xf]
      %v978 = vld [vmem:[%s3 + $0xa4] sm:$0xf]
      %v979 = vld [vmem:[%s3 + $0xa8] sm:$0xf]
      %v980 = vld [vmem:[%s3 + $0xac] sm:$0xf]
      %v981 = vld [vmem:[%s3 + $0xb0] sm:$0xf]
      %v982 = vld [vmem:[%s3 + $0xb4] sm:$0xf]
      %v983 = vld [vmem:[%s3 + $0xb8] sm:$0xf]
      %v984 = vld [vmem:[%s3 + $0xbc] sm:$0xf]
      %v985 = vld [vmem:[%s3 + $0xc0] sm:$0xf]
      %v986 = vld [vmem:[%s3 + $0xc4] sm:$0xf]
      %v987 = vld [vmem:[%s3 + $0xc8] sm:$0xf]
      %v988 = vld [vmem:[%s3 + $0xcc] sm:$0xf]
      %v989 = vld [vmem:[%s3 + $0xd0] sm:$0xf]
      %v990 = vld [vmem:[%s3 + $0xd4] sm:$0xf]
      %v991 = vld [vmem:[%s3 + $0xd8] sm:$0xf]
      %v992 = vld [vmem:[%s3 + $0xdc] sm:$0xf]
      %v993 = vld [vmem:[%s3 + $0xe0] sm:$0xf]
      %v994 = vld [vmem:[%s3 + $0xe4] sm:$0xf]
      %v995 = vld [vmem:[%s3 + $0xe8] sm:$0xf]
      %v996 = vld [vmem:[%s3 + $0xec] sm:$0xf]
      %v997 = vld [vmem:[%s3 + $0xf0] sm:$0xf]
      %v998 = vld [vmem:[%s3 + $0xf4] sm:$0xf]
      %v999 = vld [vmem:[%s3 + $0xf8] sm:$0xf]
      %v1000 = vld [vmem:[%s3 + $0xfc] sm:$0xf]
      %v1001 = vld [vmem:[%s3 + $0x100] sm:$0xf]
      %v1002 = vld [vmem:[%s3 + $0x104] sm:$0xf]
      %v1003 = vld [vmem:[%s3 + $0x108] sm:$0xf]
      %v1004 = vld [vmem:[%s3 + $0x10c] sm:$0xf]
      %v1005 = vld [vmem:[%s3 + $0x110] sm:$0xf]
      %v1006 = vld [vmem:[%s3 + $0x114] sm:$0xf]
      %v1007 = vld [vmem:[%s3 + $0x118] sm:$0xf]
      %v1008 = vld [vmem:[%s3 + $0x11c] sm:$0xf]
      %v1009 = vld [vmem:[%s3 + $0x120] sm:$0xf]
      %v1010 = vld [vmem:[%s3 + $0x124] sm:$0xf]
      %v1011 = vld [vmem:[%s3 + $0x128] sm:$0xf]
      %v1012 = vld [vmem:[%s3 + $0x12c] sm:$0xf]
      %v1013 = vld [vmem:[%s3 + $0x130] sm:$0xf]
      %v1014 = vld [vmem:[%s3 + $0x134] sm:$0xf]
      %v1015 = vld [vmem:[%s3 + $0x138] sm:$0xf]
      %v1016 = vld [vmem:[%s3 + $0x13c] sm:$0xf]
      %v1017 = vld [vmem:[%s3 + $0x140] sm:$0xf]
      %v1018 = vld [vmem:[%s3 + $0x144] sm:$0xf]
      %v1019 = vld [vmem:[%s3 + $0x148] sm:$0xf]
      %v1020 = vld [vmem:[%s3 + $0x14c] sm:$0xf]
      %v1021 = vld [vmem:[%s3 + $0x150] sm:$0xf]
      %v1022 = vld [vmem:[%s3 + $0x154] sm:$0xf]
      %v1023 = vld [vmem:[%s3 + $0x158] sm:$0xf]
      %v1024 = vld [vmem:[%s3 + $0x15c] sm:$0xf]
      %v1025 = vld [vmem:[%s3 + $0x160] sm:$0xf]
      %v1026 = vld [vmem:[%s3 + $0x164] sm:$0xf]
      %v1027 = vld [vmem:[%s3 + $0x168] sm:$0xf]
      %v1028 = vld [vmem:[%s3 + $0x16c] sm:$0xf]
      %v1029 = vld [vmem:[%s3 + $0x170] sm:$0xf]
      %v1030 = vld [vmem:[%s3 + $0x174] sm:$0xf]
      %v1031 = vld [vmem:[%s3 + $0x178] sm:$0xf]
      %v1032 = vld [vmem:[%s3 + $0x17c] sm:$0xf]
      %v1033 = vld [vmem:[%s3 + $0x180] sm:$0xf]
      %v1034 = vld [vmem:[%s3 + $0x184] sm:$0xf]
      %v1035 = vld [vmem:[%s3 + $0x188] sm:$0xf]
      %v1036 = vld [vmem:[%s3 + $0x18c] sm:$0xf]
      %v1037 = vld [vmem:[%s3 + $0x190] sm:$0xf]
      %v1038 = vld [vmem:[%s3 + $0x194] sm:$0xf]
      %v1039 = vld [vmem:[%s3 + $0x198] sm:$0xf]
      %v1040 = vld [vmem:[%s3 + $0x19c] sm:$0xf]
      %v1041 = vld [vmem:[%s3 + $0x1a0] sm:$0xf]
      %v1042 = vld [vmem:[%s3 + $0x1a4] sm:$0xf]
      %v1043 = vld [vmem:[%s3 + $0x1a8] sm:$0xf]
      %v1044 = vld [vmem:[%s3 + $0x1ac] sm:$0xf]
      %v1045 = vld [vmem:[%s3 + $0x1b0] sm:$0xf]
      %v1046 = vld [vmem:[%s3 + $0x1b4] sm:$0xf]
      %v1047 = vld [vmem:[%s3 + $0x1b8] sm:$0xf]
      %v1048 = vld [vmem:[%s3 + $0x1bc] sm:$0xf]
      %v1049 = vld [vmem:[%s3 + $0x1c0] sm:$0xf]
      %v1050 = vld [vmem:[%s3 + $0x1c4] sm:$0xf]
      %v1051 = vld [vmem:[%s3 + $0x1c8] sm:$0xf]
      %v1052 = vld [vmem:[%s3 + $0x1cc] sm:$0xf]
      %v1053 = vld [vmem:[%s3 + $0x1d0] sm:$0xf]
      %v1054 = vld [vmem:[%s3 + $0x1d4] sm:$0xf]
      %v1055 = vld [vmem:[%s3 + $0x1d8] sm:$0xf]
      %v1056 = vld [vmem:[%s3 + $0x1dc] sm:$0xf]
      %v1057 = vld [vmem:[%s3 + $0x1e0] sm:$0xf]
      %v1058 = vld [vmem:[%s3 + $0x1e4] sm:$0xf]
      %v1059 = vld [vmem:[%s3 + $0x1e8] sm:$0xf]
      %v1060 = vld [vmem:[%s3 + $0x1ec] sm:$0xf]
      %v1061 = vld [vmem:[%s3 + $0x1f0] sm:$0xf]
      %v1062 = vld [vmem:[%s3 + $0x1f4] sm:$0xf]
      %v1063 = vld [vmem:[%s3 + $0x1f8] sm:$0xf]
      %v1064 = vld [vmem:[%s3 + $0x1fc] sm:$0xf]
      %v1065 = vld [vmem:[%s3 + $0x200] sm:$0xf]
      %v1066 = vld [vmem:[%s3 + $0x204] sm:$0xf]
      %v1067 = vld [vmem:[%s3 + $0x208] sm:$0xf]
      %v1068 = vld [vmem:[%s3 + $0x20c] sm:$0xf]
      %v1069 = vld [vmem:[%s3 + $0x210] sm:$0xf]
      %v1070 = vld [vmem:[%s3 + $0x214] sm:$0xf]
      %v1071 = vld [vmem:[%s3 + $0x218] sm:$0xf]
      %v1072 = vld [vmem:[%s3 + $0x21c] sm:$0xf]
      %v1073 = vld [vmem:[%s3 + $0x220] sm:$0xf]
      %v1074 = vld [vmem:[%s3 + $0x224] sm:$0xf]
      %v1075 = vld [vmem:[%s3 + $0x228] sm:$0xf]
      %v1076 = vld [vmem:[%s3 + $0x22c] sm:$0xf]
      %v1077 = vld [vmem:[%s3 + $0x230] sm:$0xf]
      %v1078 = vld [vmem:[%s3 + $0x234] sm:$0xf]
      %v1079 = vld [vmem:[%s3 + $0x238] sm:$0xf]
      %v1080 = vld [vmem:[%s3 + $0x23c] sm:$0xf]
      %v1081 = vpack.c.b16 %v523, %v521
      %v1082 = vpack.c.b16 %v895, %v889
      %v1083 = vpack.c.b16 %v896, %v890
      %v1084 = vpack.c.b16 %v651, %v649
      %v1085 = vpack.c.b16 %v897, %v891
      %v1086 = vpack.c.b16 %v898, %v892
      %v1087 = vpack.c.b16 %v779, %v777
      %v1088 = vpack.c.b16 %v899, %v893
      %v1089 = vpack.c.b16 %v900, %v894
      %v1090 = vpack.c.b16 %v527, %v525
      %v1091 = vpack.c.b16 %v907, %v901
      %v1092 = vpack.c.b16 %v908, %v902
      %v1093 = vpack.c.b16 %v655, %v653
      %v1094 = vpack.c.b16 %v909, %v903
      %v1095 = vpack.c.b16 %v910, %v904
      %v1096 = vpack.c.b16 %v783, %v781
      %v1097 = vpack.c.b16 %v911, %v905
      %v1098 = vpack.c.b16 %v912, %v906
      %v1099 = vpack.c.b16 %v531, %v529
      %v1100 = vpack.c.b16 %v919, %v913
      %v1101 = vpack.c.b16 %v920, %v914
      %v1102 = vpack.c.b16 %v659, %v657
      %v1103 = vpack.c.b16 %v921, %v915
      %v1104 = vpack.c.b16 %v922, %v916
      %v1105 = vpack.c.b16 %v787, %v785
      %v1106 = vpack.c.b16 %v923, %v917
      %v1107 = vpack.c.b16 %v924, %v918
      %v1108 = vpack.c.b16 %v535, %v533
      %v1109 = vpack.c.b16 %v931, %v925
      %v1110 = vpack.c.b16 %v932, %v926
      %v1111 = vpack.c.b16 %v663, %v661
      %v1112 = vpack.c.b16 %v933, %v927
      %v1113 = vpack.c.b16 %v934, %v928
      %v1114 = vpack.c.b16 %v791, %v789
      %v1115 = vpack.c.b16 %v935, %v929
      %v1116 = vpack.c.b16 %v936, %v930
      %v1297 = vunpack.c.l.b16 %v937
      %v1298 = vunpack.c.l.b16 %v938
      %v1299 = vunpack.c.l.b16 %v939
      %v1300 = vunpack.c.l.b16 %v940
      %v1301 = vunpack.c.l.b16 %v941
      %v1302 = vunpack.c.l.b16 %v942
      %v1303 = vunpack.c.l.b16 %v943
      %v1304 = vunpack.c.l.b16 %v944
      %v1305 = vunpack.c.l.b16 %v945
      %v1306 = vunpack.c.l.b16 %v946
      %v1307 = vunpack.c.l.b16 %v947
      %v1308 = vunpack.c.l.b16 %v948
      %v1309 = vunpack.c.l.b16 %v949
      %v1310 = vunpack.c.l.b16 %v950
      %v1311 = vunpack.c.l.b16 %v951
      %v1312 = vunpack.c.l.b16 %v952
      %v1313 = vunpack.c.l.b16 %v953
      %v1314 = vunpack.c.l.b16 %v954
      %v1315 = vunpack.c.l.b16 %v955
      %v1316 = vunpack.c.l.b16 %v956
      %v1317 = vunpack.c.l.b16 %v957
      %v1318 = vunpack.c.l.b16 %v958
      %v1319 = vunpack.c.l.b16 %v959
      %v1320 = vunpack.c.l.b16 %v960
      %v1321 = vunpack.c.l.b16 %v961
      %v1322 = vunpack.c.l.b16 %v962
      %v1323 = vunpack.c.l.b16 %v963
      %v1324 = vunpack.c.l.b16 %v964
      %v1325 = vunpack.c.l.b16 %v965
      %v1326 = vunpack.c.l.b16 %v966
      %v1327 = vunpack.c.l.b16 %v967
      %v1328 = vunpack.c.l.b16 %v968
      %v1329 = vunpack.c.l.b16 %v969
      %v1330 = vunpack.c.l.b16 %v970
      %v1331 = vunpack.c.l.b16 %v971
      %v1332 = vunpack.c.l.b16 %v972
      %v1333 = vunpack.c.l.b16 %v973
      %v1334 = vunpack.c.l.b16 %v974
      %v1335 = vunpack.c.l.b16 %v975
      %v1336 = vunpack.c.l.b16 %v976
      %v1337 = vunpack.c.l.b16 %v977
      %v1338 = vunpack.c.l.b16 %v978
      %v1339 = vunpack.c.l.b16 %v979
      %v1340 = vunpack.c.l.b16 %v980
      %v1341 = vunpack.c.l.b16 %v981
      %v1342 = vunpack.c.l.b16 %v982
      %v1343 = vunpack.c.l.b16 %v983
      %v1344 = vunpack.c.l.b16 %v984
      %v1345 = vunpack.c.l.b16 %v985
      %v1346 = vunpack.c.l.b16 %v986
      %v1347 = vunpack.c.l.b16 %v987
      %v1348 = vunpack.c.l.b16 %v988
      %v1349 = vunpack.c.l.b16 %v989
      %v1350 = vunpack.c.l.b16 %v990
      %v1351 = vunpack.c.l.b16 %v991
      %v1352 = vunpack.c.l.b16 %v992
      %v1353 = vunpack.c.l.b16 %v993
      %v1354 = vunpack.c.l.b16 %v994
      %v1355 = vunpack.c.l.b16 %v995
      %v1356 = vunpack.c.l.b16 %v996
      %v1357 = vunpack.c.l.b16 %v997
      %v1358 = vunpack.c.l.b16 %v998
      %v1359 = vunpack.c.l.b16 %v999
      %v1360 = vunpack.c.l.b16 %v1000
      %v1361 = vunpack.c.l.b16 %v1001
      %v1362 = vunpack.c.l.b16 %v1002
      %v1363 = vunpack.c.l.b16 %v1003
      %v1364 = vunpack.c.l.b16 %v1004
      %v1365 = vunpack.c.l.b16 %v1005
      %v1366 = vunpack.c.l.b16 %v1006
      %v1367 = vunpack.c.l.b16 %v1007
      %v1368 = vunpack.c.l.b16 %v1008
      %v1369 = vunpack.c.l.b16 %v1009
      %v1370 = vunpack.c.l.b16 %v1010
      %v1371 = vunpack.c.l.b16 %v1011
      %v1372 = vunpack.c.l.b16 %v1012
      %v1373 = vunpack.c.l.b16 %v1013
      %v1374 = vunpack.c.l.b16 %v1014
      %v1375 = vunpack.c.l.b16 %v1015
      %v1376 = vunpack.c.l.b16 %v1016
      %v1377 = vunpack.c.l.b16 %v1017
      %v1378 = vunpack.c.l.b16 %v1018
      %v1379 = vunpack.c.l.b16 %v1019
      %v1380 = vunpack.c.l.b16 %v1020
      %v1381 = vunpack.c.l.b16 %v1021
      %v1382 = vunpack.c.l.b16 %v1022
      %v1383 = vunpack.c.l.b16 %v1023
      %v1384 = vunpack.c.l.b16 %v1024
      %v1385 = vunpack.c.l.b16 %v1025
      %v1386 = vunpack.c.l.b16 %v1026
      %v1387 = vunpack.c.l.b16 %v1027
      %v1388 = vunpack.c.l.b16 %v1028
      %v1389 = vunpack.c.l.b16 %v1029
      %v1390 = vunpack.c.l.b16 %v1030
      %v1391 = vunpack.c.l.b16 %v1031
      %v1392 = vunpack.c.l.b16 %v1032
      %v1393 = vunpack.c.l.b16 %v1033
      %v1394 = vunpack.c.l.b16 %v1034
      %v1395 = vunpack.c.l.b16 %v1035
      %v1396 = vunpack.c.l.b16 %v1036
      %v1397 = vunpack.c.l.b16 %v1037
      %v1398 = vunpack.c.l.b16 %v1038
      %v1399 = vunpack.c.l.b16 %v1039
      %v1400 = vunpack.c.l.b16 %v1040
      %v1401 = vunpack.c.l.b16 %v1041
      %v1402 = vunpack.c.l.b16 %v1042
      %v1403 = vunpack.c.l.b16 %v1043
      %v1404 = vunpack.c.l.b16 %v1044
      %v1405 = vunpack.c.l.b16 %v1045
      %v1406 = vunpack.c.l.b16 %v1046
      %v1407 = vunpack.c.l.b16 %v1047
      %v1408 = vunpack.c.l.b16 %v1048
      %v1409 = vunpack.c.l.b16 %v1049
      %v1410 = vunpack.c.l.b16 %v1050
      %v1411 = vunpack.c.l.b16 %v1051
      %v1412 = vunpack.c.l.b16 %v1052
      %v1413 = vunpack.c.l.b16 %v1053
      %v1414 = vunpack.c.l.b16 %v1054
      %v1415 = vunpack.c.l.b16 %v1055
      %v1416 = vunpack.c.l.b16 %v1056
      %v1417 = vunpack.c.l.b16 %v1057
      %v1418 = vunpack.c.l.b16 %v1058
      %v1419 = vunpack.c.l.b16 %v1059
      %v1420 = vunpack.c.l.b16 %v1060
      %v1421 = vunpack.c.l.b16 %v1061
      %v1422 = vunpack.c.l.b16 %v1062
      %v1423 = vunpack.c.l.b16 %v1063
      %v1424 = vunpack.c.l.b16 %v1064
      %v1425 = vunpack.c.l.b16 %v1065
      %v1426 = vunpack.c.l.b16 %v1066
      %v1427 = vunpack.c.l.b16 %v1067
      %v1428 = vunpack.c.l.b16 %v1068
      %v1429 = vunpack.c.l.b16 %v1069
      %v1430 = vunpack.c.l.b16 %v1070
      %v1431 = vunpack.c.l.b16 %v1071
      %v1432 = vunpack.c.l.b16 %v1072
      %v1433 = vunpack.c.l.b16 %v1073
      %v1434 = vunpack.c.l.b16 %v1074
      %v1435 = vunpack.c.l.b16 %v1075
      %v1436 = vunpack.c.l.b16 %v1076
      %v1437 = vunpack.c.l.b16 %v1077
      %v1438 = vunpack.c.l.b16 %v1078
      %v1439 = vunpack.c.l.b16 %v1079
      %v1440 = vunpack.c.l.b16 %v1080
      %v1441 = vpack.c.b16 %v1298, %v1297
      %v1442 = vpack.c.b16 %v1300, %v1299
      %v1443 = vpack.c.b16 %v1302, %v1301
      %v1444 = vpack.c.b16 %v1304, %v1303
      %v1445 = vpack.c.b16 %v1306, %v1305
      %v1446 = vpack.c.b16 %v1308, %v1307
      %v1447 = vpack.c.b16 %v1310, %v1309
      %v1448 = vpack.c.b16 %v1312, %v1311
      %v1449 = vpack.c.b16 %v1314, %v1313
      %v1450 = vpack.c.b16 %v1316, %v1315
      %v1451 = vpack.c.b16 %v1318, %v1317
      %v1452 = vpack.c.b16 %v1320, %v1319
      %v1453 = vpack.c.b16 %v1322, %v1321
      %v1454 = vpack.c.b16 %v1324, %v1323
      %v1455 = vpack.c.b16 %v1326, %v1325
      %v1456 = vpack.c.b16 %v1328, %v1327
      %v1457 = vpack.c.b16 %v1330, %v1329
      %v1458 = vpack.c.b16 %v1332, %v1331
      %v1459 = vpack.c.b16 %v1334, %v1333
      %v1460 = vpack.c.b16 %v1336, %v1335
      %v1461 = vpack.c.b16 %v1338, %v1337
      %v1462 = vpack.c.b16 %v1340, %v1339
      %v1463 = vpack.c.b16 %v1342, %v1341
      %v1464 = vpack.c.b16 %v1344, %v1343
      %v1465 = vpack.c.b16 %v1346, %v1345
      %v1466 = vpack.c.b16 %v1348, %v1347
      %v1467 = vpack.c.b16 %v1350, %v1349
      %v1468 = vpack.c.b16 %v1352, %v1351
      %v1469 = vpack.c.b16 %v1354, %v1353
      %v1470 = vpack.c.b16 %v1356, %v1355
      %v1471 = vpack.c.b16 %v1358, %v1357
      %v1472 = vpack.c.b16 %v1360, %v1359
      %v1473 = vpack.c.b16 %v1362, %v1361
      %v1474 = vpack.c.b16 %v1364, %v1363
      %v1475 = vpack.c.b16 %v1366, %v1365
      %v1476 = vpack.c.b16 %v1368, %v1367
      %v1477 = vpack.c.b16 %v1370, %v1369
      %v1478 = vpack.c.b16 %v1372, %v1371
      %v1479 = vpack.c.b16 %v1374, %v1373
      %v1480 = vpack.c.b16 %v1376, %v1375
      %v1481 = vpack.c.b16 %v1378, %v1377
      %v1482 = vpack.c.b16 %v1380, %v1379
      %v1483 = vpack.c.b16 %v1382, %v1381
      %v1484 = vpack.c.b16 %v1384, %v1383
      %v1485 = vpack.c.b16 %v1386, %v1385
      %v1486 = vpack.c.b16 %v1388, %v1387
      %v1487 = vpack.c.b16 %v1390, %v1389
      %v1488 = vpack.c.b16 %v1392, %v1391
      %v1489 = vpack.c.b16 %v1394, %v1393
      %v1490 = vpack.c.b16 %v1396, %v1395
      %v1491 = vpack.c.b16 %v1398, %v1397
      %v1492 = vpack.c.b16 %v1400, %v1399
      %v1493 = vpack.c.b16 %v1402, %v1401
      %v1494 = vpack.c.b16 %v1404, %v1403
      %v1495 = vpack.c.b16 %v1406, %v1405
      %v1496 = vpack.c.b16 %v1408, %v1407
      %v1497 = vpack.c.b16 %v1410, %v1409
      %v1498 = vpack.c.b16 %v1412, %v1411
      %v1499 = vpack.c.b16 %v1414, %v1413
      %v1500 = vpack.c.b16 %v1416, %v1415
      %v1501 = vpack.c.b16 %v1418, %v1417
      %v1502 = vpack.c.b16 %v1420, %v1419
      %v1503 = vpack.c.b16 %v1422, %v1421
      %v1504 = vpack.c.b16 %v1424, %v1423
      %v1505 = vpack.c.b16 %v1426, %v1425
      %v1506 = vpack.c.b16 %v1428, %v1427
      %v1507 = vpack.c.b16 %v1430, %v1429
      %v1508 = vpack.c.b16 %v1432, %v1431
      %v1509 = vpack.c.b16 %v1434, %v1433
      %v1510 = vpack.c.b16 %v1436, %v1435
      %v1511 = vpack.c.b16 %v1438, %v1437
      %v1512 = vpack.c.b16 %v1440, %v1439
      %1585 = vmatprep.subr.bf16.mxu0 0
      %1586 = vmatpush1.bf16.msra.mxu0 %v1448
      %1587 = vmatprep.subr.bf16.mxu0 0
      %1588 = vmatpush1.bf16.msra.mxu0 %v1447
      %1589 = vmatprep.subr.bf16.mxu0 0
      %1590 = vmatpush1.bf16.msra.mxu0 %v1446
      %1591 = vmatprep.subr.bf16.mxu0 0
      %1592 = vmatpush1.bf16.msra.mxu0 %v1445
      %1593 = vmatprep.subr.bf16.mxu0 0
      %1594 = vmatpush1.bf16.msra.mxu0 %v1444
      %1595 = vmatprep.subr.bf16.mxu0 0
      %1596 = vmatpush1.bf16.msra.mxu0 %v1443
      %1597 = vmatprep.subr.bf16.mxu0 0
      %1598 = vmatpush1.bf16.msra.mxu0 %v1442
      %1599 = vmatprep.subr.bf16.mxu0 0
      %1600 = vmatpush1.bf16.msra.mxu0 %v1441
      %1601 = vmatprep.subr.bf16.mxu0 0
      %1602 = vmatpush2.bf16.msra.mxu0 %v1456
      %1603 = vmatprep.subr.bf16.mxu0 0
      %1604 = vmatpush2.bf16.msra.mxu0 %v1455
      %1605 = vmatprep.subr.bf16.mxu0 0
      %1606 = vmatpush2.bf16.msra.mxu0 %v1454
      %1607 = vmatprep.subr.bf16.mxu0 0
      %1608 = vmatpush2.bf16.msra.mxu0 %v1453
      %1609 = vmatprep.subr.bf16.mxu0 0
      %1610 = vmatpush2.bf16.msra.mxu0 %v1452
      %1611 = vmatprep.subr.bf16.mxu0 0
      %1612 = vmatpush2.bf16.msra.mxu0 %v1451
      %1613 = vmatprep.subr.bf16.mxu0 0
      %1614 = vmatpush2.bf16.msra.mxu0 %v1450
      %1615 = vmatprep.subr.bf16.mxu0 0
      %1616 = vmatpush2.bf16.msra.mxu0 %v1449
      %1617 = vmatprep.mubr.bf16.mxu0 %v1082
      %1618 = vmatmul.mubr.bf16.gmra.mxu0 %v1081
      %v1619 = vpop.f32.mrf.mxu0
      %v1620 = vadd.f32 0.0, %v1619
      %v1621 = vpop.f32.mrf.mxu0
      %v1622 = vpop.f32.mrf.mxu0
      %v1623 = vadd.f32 0.0, %v1622
      %v1624 = vpop.f32.mrf.mxu0
      %1625 = vmatprep.mubr.bf16.mxu0 %v1091
      %1626 = vmatmul.mubr.bf16.gmra.mxu0 %v1090
      %v1627 = vpop.f32.mrf.mxu0
      %v1628 = vadd.f32 0.0, %v1627
      %v1629 = vpop.f32.mrf.mxu0
      %v1630 = vpop.f32.mrf.mxu0
      %v1631 = vadd.f32 0.0, %v1630
      %v1632 = vpop.f32.mrf.mxu0
      %1633 = vmatprep.mubr.bf16.mxu0 %v1100
      %1634 = vmatmul.mubr.bf16.gmra.mxu0 %v1099
      %v1635 = vpop.f32.mrf.mxu0
      %v1636 = vadd.f32 0.0, %v1635
      %v1637 = vpop.f32.mrf.mxu0
      %v1638 = vpop.f32.mrf.mxu0
      %v1639 = vadd.f32 0.0, %v1638
      %v1640 = vpop.f32.mrf.mxu0
      %1641 = vmatprep.mubr.bf16.mxu0 %v1109
      %1642 = vmatmul.mubr.bf16.gmra.mxu0 %v1108
      %v1643 = vpop.f32.mrf.mxu0
      %v1644 = vadd.f32 0.0, %v1643
      %v1645 = vpop.f32.mrf.mxu0
      %v1646 = vpop.f32.mrf.mxu0
      %v1647 = vadd.f32 0.0, %v1646
      %v1648 = vpop.f32.mrf.mxu0
      %1649 = vdwg.mxu0
      %1650 = vmatprep.subr.bf16.mxu0 0
      %1651 = vmatpush1.bf16.msra.mxu0 %v1464
      %1652 = vmatprep.subr.bf16.mxu0 0
      %1653 = vmatpush1.bf16.msra.mxu0 %v1463
      %1654 = vmatprep.subr.bf16.mxu0 0
      %1655 = vmatpush1.bf16.msra.mxu0 %v1462
      %1656 = vmatprep.subr.bf16.mxu0 0
      %1657 = vmatpush1.bf16.msra.mxu0 %v1461
      %1658 = vmatprep.subr.bf16.mxu0 0
      %1659 = vmatpush1.bf16.msra.mxu0 %v1460
      %1660 = vmatprep.subr.bf16.mxu0 0
      %1661 = vmatpush1.bf16.msra.mxu0 %v1459
      %1662 = vmatprep.subr.bf16.mxu0 0
      %1663 = vmatpush1.bf16.msra.mxu0 %v1458
      %1664 = vmatprep.subr.bf16.mxu0 0
      %1665 = vmatpush1.bf16.msra.mxu0 %v1457
      %1666 = vmatprep.subr.bf16.mxu0 0
      %1667 = vmatpush2.bf16.msra.mxu0 %v1472
      %1668 = vmatprep.subr.bf16.mxu0 0
      %1669 = vmatpush2.bf16.msra.mxu0 %v1471
      %1670 = vmatprep.subr.bf16.mxu0 0
      %1671 = vmatpush2.bf16.msra.mxu0 %v1470
      %1672 = vmatprep.subr.bf16.mxu0 0
      %1673 = vmatpush2.bf16.msra.mxu0 %v1469
      %1674 = vmatprep.subr.bf16.mxu0 0
      %1675 = vmatpush2.bf16.msra.mxu0 %v1468
      %1676 = vmatprep.subr.bf16.mxu0 0
      %1677 = vmatpush2.bf16.msra.mxu0 %v1467
      %1678 = vmatprep.subr.bf16.mxu0 0
      %1679 = vmatpush2.bf16.msra.mxu0 %v1466
      %1680 = vmatprep.subr.bf16.mxu0 0
      %1681 = vmatpush2.bf16.msra.mxu0 %v1465
      %1682 = vmatprep.mubr.bf16.mxu0 %v1084
      %1683 = vmatmul.mubr.bf16.gmra.mxu0 %v1083
      %v1684 = vpop.f32.mrf.mxu0
      %v1685 = vadd.f32 %v1620, %v1684
      %v1686 = vpop.f32.mrf.mxu0
      %v1687 = vpop.f32.mrf.mxu0
      %v1688 = vadd.f32 %v1623, %v1687
      %v1689 = vpop.f32.mrf.mxu0
      %1690 = vmatprep.mubr.bf16.mxu0 %v1093
      %1691 = vmatmul.mubr.bf16.gmra.mxu0 %v1092
      %v1692 = vpop.f32.mrf.mxu0
      %v1693 = vadd.f32 %v1628, %v1692
      %v1694 = vpop.f32.mrf.mxu0
      %v1695 = vpop.f32.mrf.mxu0
      %v1696 = vadd.f32 %v1631, %v1695
      %v1697 = vpop.f32.mrf.mxu0
      %1698 = vmatprep.mubr.bf16.mxu0 %v1102
      %1699 = vmatmul.mubr.bf16.gmra.mxu0 %v1101
      %v1700 = vpop.f32.mrf.mxu0
      %v1701 = vadd.f32 %v1636, %v1700
      %v1702 = vpop.f32.mrf.mxu0
      %v1703 = vpop.f32.mrf.mxu0
      %v1704 = vadd.f32 %v1639, %v1703
      %v1705 = vpop.f32.mrf.mxu0
      %1706 = vmatprep.mubr.bf16.mxu0 %v1111
      %1707 = vmatmul.mubr.bf16.gmra.mxu0 %v1110
      %v1708 = vpop.f32.mrf.mxu0
      %v1709 = vadd.f32 %v1644, %v1708
      %v1710 = vpop.f32.mrf.mxu0
      %v1711 = vpop.f32.mrf.mxu0
      %v1712 = vadd.f32 %v1647, %v1711
      %v1713 = vpop.f32.mrf.mxu0
      %1714 = vdwg.mxu0
      %1715 = vmatprep.subr.bf16.mxu0 0
      %1716 = vmatpush1.bf16.msra.mxu0 %v1480
      %1717 = vmatprep.subr.bf16.mxu0 0
      %1718 = vmatpush1.bf16.msra.mxu0 %v1479
      %1719 = vmatprep.subr.bf16.mxu0 0
      %1720 = vmatpush1.bf16.msra.mxu0 %v1478
      %1721 = vmatprep.subr.bf16.mxu0 0
      %1722 = vmatpush1.bf16.msra.mxu0 %v1477
      %1723 = vmatprep.subr.bf16.mxu0 0
      %1724 = vmatpush1.bf16.msra.mxu0 %v1476
      %1725 = vmatprep.subr.bf16.mxu0 0
      %1726 = vmatpush1.bf16.msra.mxu0 %v1475
      %1727 = vmatprep.subr.bf16.mxu0 0
      %1728 = vmatpush1.bf16.msra.mxu0 %v1474
      %1729 = vmatprep.subr.bf16.mxu0 0
      %1730 = vmatpush1.bf16.msra.mxu0 %v1473
      %1731 = vmatprep.subr.bf16.mxu0 0
      %1732 = vmatpush2.bf16.msra.mxu0 %v1488
      %1733 = vmatprep.subr.bf16.mxu0 0
      %1734 = vmatpush2.bf16.msra.mxu0 %v1487
      %1735 = vmatprep.subr.bf16.mxu0 0
      %1736 = vmatpush2.bf16.msra.mxu0 %v1486
      %1737 = vmatprep.subr.bf16.mxu0 0
      %1738 = vmatpush2.bf16.msra.mxu0 %v1485
      %1739 = vmatprep.subr.bf16.mxu0 0
      %1740 = vmatpush2.bf16.msra.mxu0 %v1484
      %1741 = vmatprep.subr.bf16.mxu0 0
      %1742 = vmatpush2.bf16.msra.mxu0 %v1483
      %1743 = vmatprep.subr.bf16.mxu0 0
      %1744 = vmatpush2.bf16.msra.mxu0 %v1482
      %1745 = vmatprep.subr.bf16.mxu0 0
      %1746 = vmatpush2.bf16.msra.mxu0 %v1481
      %1747 = vmatprep.mubr.bf16.mxu0 %v1086
      %1748 = vmatmul.mubr.bf16.gmra.mxu0 %v1085
      %v1749 = vpop.f32.mrf.mxu0
      %v1750 = vadd.f32 %v1685, %v1749
      %v1751 = vpop.f32.mrf.mxu0
      %v1752 = vpop.f32.mrf.mxu0
      %v1753 = vadd.f32 %v1688, %v1752
      %v1754 = vpop.f32.mrf.mxu0
      %1755 = vmatprep.mubr.bf16.mxu0 %v1095
      %1756 = vmatmul.mubr.bf16.gmra.mxu0 %v1094
      %v1757 = vpop.f32.mrf.mxu0
      %v1758 = vadd.f32 %v1693, %v1757
      %v1759 = vpop.f32.mrf.mxu0
      %v1760 = vpop.f32.mrf.mxu0
      %v1761 = vadd.f32 %v1696, %v1760
      %v1762 = vpop.f32.mrf.mxu0
      %1763 = vmatprep.mubr.bf16.mxu0 %v1104
      %1764 = vmatmul.mubr.bf16.gmra.mxu0 %v1103
      %v1765 = vpop.f32.mrf.mxu0
      %v1766 = vadd.f32 %v1701, %v1765
      %v1767 = vpop.f32.mrf.mxu0
      %v1768 = vpop.f32.mrf.mxu0
      %v1769 = vadd.f32 %v1704, %v1768
      %v1770 = vpop.f32.mrf.mxu0
      %1771 = vmatprep.mubr.bf16.mxu0 %v1113
      %1772 = vmatmul.mubr.bf16.gmra.mxu0 %v1112
      %v1773 = vpop.f32.mrf.mxu0
      %v1774 = vadd.f32 %v1709, %v1773
      %v1775 = vpop.f32.mrf.mxu0
      %v1776 = vpop.f32.mrf.mxu0
      %v1777 = vadd.f32 %v1712, %v1776
      %v1778 = vpop.f32.mrf.mxu0
      %1779 = vdwg.mxu0
      %1780 = vmatprep.subr.bf16.mxu0 0
      %1781 = vmatpush1.bf16.msra.mxu0 %v1496
      %1782 = vmatprep.subr.bf16.mxu0 0
      %1783 = vmatpush1.bf16.msra.mxu0 %v1495
      %1784 = vmatprep.subr.bf16.mxu0 0
      %1785 = vmatpush1.bf16.msra.mxu0 %v1494
      %1786 = vmatprep.subr.bf16.mxu0 0
      %1787 = vmatpush1.bf16.msra.mxu0 %v1493
      %1788 = vmatprep.subr.bf16.mxu0 0
      %1789 = vmatpush1.bf16.msra.mxu0 %v1492
      %1790 = vmatprep.subr.bf16.mxu0 0
      %1791 = vmatpush1.bf16.msra.mxu0 %v1491
      %1792 = vmatprep.subr.bf16.mxu0 0
      %1793 = vmatpush1.bf16.msra.mxu0 %v1490
      %1794 = vmatprep.subr.bf16.mxu0 0
      %1795 = vmatpush1.bf16.msra.mxu0 %v1489
      %1796 = vmatprep.subr.bf16.mxu0 0
      %1797 = vmatpush2.bf16.msra.mxu0 %v1504
      %1798 = vmatprep.subr.bf16.mxu0 0
      %1799 = vmatpush2.bf16.msra.mxu0 %v1503
      %1800 = vmatprep.subr.bf16.mxu0 0
      %1801 = vmatpush2.bf16.msra.mxu0 %v1502
      %1802 = vmatprep.subr.bf16.mxu0 0
      %1803 = vmatpush2.bf16.msra.mxu0 %v1501
      %1804 = vmatprep.subr.bf16.mxu0 0
      %1805 = vmatpush2.bf16.msra.mxu0 %v1500
      %1806 = vmatprep.subr.bf16.mxu0 0
      %1807 = vmatpush2.bf16.msra.mxu0 %v1499
      %1808 = vmatprep.subr.bf16.mxu0 0
      %1809 = vmatpush2.bf16.msra.mxu0 %v1498
      %1810 = vmatprep.subr.bf16.mxu0 0
      %1811 = vmatpush2.bf16.msra.mxu0 %v1497
      %1812 = vmatprep.mubr.bf16.mxu0 %v1088
      %1813 = vmatmul.mubr.bf16.gmra.mxu0 %v1087
      %v1814 = vpop.f32.mrf.mxu0
      %v1815 = vadd.f32 %v1750, %v1814
      %v1816 = vpop.f32.mrf.mxu0
      %v1817 = vpop.f32.mrf.mxu0
      %v1818 = vadd.f32 %v1753, %v1817
      %v1819 = vpop.f32.mrf.mxu0
      %1820 = vmatprep.mubr.bf16.mxu0 %v1097
      %1821 = vmatmul.mubr.bf16.gmra.mxu0 %v1096
      %v1822 = vpop.f32.mrf.mxu0
      %v1823 = vadd.f32 %v1758, %v1822
      %v1824 = vpop.f32.mrf.mxu0
      %v1825 = vpop.f32.mrf.mxu0
      %v1826 = vadd.f32 %v1761, %v1825
      %v1827 = vpop.f32.mrf.mxu0
      %1828 = vmatprep.mubr.bf16.mxu0 %v1106
      %1829 = vmatmul.mubr.bf16.gmra.mxu0 %v1105
      %v1830 = vpop.f32.mrf.mxu0
      %v1831 = vadd.f32 %v1766, %v1830
      %v1832 = vpop.f32.mrf.mxu0
      %v1833 = vpop.f32.mrf.mxu0
      %v1834 = vadd.f32 %v1769, %v1833
      %v1835 = vpop.f32.mrf.mxu0
      %1836 = vmatprep.mubr.bf16.mxu0 %v1115
      %1837 = vmatmul.mubr.bf16.gmra.mxu0 %v1114
      %v1838 = vpop.f32.mrf.mxu0
      %v1839 = vadd.f32 %v1774, %v1838
      %v1840 = vpop.f32.mrf.mxu0
      %v1841 = vpop.f32.mrf.mxu0
      %v1842 = vadd.f32 %v1777, %v1841
      %v1843 = vpop.f32.mrf.mxu0
      %1844 = vdwg.mxu0
      %1845 = vmatprep.subr.bf16.mxu0 0
      %1846 = vmatpush1.bf16.msra.mxu0 %v1512
      %1847 = vmatprep.subr.bf16.mxu0 0
      %1848 = vmatpush1.bf16.msra.mxu0 %v1511
      %1849 = vmatprep.subr.bf16.mxu0 0
      %1850 = vmatpush1.bf16.msra.mxu0 %v1510
      %1851 = vmatprep.subr.bf16.mxu0 0
      %1852 = vmatpush1.bf16.msra.mxu0 %v1509
      %1853 = vmatprep.subr.bf16.mxu0 0
      %1854 = vmatpush1.bf16.msra.mxu0 %v1508
      %1855 = vmatprep.subr.bf16.mxu0 0
      %1856 = vmatpush1.bf16.msra.mxu0 %v1507
      %1857 = vmatprep.subr.bf16.mxu0 0
      %1858 = vmatpush1.bf16.msra.mxu0 %v1506
      %1859 = vmatprep.subr.bf16.mxu0 0
      %1860 = vmatpush1.bf16.msra.mxu0 %v1505
      %1861 = vmatprep.subr.bf16.mxu0 0
      %1862 = vmatpush2.bf16.msra.mxu0 0
      %1863 = vmatprep.subr.bf16.mxu0 0
      %1864 = vmatpush2.bf16.msra.mxu0 0
      %1865 = vmatprep.subr.bf16.mxu0 0
      %1866 = vmatpush2.bf16.msra.mxu0 0
      %1867 = vmatprep.subr.bf16.mxu0 0
      %1868 = vmatpush2.bf16.msra.mxu0 0
      %1869 = vmatprep.subr.bf16.mxu0 0
      %1870 = vmatpush2.bf16.msra.mxu0 0
      %1871 = vmatprep.subr.bf16.mxu0 0
      %1872 = vmatpush2.bf16.msra.mxu0 0
      %1873 = vmatprep.subr.bf16.mxu0 0
      %1874 = vmatpush2.bf16.msra.mxu0 0
      %1875 = vmatprep.subr.bf16.mxu0 0
      %1876 = vmatpush2.bf16.msra.mxu0 0
      %1877 = vmatprep.mubr.bf16.mxu0 0
      %1878 = vmatmul.mubr.bf16.gmra.mxu0 %v1089
      %v1879 = vpop.f32.mrf.mxu0
      %v1880 = vadd.f32 %v1815, %v1879
      %v1881 = vpop.f32.mrf.mxu0
      %v1882 = vpop.f32.mrf.mxu0
      %v1883 = vadd.f32 %v1818, %v1882
      %v1884 = vpop.f32.mrf.mxu0
      %1885 = vmatprep.mubr.bf16.mxu0 0
      %1886 = vmatmul.mubr.bf16.gmra.mxu0 %v1098
      %v1887 = vpop.f32.mrf.mxu0
      %v1888 = vadd.f32 %v1823, %v1887
      %v1889 = vpop.f32.mrf.mxu0
      %v1890 = vpop.f32.mrf.mxu0
      %v1891 = vadd.f32 %v1826, %v1890
      %v1892 = vpop.f32.mrf.mxu0
      %1893 = vmatprep.mubr.bf16.mxu0 0
      %1894 = vmatmul.mubr.bf16.gmra.mxu0 %v1107
      %v1895 = vpop.f32.mrf.mxu0
      %v1896 = vadd.f32 %v1831, %v1895
      %v1897 = vpop.f32.mrf.mxu0
      %v1898 = vpop.f32.mrf.mxu0
      %v1899 = vadd.f32 %v1834, %v1898
      %v1900 = vpop.f32.mrf.mxu0
      %1901 = vmatprep.mubr.bf16.mxu0 0
      %1902 = vmatmul.mubr.bf16.gmra.mxu0 %v1116
      %v1903 = vpop.f32.mrf.mxu0
      %v1904 = vadd.f32 %v1839, %v1903
      %v1905 = vpop.f32.mrf.mxu0
      %v1906 = vpop.f32.mrf.mxu0
      %v1907 = vadd.f32 %v1842, %v1906
      %v1908 = vpop.f32.mrf.mxu0
      %1909 = vdwg.mxu0
      %1910 = vst [vmem:[%s197] sm:$0xff] %v1880
      %1911 = vst [vmem:[%s197 + $0x8] sm:$0xff] %v1883
      %1912 = vst [vmem:[%s197 + $0x10] sm:$0xff] %v1888
      %1913 = vst [vmem:[%s197 + $0x18] sm:$0xff] %v1891
      %1914 = vst [vmem:[%s197 + $0x20] sm:$0xff] %v1896
      %1915 = vst [vmem:[%s197 + $0x28] sm:$0xff] %v1899
      %1916 = vst [vmem:[%s197 + $0x30] sm:$0xff] %v1904
      %1917 = vst [vmem:[%s197 + $0x38] sm:$0xff] %v1907
      %p1918 = scmp.lt.s32.totalorder %s15, 1
      %s1919 = scalar_select %p1918, %s15, 1
      %s1920 = smul.addr %s1919, 8
      %s1921 = smul.addr %s1920, 8
      %s1922 = scalar_lea.vmem %s4, %s1921
      // Predicated region
      $region37: #{bottleneck_forward_nhwc.4} parent=35 // pred_check
        %p1923 = pneg %p122
      $region38: #{bottleneck_forward_nhwc.4} parent=35 // pred_check_branch
        %1925 = sbr.rel (%p1923) target = $region40
      $region39: #{bottleneck_forward_nhwc.4} parent=35 // pred_region
        _
      $region40: #{bottleneck_forward_nhwc.4} parent=35 // pred_fallthru
        _
    $region36: #{bottleneck_forward_nhwc.4} parent=5 // pred_fallthru
      _
    %p1926 = scmp.le.s32.totalorder 2, %s10
    // Predicated region
    $region41: #{bottleneck_forward_nhwc.4} parent=5 // pred_check
      %p1927 = pneg %p1926
    $region42: #{bottleneck_forward_nhwc.4} parent=5 // pred_check_branch
      %1929 = sbr.rel (%p1927) target = $region44
    $region43: #{bottleneck_forward_nhwc.4} parent=5 // pred_region
      %s1930 = ssub.s32 %s10, 2
      // Predicated region
      $region45: #{bottleneck_forward_nhwc.4} parent=43 // pred_check
        %p1931 = pneg %p128
      $region46: #{bottleneck_forward_nhwc.4} parent=43 // pred_check_branch
        %1933 = sbr.rel (%p1931) target = $region48
      $region47: #{bottleneck_forward_nhwc.4} parent=43 // pred_region
        %p1934 = scmp.lt.s32.totalorder %s16, 1
        %s1935 = scalar_select %p1934, %s16, 1
        %s1936 = smul.addr %s1935, 8
        %s1937 = smul.addr %s1936, 8
        %s1938 = scalar_lea.vmem %s4, %s1937
      $region48: #{bottleneck_forward_nhwc.4} parent=43 // pred_fallthru
        _
    $region44: #{bottleneck_forward_nhwc.4} parent=5 // pred_fallthru
      _
  $region6: #{bottleneck_forward_nhwc.4} parent=0 // loop_footer
    %s14 = sadd.s32 1, %s10
  $region7: #{bottleneck_forward_nhwc.4} parent=0 // loop_footer_branch
    %9 = sbr.rel target = $region3
  $region8: #{bottleneck_forward_nhwc.4} parent=0 // loop_exit
    _

</llo_original>
